<compile_context>
chip_gen: v7x
topology: tpu7x:2x2x1
jax: 0.10.0
libtpu: 0.0.40
codegen_flags: <defaults>
</compile_context>

<pallas_src>
import functools
import math

import jax
import jax.numpy as jnp
from jax.experimental import pallas as pl
from jax.experimental.pallas import tpu as pltpu


def _round_up(x, m):
    return ((x + m - 1) // m) * m


def _sigmoid_f32(x):
    return 1.0 / (1.0 + jnp.exp(-x))


# --------------------------------------------------------------------------------------
# Kernel 1: generic fused linear  act(x @ W + b)  with selectable output dtype
# --------------------------------------------------------------------------------------

def _linear_kernel(x_ref, w_ref, b_ref, o_ref, *, act):
    x = x_ref[...].astype(jnp.bfloat16)                      # bf16 MXU operands
    acc = jnp.dot(x, w_ref[...], preferred_element_type=jnp.float32)
    acc = acc + b_ref[...]                                   # (1, N) f32 broadcast
    if act == "relu":
        acc = jnp.maximum(acc, 0.0)
    elif act == "sigmoid":
        acc = _sigmoid_f32(acc)
    o_ref[...] = acc.astype(o_ref.dtype)


def linear_pallas(x, w, b, *, act="none", out_dtype=jnp.float32, tile_cap=512):
    """act(x @ w + b).  x:(M,K), w:(K,N), b:(N,).  bf16 matmul, f32 accumulate."""
    M, K = x.shape
    Kw, N = w.shape
    assert K == Kw
    b2 = jnp.asarray(b, jnp.float32).reshape(1, N)
    wb = w.astype(jnp.bfloat16)

    Mp = _round_up(M, 8)                                     # sublane alignment only
    xp = jnp.pad(x, ((0, Mp - M), (0, 0))) if Mp != M else x
    tile = min(tile_cap, Mp)
    grid = pl.cdiv(Mp, tile)                                 # partial last block is fine (rows independent)

    in_bytes = jnp.dtype(xp.dtype).itemsize
    out_bytes = jnp.dtype(out_dtype).itemsize
    out = pl.pallas_call(
        functools.partial(_linear_kernel, act=act),
        out_shape=jax.ShapeDtypeStruct((Mp, N), out_dtype),
        grid_spec=pltpu.PrefetchScalarGridSpec(
            num_scalar_prefetch=0,
            grid=(grid,),
            in_specs=[
                pl.BlockSpec((tile, K), lambda i: (i, 0)),   # activations: tiled over rows
                pl.BlockSpec((K, N), lambda i: (0, 0)),      # weights: VMEM-resident
                pl.BlockSpec((1, N), lambda i: (0, 0)),      # bias: VMEM-resident
            ],
            out_specs=pl.BlockSpec((tile, N), lambda i: (i, 0)),
        ),
        compiler_params=pltpu.CompilerParams(dimension_semantics=("parallel",)),
        cost_estimate=pl.CostEstimate(
            flops=2 * Mp * K * N,
            transcendentals=Mp * N if act == "sigmoid" else 0,
            bytes_accessed=Mp * K * in_bytes + K * N * 2 + N * 4 + Mp * N * out_bytes,
        ),
    )(xp, wb, b2)
    return out[:M] if Mp != M else out


# --------------------------------------------------------------------------------------
# Kernel 2: fused attention block = attention(all heads) + out-proj + residual + LayerNorm
#   grid over batch; q/k/v blocks are (1, nhead, S, dh) bf16; residual t is (1, S, E) f32.
# --------------------------------------------------------------------------------------

def _attn_block_kernel(q_ref, k_ref, v_ref, t_ref, wo_ref, bo_ref, g_ref, be_ref,
                       o_ref, *, scale, eps, nhead):
    q = q_ref[0]                                  # (nhead, S, dh) bf16
    k = k_ref[0]
    v = v_ref[0]
    s = jnp.einsum("hqd,hkd->hqk", q, k,
                   preferred_element_type=jnp.float32) * scale          # (nhead, S, S) f32
    m = jnp.max(s, axis=-1, keepdims=True)
    p = jnp.exp(s - m)
    denom = jnp.sum(p, axis=-1, keepdims=True)
    p = p * pl.reciprocal(denom, approx=True)     # EUP reciprocal: frees the VALU slot
    o = jnp.einsum("hqk,hkd->hqd", p.astype(v.dtype), v,
                   preferred_element_type=jnp.float32)                  # (nhead, S, dh) f32

    S, E = o_ref.shape[1], o_ref.shape[2]
    acc = jnp.zeros((S, E), jnp.float32)
    for h in range(nhead):                        # unrolled at trace time; wo_ref[h] is (dh, E)
        acc = acc + jnp.dot(o[h].astype(jnp.bfloat16), wo_ref[h],
                            preferred_element_type=jnp.float32)

    z = t_ref[0] + acc + bo_ref[...]              # residual add (f32)
    mean = jnp.mean(z, axis=-1, keepdims=True)
    zc = z - mean
    var = jnp.mean(zc * zc, axis=-1, keepdims=True)
    o_ref[0] = (zc * jax.lax.rsqrt(var + eps)) * g_ref[...] + be_ref[...]


def attn_ln_block_pallas(q, k, v, t, w_o, b_o, ln_g, ln_b, *, scale, eps=1e-5):
    """q,k,v:(B,nhead,S,dh) bf16; t:(B,S,E) f32 residual; returns LayerNorm(t + attn@Wo+bo)."""
    B, nhead, S, dh = q.shape
    E = t.shape[-1]
    wo3 = w_o.reshape(nhead, dh, E).astype(jnp.bfloat16)
    bo2 = jnp.asarray(b_o, jnp.float32).reshape(1, E)
    g2 = jnp.asarray(ln_g, jnp.float32).reshape(1, E)
    be2 = jnp.asarray(ln_b, jnp.float32).reshape(1, E)

    head_spec = pl.BlockSpec((1, nhead, S, dh), lambda b: (b, 0, 0, 0))
    const_e = pl.BlockSpec((1, E), lambda b: (0, 0))
    return pl.pallas_call(
        functools.partial(_attn_block_kernel, scale=scale, eps=eps, nhead=nhead),
        out_shape=jax.ShapeDtypeStruct((B, S, E), jnp.float32),
        grid_spec=pltpu.PrefetchScalarGridSpec(
            num_scalar_prefetch=0,
            grid=(B,),
            in_specs=[
                head_spec, head_spec, head_spec,
                pl.BlockSpec((1, S, E), lambda b: (b, 0, 0)),
                pl.BlockSpec((nhead, dh, E), lambda b: (0, 0, 0)),   # W_o VMEM-resident
                const_e, const_e, const_e,
            ],
            out_specs=pl.BlockSpec((1, S, E), lambda b: (b, 0, 0)),
        ),
        compiler_params=pltpu.CompilerParams(dimension_semantics=("parallel",)),
        cost_estimate=pl.CostEstimate(
            flops=B * (4 * nhead * S * S * dh + 2 * S * E * E),
            transcendentals=B * nhead * S * S,
            bytes_accessed=3 * B * nhead * S * dh * 2 + 2 * B * S * E * 4
                           + nhead * dh * E * 2 + 3 * E * 4,
        ),
    )(q, k, v, t, wo3, bo2, g2, be2)


# --------------------------------------------------------------------------------------
# Kernel 3: fused feed-forward block = relu(x@W1+b1)@W2+b2 + residual + LayerNorm
#   the (tile, ff_dim) intermediate stays in VMEM; grid over row tiles.
# --------------------------------------------------------------------------------------

def _ffn_ln_kernel(x_ref, w1_ref, b1_ref, w2_ref, b2_ref, g_ref, be_ref, o_ref, *, eps):
    x = x_ref[...]                                            # (tile, E) f32 residual
    h = jnp.dot(x.astype(jnp.bfloat16), w1_ref[...],
                preferred_element_type=jnp.float32) + b1_ref[...]
    h = jnp.maximum(h, 0.0)
    y = jnp.dot(h.astype(jnp.bfloat16), w2_ref[...],
                preferred_element_type=jnp.float32) + b2_ref[...]
    z = x + y
    mean = jnp.mean(z, axis=-1, keepdims=True)
    zc = z - mean
    var = jnp.mean(zc * zc, axis=-1, keepdims=True)
    o_ref[...] = (zc * jax.lax.rsqrt(var + eps)) * g_ref[...] + be_ref[...]


def ffn_ln_block_pallas(x, w1, b1, w2, b2, ln_g, ln_b, *, eps=1e-5, tile_cap=512):
    M, E = x.shape
    F = w1.shape[1]
    w1b = w1.astype(jnp.bfloat16)
    w2b = w2.astype(jnp.bfloat16)
    b1_2 = jnp.asarray(b1, jnp.float32).reshape(1, F)
    b2_2 = jnp.asarray(b2, jnp.float32).reshape(1, E)
    g2 = jnp.asarray(ln_g, jnp.float32).reshape(1, E)
    be2 = jnp.asarray(ln_b, jnp.float32).reshape(1, E)

    Mp = _round_up(M, 8)
    xp = jnp.pad(x, ((0, Mp - M), (0, 0))) if Mp != M else x
    tile = min(tile_cap, Mp)
    grid = pl.cdiv(Mp, tile)

    out = pl.pallas_call(
        functools.partial(_ffn_ln_kernel, eps=eps),
        out_shape=jax.ShapeDtypeStruct((Mp, E), jnp.float32),
        grid_spec=pltpu.PrefetchScalarGridSpec(
            num_scalar_prefetch=0,
            grid=(grid,),
            in_specs=[
                pl.BlockSpec((tile, E), lambda i: (i, 0)),
                pl.BlockSpec((E, F), lambda i: (0, 0)),
                pl.BlockSpec((1, F), lambda i: (0, 0)),
                pl.BlockSpec((F, E), lambda i: (0, 0)),
                pl.BlockSpec((1, E), lambda i: (0, 0)),
                pl.BlockSpec((1, E), lambda i: (0, 0)),
                pl.BlockSpec((1, E), lambda i: (0, 0)),
            ],
            out_specs=pl.BlockSpec((tile, E), lambda i: (i, 0)),
        ),
        compiler_params=pltpu.CompilerParams(dimension_semantics=("parallel",)),
        cost_estimate=pl.CostEstimate(
            flops=4 * Mp * E * F,
            transcendentals=0,
            bytes_accessed=2 * Mp * E * 4 + 2 * E * F * 2 + (F + 3 * E) * 4,
        ),
    )(xp, w1b, b1_2, w2b, b2_2, g2, be2)
    return out[:M] if Mp != M else out


# --------------------------------------------------------------------------------------
# Pure-JAX references of the same fused ops (same bf16 matmul operands) for checking
# --------------------------------------------------------------------------------------

def linear_ref(x, w, b, *, act="none", out_dtype=jnp.float32, tile_cap=512):
    acc = jnp.dot(x.astype(jnp.bfloat16), w.astype(jnp.bfloat16),
                  preferred_element_type=jnp.float32)
    acc = acc + jnp.asarray(b, jnp.float32).reshape(1, -1)
    if act == "relu":
        acc = jnp.maximum(acc, 0.0)
    elif act == "sigmoid":
        acc = _sigmoid_f32(acc)
    return acc.astype(out_dtype)


def attn_ln_block_ref(q, k, v, t, w_o, b_o, ln_g, ln_b, *, scale, eps=1e-5):
    B, nhead, S, dh = q.shape
    E = t.shape[-1]
    s = jnp.einsum("bhqd,bhkd->bhqk", q, k, preferred_element_type=jnp.float32) * scale
    m = jnp.max(s, axis=-1, keepdims=True)
    p = jnp.exp(s - m)
    p = p / jnp.sum(p, axis=-1, keepdims=True)
    o = jnp.einsum("bhqk,bhkd->bhqd", p.astype(jnp.bfloat16), v,
                   preferred_element_type=jnp.float32)
    a = o.transpose(0, 2, 1, 3).reshape(B, S, E)
    a = jnp.einsum("bse,ef->bsf", a.astype(jnp.bfloat16), w_o.astype(jnp.bfloat16),
                   preferred_element_type=jnp.float32)
    z = t + a + b_o.reshape(1, 1, E)
    mean = jnp.mean(z, axis=-1, keepdims=True)
    zc = z - mean
    var = jnp.mean(zc * zc, axis=-1, keepdims=True)
    return zc * jax.lax.rsqrt(var + eps) * ln_g.reshape(1, 1, E) + ln_b.reshape(1, 1, E)


def ffn_ln_block_ref(x, w1, b1, w2, b2, ln_g, ln_b, *, eps=1e-5, tile_cap=512):
    h = jnp.dot(x.astype(jnp.bfloat16), w1.astype(jnp.bfloat16),
                preferred_element_type=jnp.float32) + b1.reshape(1, -1)
    h = jnp.maximum(h, 0.0)
    y = jnp.dot(h.astype(jnp.bfloat16), w2.astype(jnp.bfloat16),
                preferred_element_type=jnp.float32) + b2.reshape(1, -1)
    z = x.astype(jnp.float32) + y
    mean = jnp.mean(z, axis=-1, keepdims=True)
    zc = z - mean
    var = jnp.mean(zc * zc, axis=-1, keepdims=True)
    return zc * jax.lax.rsqrt(var + eps) * ln_g.reshape(1, -1) + ln_b.reshape(1, -1)


# --------------------------------------------------------------------------------------
# im2col glue (pure layout work; the matmul goes through the Pallas linear kernel)
# --------------------------------------------------------------------------------------

def conv_down_im2col(x):
    """3x3, stride 2, padding 1 conv patches.  x:(B,C,H,W) -> (B*h2*w2, C*9), h2, w2."""
    B, C, H, W = x.shape
    h2 = (H - 1) // 2 + 1
    w2 = (W - 1) // 2 + 1
    xp = jnp.pad(x, ((0, 0), (0, 0), (1, 1), (1, 1)))
    cols = []
    for kh in range(3):
        for kw in range(3):
            cols.append(xp[:, :, kh:kh + 2 * h2:2, kw:kw + 2 * w2:2])   # (B,C,h2,w2)
    patches = jnp.stack(cols, axis=2)                 # (B, C, 9, h2, w2)
    patches = patches.transpose(0, 3, 4, 1, 2)        # (B, h2, w2, C, 9)
    return patches.reshape(B * h2 * w2, C * 9), h2, w2


def conv_transpose_im2col(y):
    """ConvTranspose2d(k=3, s=2, p=1, output_padding=1) as dilate+pad + 3x3 conv patches.

    y:(B,C,h,w) -> (B*(2h)*(2w), C*9), Ho, Wo.  The matmul weight is the equivalent-conv
    weight in (C*9, C_out) layout.
    """
    B, C, h, w = y.shape
    Ho, Wo = 2 * h, 2 * w
    z = jnp.zeros((B, C, 2 * h - 1, 2 * w - 1), y.dtype).at[:, :, ::2, ::2].set(y)
    zp = jnp.pad(z, ((0, 0), (0, 0), (1, 2), (1, 2)))   # (k-1-p)=1 before, +output_padding after
    cols = []
    for kh in range(3):
        for kw in range(3):
            cols.append(zp[:, :, kh:kh + Ho, kw:kw + Wo])   # (B,C,Ho,Wo)
    patches = jnp.stack(cols, axis=2).transpose(0, 3, 4, 1, 2)
    return patches.reshape(B * Ho * Wo, C * 9), Ho, Wo


# --------------------------------------------------------------------------------------
# SpatialTransformer forward (inference / eval semantics: no dropout)
# --------------------------------------------------------------------------------------

def spatial_transformer_forward(params, x, *, nhead, use_pallas=True):
    if use_pallas:
        linear, attn_block, ffn_block = linear_pallas, attn_ln_block_pallas, ffn_ln_block_pallas
    else:
        linear, attn_block, ffn_block = linear_ref, attn_ln_block_ref, ffn_ln_block_ref

    B, C, H, W = x.shape
    E = params["input_proj_w"].shape[1]

    # conv_down ∘ input_proj pre-composed into one matmul (exact: no nonlinearity between).
    w_di = jnp.dot(params["conv_down_w"], params["input_proj_w"])                 # (C*9, E)
    b_di = jnp.dot(params["conv_down_b"], params["input_proj_w"]) + params["input_proj_b"]
    patches, h2, w2 = conv_down_im2col(x.astype(jnp.float32))
    S = h2 * w2
    t = linear(patches, w_di, b_di)                                               # (B*S, E) f32

    # positional embedding: arange lookup == leading rows of the embedding tables
    row = params["row_embed"][:h2]                                                # (h2, E//2)
    col = params["col_embed"][:w2]                                                # (w2, E//2)
    pos = jnp.concatenate(
        [jnp.broadcast_to(row[:, None, :], (h2, w2, E // 2)),
         jnp.broadcast_to(col[None, :, :], (h2, w2, E // 2))],
        axis=-1).reshape(S, E)
    t = t.reshape(B, S, E) + pos[None]                                            # residual stream f32

    dh = E // nhead
    scale = 1.0 / math.sqrt(dh)
    for layer in params["layers"]:
        # QKV projection: bf16 output feeds the attention matmuls directly (no f32 round trip)
        qkv = linear(t.reshape(B * S, E), layer["w_qkv"], layer["b_qkv"],
                     out_dtype=jnp.bfloat16)                                      # (B*S, 3E) bf16
        qkv = qkv.reshape(B, S, 3, nhead, dh).transpose(2, 0, 3, 1, 4)            # (3, B, nh, S, dh)
        # fused: attention (all heads) + out-proj + residual + LayerNorm
        t = attn_block(qkv[0], qkv[1], qkv[2], t, layer["w_o"], layer["b_o"],
                       layer["ln1_g"], layer["ln1_b"], scale=scale)               # (B, S, E) f32
        # fused: FF1(relu) + FF2 + residual + LayerNorm
        t = ffn_block(t.reshape(B * S, E), layer["w_ff1"], layer["b_ff1"],
                      layer["w_ff2"], layer["b_ff2"],
                      layer["ln2_g"], layer["ln2_b"]).reshape(B, S, E)

    # output_proj -> (B, M, h2, w2); bf16 output (its only consumer is the bf16 conv_up matmul)
    o = linear(t.reshape(B * S, E), params["out_proj_w"], params["out_proj_b"],
               out_dtype=jnp.bfloat16)
    Mch = o.shape[-1]
    o = o.reshape(B, h2, w2, Mch).transpose(0, 3, 1, 2)

    # conv_up: ConvTranspose2d(M, M, 3, stride=2, padding=1, output_padding=1) + sigmoid
    up_patches, Ho, Wo = conv_transpose_im2col(o)
    y = linear(up_patches, params["conv_up_w"], params["conv_up_b"], act="sigmoid")
    return y.reshape(B, Ho, Wo, Mch).transpose(0, 3, 1, 2)                        # (B, M, H, W)


# --------------------------------------------------------------------------------------
# Parameter init (matmul-ready layouts: weights stored as (in, out))
# --------------------------------------------------------------------------------------

def init_params(key, *, in_channels, out_channels, hidden_dim, nhead, num_layers,
                ff_dim, max_size):
    del nhead  # head count only affects how hidden_dim is split at runtime

    def uniform(k, shape, fan_in):
        bound = 1.0 / math.sqrt(fan_in)
        return jax.random.uniform(k, shape, jnp.float32, -bound, bound)

    keys = iter(jax.random.split(key, 16 + 12 * num_layers))
    E = hidden_dim
    p = {
        "conv_down_w": uniform(next(keys), (in_channels * 9, in_channels), in_channels * 9),
        "conv_down_b": uniform(next(keys), (in_channels,), in_channels * 9),
        "input_proj_w": uniform(next(keys), (in_channels, E), in_channels),
        "input_proj_b": uniform(next(keys), (E,), in_channels),
        "row_embed": jax.random.normal(next(keys), (max_size, E // 2), jnp.float32),
        "col_embed": jax.random.normal(next(keys), (max_size, E // 2), jnp.float32),
        "out_proj_w": uniform(next(keys), (E, out_channels), E),
        "out_proj_b": uniform(next(keys), (out_channels,), E),
        "conv_up_w": uniform(next(keys), (out_channels * 9, out_channels), out_channels * 9),
        "conv_up_b": uniform(next(keys), (out_channels,), out_channels * 9),
    }
    layers = []
    for _ in range(num_layers):
        layers.append({
            "w_qkv": uniform(next(keys), (E, 3 * E), E),
            "b_qkv": uniform(next(keys), (3 * E,), E),
            "w_o": uniform(next(keys), (E, E), E),
            "b_o": uniform(next(keys), (E,), E),
            "ln1_g": jnp.ones((E,), jnp.float32),
            "ln1_b": jnp.zeros((E,), jnp.float32),
            "w_ff1": uniform(next(keys), (E, ff_dim), E),
            "b_ff1": uniform(next(keys), (ff_dim,), E),
            "w_ff2": uniform(next(keys), (ff_dim, E), ff_dim),
            "b_ff2": uniform(next(keys), (E,), ff_dim),
            "ln2_g": jnp.ones((E,), jnp.float32),
            "ln2_b": jnp.zeros((E,), jnp.float32),
        })
    p["layers"] = layers
    return p


# --------------------------------------------------------------------------------------

if __name__ == "__main__":
    B, C_IN, C_OUT = 2, 4, 4
    H = W = 16
    HIDDEN, NHEAD, NLAYERS, FF_DIM, MAX_SIZE = 32, 4, 2, 64, 32

    key = jax.random.PRNGKey(0)
    kx, kp = jax.random.split(key)
    x = jax.random.normal(kx, (B, C_IN, H, W), jnp.float32)
    params = init_params(kp, in_channels=C_IN, out_channels=C_OUT, hidden_dim=HIDDEN,
                         nhead=NHEAD, num_layers=NLAYERS, ff_dim=FF_DIM, max_size=MAX_SIZE)

    fwd = jax.jit(functools.partial(spatial_transformer_forward, nhead=NHEAD, use_pallas=True))
    out = fwd(params, x)
    jax.block_until_ready(out)

    assert out.shape == (B, C_OUT, H, W), out.shape
    assert bool(jnp.all(jnp.isfinite(out)))
    assert bool(jnp.all((out >= 0.0) & (out <= 1.0)))   # sigmoid range

    # Pure-JAX reference with identical structure (same bf16 matmuls, exact softmax divide)
    ref = spatial_transformer_forward(params, x, nhead=NHEAD, use_pallas=False)
    max_err = float(jnp.max(jnp.abs(out - ref)))
    assert jnp.allclose(out, ref, atol=1e-2, rtol=1e-2), max_err

    print("KERNEL_OK")
</pallas_src>

<mosaic_0001>
module attributes {stable_mosaic.version = 11 : i64} {
  func.func @_linear_kernel(%arg0: i32, %arg1: memref<128x36xf32, #tpu.memory_space<vmem>>, %arg2: memref<36x32xbf16, #tpu.memory_space<vmem>>, %arg3: memref<1x32xf32, #tpu.memory_space<vmem>>, %arg4: memref<128x32xf32, #tpu.memory_space<vmem>>) attributes {dimension_semantics = [#tpu.dimension_semantics<parallel>], iteration_bounds = array<i64: 1>, scalar_prefetch = 0 : i64, scratch_operands = 0 : i64, tpu.core_type = #tpu.core_type<tc>, window_params = [{transform_indices = @transform_0, window_bounds = array<i64: 128, 36>}, {pipeline_mode = #tpu.pipeline_mode<synchronous>, transform_indices = @transform_1, window_bounds = array<i64: 36, 32>}, {pipeline_mode = #tpu.pipeline_mode<synchronous>, transform_indices = @transform_2, window_bounds = array<i64: 1, 32>}, {transform_indices = @transform_3, window_bounds = array<i64: 128, 32>}]} {
    %c0 = arith.constant 0 : index
    %c0_0 = arith.constant 0 : index
    %0 = vector.load %arg1[%c0, %c0_0] : memref<128x36xf32, #tpu.memory_space<vmem>>, vector<128x36xf32>
    %1 = arith.truncf %0 : vector<128x36xf32> to vector<128x36xbf16>
    %c0_1 = arith.constant 0 : index
    %c0_2 = arith.constant 0 : index
    %2 = vector.load %arg2[%c0_1, %c0_2] : memref<36x32xbf16, #tpu.memory_space<vmem>>, vector<36x32xbf16>
    %cst = arith.constant dense<0.000000e+00> : vector<128x32xf32>
    %3 = tpu.matmul %1, %2, %cst {dimension_numbers = #tpu.dot_dimension_numbers<[1], [0], [0], [1], [0, 0, 1, 1], [], []>} : vector<128x36xbf16>, vector<36x32xbf16>, vector<128x32xf32> -> vector<128x32xf32>
    %c0_3 = arith.constant 0 : index
    %c0_4 = arith.constant 0 : index
    %4 = vector.load %arg3[%c0_3, %c0_4] : memref<1x32xf32, #tpu.memory_space<vmem>>, vector<1x32xf32>
    %5 = vector.broadcast %4 : vector<1x32xf32> to vector<128x32xf32>
    %6 = arith.addf %3, %5 : vector<128x32xf32>
    %c0_5 = arith.constant 0 : index
    %c0_6 = arith.constant 0 : index
    %7 = vector.load %arg4[%c0_5, %c0_6] : memref<128x32xf32, #tpu.memory_space<vmem>>, vector<128x32xf32>
    tpu.vector_store %arg4[%c0_5, %c0_6], %6 {strides = array<i32>} : memref<128x32xf32, #tpu.memory_space<vmem>>, vector<128x32xf32>,
    return
  }
  func.func @transform_0(%arg0: i32) -> (i32, i32) {
    %c0_i32 = arith.constant 0 : i32
    %c0_i32_0 = arith.constant 0 : i32
    return %arg0, %c0_i32 : i32, i32
  }
  func.func @transform_1(%arg0: i32) -> (i32, i32) {
    %c0_i32 = arith.constant 0 : i32
    %c0_i32_0 = arith.constant 0 : i32
    %c0_i32_1 = arith.constant 0 : i32
    return %c0_i32, %c0_i32_0 : i32, i32
  }
  func.func @transform_2(%arg0: i32) -> (i32, i32) {
    %c0_i32 = arith.constant 0 : i32
    %c0_i32_0 = arith.constant 0 : i32
    %c0_i32_1 = arith.constant 0 : i32
    return %c0_i32, %c0_i32_0 : i32, i32
  }
  func.func @transform_3(%arg0: i32) -> (i32, i32) {
    %c0_i32 = arith.constant 0 : i32
    %c0_i32_0 = arith.constant 0 : i32
    return %arg0, %c0_i32 : i32, i32
  }
}

module attributes {stable_mosaic.version = 11 : i64} {
  func.func @_linear_kernel(%arg0: i32, %arg1: memref<128x32xf32, #tpu.memory_space<vmem>>, %arg2: memref<32x96xbf16, #tpu.memory_space<vmem>>, %arg3: memref<1x96xf32, #tpu.memory_space<vmem>>, %arg4: memref<128x96xbf16, #tpu.memory_space<vmem>>) attributes {dimension_semantics = [#tpu.dimension_semantics<parallel>], iteration_bounds = array<i64: 1>, scalar_prefetch = 0 : i64, scratch_operands = 0 : i64, tpu.core_type = #tpu.core_type<tc>, window_params = [{transform_indices = @transform_0, window_bounds = array<i64: 128, 32>}, {pipeline_mode = #tpu.pipeline_mode<synchronous>, transform_indices = @transform_1, window_bounds = array<i64: 32, 96>}, {pipeline_mode = #tpu.pipeline_mode<synchronous>, transform_indices = @transform_2, window_bounds = array<i64: 1, 96>}, {transform_indices = @transform_3, window_bounds = array<i64: 128, 96>}]} {
    %c0 = arith.constant 0 : index
    %c0_0 = arith.constant 0 : index
    %0 = vector.load %arg1[%c0, %c0_0] : memref<128x32xf32, #tpu.memory_space<vmem>>, vector<128x32xf32>
    %1 = arith.truncf %0 : vector<128x32xf32> to vector<128x32xbf16>
    %c0_1 = arith.constant 0 : index
    %c0_2 = arith.constant 0 : index
    %2 = vector.load %arg2[%c0_1, %c0_2] : memref<32x96xbf16, #tpu.memory_space<vmem>>, vector<32x96xbf16>
    %cst = arith.constant dense<0.000000e+00> : vector<128x96xf32>
    %3 = tpu.matmul %1, %2, %cst {dimension_numbers = #tpu.dot_dimension_numbers<[1], [0], [0], [1], [0, 0, 1, 1], [], []>} : vector<128x32xbf16>, vector<32x96xbf16>, vector<128x96xf32> -> vector<128x96xf32>
    %c0_3 = arith.constant 0 : index
    %c0_4 = arith.constant 0 : index
    %4 = vector.load %arg3[%c0_3, %c0_4] : memref<1x96xf32, #tpu.memory_space<vmem>>, vector<1x96xf32>
    %5 = vector.broadcast %4 : vector<1x96xf32> to vector<128x96xf32>
    %6 = arith.addf %3, %5 : vector<128x96xf32>
    %7 = arith.truncf %6 : vector<128x96xf32> to vector<128x96xbf16>
    %c0_5 = arith.constant 0 : index
    %c0_6 = arith.constant 0 : index
    %8 = vector.load %arg4[%c0_5, %c0_6] : memref<128x96xbf16, #tpu.memory_space<vmem>>, vector<128x96xbf16>
    tpu.vector_store %arg4[%c0_5, %c0_6], %7 {strides = array<i32>} : memref<128x96xbf16, #tpu.memory_space<vmem>>, vector<128x96xbf16>,
    return
  }
  func.func @transform_0(%arg0: i32) -> (i32, i32) {
    %c0_i32 = arith.constant 0 : i32
    %c0_i32_0 = arith.constant 0 : i32
    return %arg0, %c0_i32 : i32, i32
  }
  func.func @transform_1(%arg0: i32) -> (i32, i32) {
    %c0_i32 = arith.constant 0 : i32
    %c0_i32_0 = arith.constant 0 : i32
    %c0_i32_1 = arith.constant 0 : i32
    return %c0_i32, %c0_i32_0 : i32, i32
  }
  func.func @transform_2(%arg0: i32) -> (i32, i32) {
    %c0_i32 = arith.constant 0 : i32
    %c0_i32_0 = arith.constant 0 : i32
    %c0_i32_1 = arith.constant 0 : i32
    return %c0_i32, %c0_i32_0 : i32, i32
  }
  func.func @transform_3(%arg0: i32) -> (i32, i32) {
    %c0_i32 = arith.constant 0 : i32
    %c0_i32_0 = arith.constant 0 : i32
    return %arg0, %c0_i32 : i32, i32
  }
}

module attributes {stable_mosaic.version = 11 : i64} {
  func.func @_attn_block_kernel(%arg0: i32, %arg1: memref<1x4x64x8xbf16, #tpu.memory_space<vmem>>, %arg2: memref<1x4x64x8xbf16, #tpu.memory_space<vmem>>, %arg3: memref<1x4x64x8xbf16, #tpu.memory_space<vmem>>, %arg4: memref<1x64x32xf32, #tpu.memory_space<vmem>>, %arg5: memref<4x8x32xbf16, #tpu.memory_space<vmem>>, %arg6: memref<1x32xf32, #tpu.memory_space<vmem>>, %arg7: memref<1x32xf32, #tpu.memory_space<vmem>>, %arg8: memref<1x32xf32, #tpu.memory_space<vmem>>, %arg9: memref<1x64x32xf32, #tpu.memory_space<vmem>>) attributes {dimension_semantics = [#tpu.dimension_semantics<parallel>], iteration_bounds = array<i64: 2>, scalar_prefetch = 0 : i64, scratch_operands = 0 : i64, tpu.core_type = #tpu.core_type<tc>, window_params = [{transform_indices = @transform_0, window_bounds = array<i64: 1, 4, 64, 8>}, {transform_indices = @transform_1, window_bounds = array<i64: 1, 4, 64, 8>}, {transform_indices = @transform_2, window_bounds = array<i64: 1, 4, 64, 8>}, {transform_indices = @transform_3, window_bounds = array<i64: 1, 64, 32>}, {pipeline_mode = #tpu.pipeline_mode<synchronous>, transform_indices = @transform_4, window_bounds = array<i64: 4, 8, 32>}, {pipeline_mode = #tpu.pipeline_mode<synchronous>, transform_indices = @transform_5, window_bounds = array<i64: 1, 32>}, {pipeline_mode = #tpu.pipeline_mode<synchronous>, transform_indices = @transform_6, window_bounds = array<i64: 1, 32>}, {pipeline_mode = #tpu.pipeline_mode<synchronous>, transform_indices = @transform_7, window_bounds = array<i64: 1, 32>}, {transform_indices = @transform_8, window_bounds = array<i64: 1, 64, 32>}]} {
    %c0 = arith.constant 0 : index
    %c0_0 = arith.constant 0 : index
    %c0_1 = arith.constant 0 : index
    %c0_2 = arith.constant 0 : index
    %0 = vector.load %arg1[%c0, %c0_0, %c0_1, %c0_2] : memref<1x4x64x8xbf16, #tpu.memory_space<vmem>>, vector<1x4x64x8xbf16>
    %1 = vector.shape_cast %0 : vector<1x4x64x8xbf16> to vector<4x64x8xbf16>
    %c0_3 = arith.constant 0 : index
    %c0_4 = arith.constant 0 : index
    %c0_5 = arith.constant 0 : index
    %c0_6 = arith.constant 0 : index
    %2 = vector.load %arg2[%c0_3, %c0_4, %c0_5, %c0_6] : memref<1x4x64x8xbf16, #tpu.memory_space<vmem>>, vector<1x4x64x8xbf16>
    %3 = vector.shape_cast %2 : vector<1x4x64x8xbf16> to vector<4x64x8xbf16>
    %c0_7 = arith.constant 0 : index
    %c0_8 = arith.constant 0 : index
    %c0_9 = arith.constant 0 : index
    %c0_10 = arith.constant 0 : index
    %4 = vector.load %arg3[%c0_7, %c0_8, %c0_9, %c0_10] : memref<1x4x64x8xbf16, #tpu.memory_space<vmem>>, vector<1x4x64x8xbf16>
    %5 = vector.shape_cast %4 : vector<1x4x64x8xbf16> to vector<4x64x8xbf16>
    "tpu.trace_start"() <{level = 10 : i32, message = "hqd,hkd->hqk"}> : () -> ()
    %cst = arith.constant dense<0.000000e+00> : vector<4x64x64xf32>
    %6 = tpu.matmul %1, %3, %cst {dimension_numbers = #tpu.dot_dimension_numbers<[2], [2], [1], [1], [0, 0, 0, 1, 1, 1], [0], [0]>} : vector<4x64x8xbf16>, vector<4x64x8xbf16>, vector<4x64x64xf32> -> vector<4x64x64xf32>
    "tpu.trace_stop"() : () -> ()
    %cst_11 = arith.constant 0.353553385 : f32
    %7 = vector.broadcast %cst_11 : f32 to vector<4x64x64xf32>
    %8 = arith.mulf %6, %7 : vector<4x64x64xf32>
    %cst_12 = arith.constant dense<0xFF800000> : vector<4x64xf32>
    %9 = vector.multi_reduction <maximumf>, %8, %cst_12 [2] : vector<4x64x64xf32> to vector<4x64xf32>
    %10 = vector.shape_cast %9 : vector<4x64xf32> to vector<4x64x1xf32>
    %11 = vector.broadcast %10 : vector<4x64x1xf32> to vector<4x64x64xf32>
    %12 = arith.subf %8, %11 : vector<4x64x64xf32>
    %13 = math.exp %12 : vector<4x64x64xf32>
    %cst_13 = arith.constant dense<0.000000e+00> : vector<4x64xf32>
    %14 = vector.multi_reduction <add>, %13, %cst_13 [2] : vector<4x64x64xf32> to vector<4x64xf32>
    %15 = vector.shape_cast %14 : vector<4x64xf32> to vector<4x64x1xf32>
    %16 = tpu.reciprocal %15 {approx = true} : vector<4x64x1xf32> -> vector<4x64x1xf32>
    %17 = vector.broadcast %16 : vector<4x64x1xf32> to vector<4x64x64xf32>
    %18 = arith.mulf %13, %17 : vector<4x64x64xf32>
    %19 = arith.truncf %18 : vector<4x64x64xf32> to vector<4x64x64xbf16>
    "tpu.trace_start"() <{level = 10 : i32, message = "hqk,hkd->hqd"}> : () -> ()
    %cst_14 = arith.constant dense<0.000000e+00> : vector<4x64x8xf32>
    %20 = tpu.matmul %19, %5, %cst_14 {dimension_numbers = #tpu.dot_dimension_numbers<[2], [1], [1], [2], [0, 0, 0, 1, 1, 2], [0], [0]>} : vector<4x64x64xbf16>, vector<4x64x8xbf16>, vector<4x64x8xf32> -> vector<4x64x8xf32>
    %cst_15 = arith.constant 0.000000e+00 : f32
    "tpu.trace_stop"() : () -> ()
    %21 = vector.broadcast %cst_15 : f32 to vector<64x32xf32>
    %22 = vector.extract_strided_slice %20 {offsets = [0, 0, 0], sizes = [1, 64, 8], strides = [1, 1, 1]} : vector<4x64x8xf32> to vector<1x64x8xf32>
    %23 = vector.shape_cast %22 : vector<1x64x8xf32> to vector<64x8xf32>
    %24 = arith.truncf %23 : vector<64x8xf32> to vector<64x8xbf16>
    %c0_16 = arith.constant 0 : index
    %c0_17 = arith.constant 0 : index
    %c0_18 = arith.constant 0 : index
    %25 = vector.load %arg5[%c0_16, %c0_17, %c0_18] : memref<4x8x32xbf16, #tpu.memory_space<vmem>>, vector<1x8x32xbf16>
    %26 = vector.shape_cast %25 : vector<1x8x32xbf16> to vector<8x32xbf16>
    %cst_19 = arith.constant dense<0.000000e+00> : vector<64x32xf32>
    %27 = tpu.matmul %24, %26, %cst_19 {dimension_numbers = #tpu.dot_dimension_numbers<[1], [0], [0], [1], [0, 0, 1, 1], [], []>} : vector<64x8xbf16>, vector<8x32xbf16>, vector<64x32xf32> -> vector<64x32xf32>
    %28 = arith.addf %21, %27 : vector<64x32xf32>
    %29 = vector.extract_strided_slice %20 {offsets = [1, 0, 0], sizes = [1, 64, 8], strides = [1, 1, 1]} : vector<4x64x8xf32> to vector<1x64x8xf32>
    %30 = vector.shape_cast %29 : vector<1x64x8xf32> to vector<64x8xf32>
    %31 = arith.truncf %30 : vector<64x8xf32> to vector<64x8xbf16>
    %c1 = arith.constant 1 : index
    %c0_20 = arith.constant 0 : index
    %c0_21 = arith.constant 0 : index
    %32 = vector.load %arg5[%c1, %c0_20, %c0_21] : memref<4x8x32xbf16, #tpu.memory_space<vmem>>, vector<1x8x32xbf16>
    %33 = vector.shape_cast %32 : vector<1x8x32xbf16> to vector<8x32xbf16>
    %cst_22 = arith.constant dense<0.000000e+00> : vector<64x32xf32>
    %34 = tpu.matmul %31, %33, %cst_22 {dimension_numbers = #tpu.dot_dimension_numbers<[1], [0], [0], [1], [0, 0, 1, 1], [], []>} : vector<64x8xbf16>, vector<8x32xbf16>, vector<64x32xf32> -> vector<64x32xf32>
    %35 = arith.addf %28, %34 : vector<64x32xf32>
    %36 = vector.extract_strided_slice %20 {offsets = [2, 0, 0], sizes = [1, 64, 8], strides = [1, 1, 1]} : vector<4x64x8xf32> to vector<1x64x8xf32>
    %37 = vector.shape_cast %36 : vector<1x64x8xf32> to vector<64x8xf32>
    %38 = arith.truncf %37 : vector<64x8xf32> to vector<64x8xbf16>
    %c2 = arith.constant 2 : index
    %c0_23 = arith.constant 0 : index
    %c0_24 = arith.constant 0 : index
    %39 = vector.load %arg5[%c2, %c0_23, %c0_24] : memref<4x8x32xbf16, #tpu.memory_space<vmem>>, vector<1x8x32xbf16>
    %40 = vector.shape_cast %39 : vector<1x8x32xbf16> to vector<8x32xbf16>
    %cst_25 = arith.constant dense<0.000000e+00> : vector<64x32xf32>
    %41 = tpu.matmul %38, %40, %cst_25 {dimension_numbers = #tpu.dot_dimension_numbers<[1], [0], [0], [1], [0, 0, 1, 1], [], []>} : vector<64x8xbf16>, vector<8x32xbf16>, vector<64x32xf32> -> vector<64x32xf32>
    %42 = arith.addf %35, %41 : vector<64x32xf32>
    %43 = vector.extract_strided_slice %20 {offsets = [3, 0, 0], sizes = [1, 64, 8], strides = [1, 1, 1]} : vector<4x64x8xf32> to vector<1x64x8xf32>
    %44 = vector.shape_cast %43 : vector<1x64x8xf32> to vector<64x8xf32>
    %45 = arith.truncf %44 : vector<64x8xf32> to vector<64x8xbf16>
    %c3 = arith.constant 3 : index
    %c0_26 = arith.constant 0 : index
    %c0_27 = arith.constant 0 : index
    %46 = vector.load %arg5[%c3, %c0_26, %c0_27] : memref<4x8x32xbf16, #tpu.memory_space<vmem>>, vector<1x8x32xbf16>
    %47 = vector.shape_cast %46 : vector<1x8x32xbf16> to vector<8x32xbf16>
    %cst_28 = arith.constant dense<0.000000e+00> : vector<64x32xf32>
    %48 = tpu.matmul %45, %47, %cst_28 {dimension_numbers = #tpu.dot_dimension_numbers<[1], [0], [0], [1], [0, 0, 1, 1], [], []>} : vector<64x8xbf16>, vector<8x32xbf16>, vector<64x32xf32> -> vector<64x32xf32>
    %49 = arith.addf %42, %48 : vector<64x32xf32>
    %c0_29 = arith.constant 0 : index
    %c0_30 = arith.constant 0 : index
    %c0_31 = arith.constant 0 : index
    %50 = vector.load %arg4[%c0_29, %c0_30, %c0_31] : memref<1x64x32xf32, #tpu.memory_space<vmem>>, vector<1x64x32xf32>
    %51 = vector.shape_cast %50 : vector<1x64x32xf32> to vector<64x32xf32>
    %52 = arith.addf %51, %49 : vector<64x32xf32>
    %c0_32 = arith.constant 0 : index
    %c0_33 = arith.constant 0 : index
    %53 = vector.load %arg6[%c0_32, %c0_33] : memref<1x32xf32, #tpu.memory_space<vmem>>, vector<1x32xf32>
    %54 = vector.broadcast %53 : vector<1x32xf32> to vector<64x32xf32>
    %55 = arith.addf %52, %54 : vector<64x32xf32>
    %cst_34 = arith.constant dense<0.000000e+00> : vector<64xf32>
    %56 = vector.multi_reduction <add>, %55, %cst_34 [1] : vector<64x32xf32> to vector<64xf32>
    %57 = vector.shape_cast %56 : vector<64xf32> to vector<64x1xf32>
    %cst_35 = arith.constant 3.200000e+01 : f32
    %58 = vector.broadcast %cst_35 : f32 to vector<64x1xf32>
    %59 = arith.divf %57, %58 : vector<64x1xf32>
    %60 = vector.broadcast %59 : vector<64x1xf32> to vector<64x32xf32>
    %61 = arith.subf %55, %60 : vector<64x32xf32>
    %62 = arith.mulf %61, %61 : vector<64x32xf32>
    %cst_36 = arith.constant dense<0.000000e+00> : vector<64xf32>
    %63 = vector.multi_reduction <add>, %62, %cst_36 [1] : vector<64x32xf32> to vector<64xf32>
    %64 = vector.shape_cast %63 : vector<64xf32> to vector<64x1xf32>
    %cst_37 = arith.constant 3.200000e+01 : f32
    %65 = vector.broadcast %cst_37 : f32 to vector<64x1xf32>
    %66 = arith.divf %64, %65 : vector<64x1xf32>
    %cst_38 = arith.constant 9.99999974E-6 : f32
    %67 = vector.broadcast %cst_38 : f32 to vector<64x1xf32>
    %68 = arith.addf %66, %67 : vector<64x1xf32>
    %69 = math.rsqrt %68 : vector<64x1xf32>
    %70 = vector.broadcast %69 : vector<64x1xf32> to vector<64x32xf32>
    %71 = arith.mulf %61, %70 : vector<64x32xf32>
    %c0_39 = arith.constant 0 : index
    %c0_40 = arith.constant 0 : index
    %72 = vector.load %arg7[%c0_39, %c0_40] : memref<1x32xf32, #tpu.memory_space<vmem>>, vector<1x32xf32>
    %73 = vector.broadcast %72 : vector<1x32xf32> to vector<64x32xf32>
    %74 = arith.mulf %71, %73 : vector<64x32xf32>
    %c0_41 = arith.constant 0 : index
    %c0_42 = arith.constant 0 : index
    %75 = vector.load %arg8[%c0_41, %c0_42] : memref<1x32xf32, #tpu.memory_space<vmem>>, vector<1x32xf32>
    %76 = vector.broadcast %75 : vector<1x32xf32> to vector<64x32xf32>
    %77 = arith.addf %74, %76 : vector<64x32xf32>
    %c0_43 = arith.constant 0 : index
    %c0_44 = arith.constant 0 : index
    %c0_45 = arith.constant 0 : index
    %78 = vector.load %arg9[%c0_43, %c0_44, %c0_45] : memref<1x64x32xf32, #tpu.memory_space<vmem>>, vector<1x64x32xf32>
    %79 = vector.shape_cast %78 : vector<1x64x32xf32> to vector<64x32xf32>
    %80 = vector.shape_cast %77 : vector<64x32xf32> to vector<1x64x32xf32>
    tpu.vector_store %arg9[%c0_43, %c0_44, %c0_45], %80 {strides = array<i32>} : memref<1x64x32xf32, #tpu.memory_space<vmem>>, vector<1x64x32xf32>,
    return
  }
  func.func @transform_0(%arg0: i32) -> (i32, i32, i32, i32) {
    %c0_i32 = arith.constant 0 : i32
    %c0_i32_0 = arith.constant 0 : i32
    %c0_i32_1 = arith.constant 0 : i32
    %c0_i32_2 = arith.constant 0 : i32
    return %arg0, %c0_i32, %c0_i32_0, %c0_i32_1 : i32, i32, i32, i32
  }
  func.func @transform_1(%arg0: i32) -> (i32, i32, i32, i32) {
    %c0_i32 = arith.constant 0 : i32
    %c0_i32_0 = arith.constant 0 : i32
    %c0_i32_1 = arith.constant 0 : i32
    %c0_i32_2 = arith.constant 0 : i32
    return %arg0, %c0_i32, %c0_i32_0, %c0_i32_1 : i32, i32, i32, i32
  }
  func.func @transform_2(%arg0: i32) -> (i32, i32, i32, i32) {
    %c0_i32 = arith.constant 0 : i32
    %c0_i32_0 = arith.constant 0 : i32
    %c0_i32_1 = arith.constant 0 : i32
    %c0_i32_2 = arith.constant 0 : i32
    return %arg0, %c0_i32, %c0_i32_0, %c0_i32_1 : i32, i32, i32, i32
  }
  func.func @transform_3(%arg0: i32) -> (i32, i32, i32) {
    %c0_i32 = arith.constant 0 : i32
    %c0_i32_0 = arith.constant 0 : i32
    %c0_i32_1 = arith.constant 0 : i32
    return %arg0, %c0_i32, %c0_i32_0 : i32, i32, i32
  }
  func.func @transform_4(%arg0: i32) -> (i32, i32, i32) {
    %c0_i32 = arith.constant 0 : i32
    %c0_i32_0 = arith.constant 0 : i32
    %c0_i32_1 = arith.constant 0 : i32
    %c0_i32_2 = arith.constant 0 : i32
    return %c0_i32, %c0_i32_0, %c0_i32_1 : i32, i32, i32
  }
  func.func @transform_5(%arg0: i32) -> (i32, i32) {
    %c0_i32 = arith.constant 0 : i32
    %c0_i32_0 = arith.constant 0 : i32
    %c0_i32_1 = arith.constant 0 : i32
    return %c0_i32, %c0_i32_0 : i32, i32
  }
  func.func @transform_6(%arg0: i32) -> (i32, i32) {
    %c0_i32 = arith.constant 0 : i32
    %c0_i32_0 = arith.constant 0 : i32
    %c0_i32_1 = arith.constant 0 : i32
    return %c0_i32, %c0_i32_0 : i32, i32
  }
  func.func @transform_7(%arg0: i32) -> (i32, i32) {
    %c0_i32 = arith.constant 0 : i32
    %c0_i32_0 = arith.constant 0 : i32
    %c0_i32_1 = arith.constant 0 : i32
    return %c0_i32, %c0_i32_0 : i32, i32
  }
  func.func @transform_8(%arg0: i32) -> (i32, i32, i32) {
    %c0_i32 = arith.constant 0 : i32
    %c0_i32_0 = arith.constant 0 : i32
    %c0_i32_1 = arith.constant 0 : i32
    return %arg0, %c0_i32, %c0_i32_0 : i32, i32, i32
  }
}

module attributes {stable_mosaic.version = 11 : i64} {
  func.func @_linear_kernel(%arg0: i32, %arg1: memref<128x32xf32, #tpu.memory_space<vmem>>, %arg2: memref<32x4xbf16, #tpu.memory_space<vmem>>, %arg3: memref<1x4xf32, #tpu.memory_space<vmem>>, %arg4: memref<128x4xbf16, #tpu.memory_space<vmem>>) attributes {dimension_semantics = [#tpu.dimension_semantics<parallel>], iteration_bounds = array<i64: 1>, scalar_prefetch = 0 : i64, scratch_operands = 0 : i64, tpu.core_type = #tpu.core_type<tc>, window_params = [{transform_indices = @transform_0, window_bounds = array<i64: 128, 32>}, {pipeline_mode = #tpu.pipeline_mode<synchronous>, transform_indices = @transform_1, window_bounds = array<i64: 32, 4>}, {pipeline_mode = #tpu.pipeline_mode<synchronous>, transform_indices = @transform_2, window_bounds = array<i64: 1, 4>}, {transform_indices = @transform_3, window_bounds = array<i64: 128, 4>}]} {
    %c0 = arith.constant 0 : index
    %c0_0 = arith.constant 0 : index
    %0 = vector.load %arg1[%c0, %c0_0] : memref<128x32xf32, #tpu.memory_space<vmem>>, vector<128x32xf32>
    %1 = arith.truncf %0 : vector<128x32xf32> to vector<128x32xbf16>
    %c0_1 = arith.constant 0 : index
    %c0_2 = arith.constant 0 : index
    %2 = vector.load %arg2[%c0_1, %c0_2] : memref<32x4xbf16, #tpu.memory_space<vmem>>, vector<32x4xbf16>
    %cst = arith.constant dense<0.000000e+00> : vector<128x4xf32>
    %3 = tpu.matmul %1, %2, %cst {dimension_numbers = #tpu.dot_dimension_numbers<[1], [0], [0], [1], [0, 0, 1, 1], [], []>} : vector<128x32xbf16>, vector<32x4xbf16>, vector<128x4xf32> -> vector<128x4xf32>
    %c0_3 = arith.constant 0 : index
    %c0_4 = arith.constant 0 : index
    %4 = vector.load %arg3[%c0_3, %c0_4] : memref<1x4xf32, #tpu.memory_space<vmem>>, vector<1x4xf32>
    %5 = vector.broadcast %4 : vector<1x4xf32> to vector<128x4xf32>
    %6 = arith.addf %3, %5 : vector<128x4xf32>
    %7 = arith.truncf %6 : vector<128x4xf32> to vector<128x4xbf16>
    %c0_5 = arith.constant 0 : index
    %c0_6 = arith.constant 0 : index
    %8 = vector.load %arg4[%c0_5, %c0_6] : memref<128x4xbf16, #tpu.memory_space<vmem>>, vector<128x4xbf16>
    tpu.vector_store %arg4[%c0_5, %c0_6], %7 {strides = array<i32>} : memref<128x4xbf16, #tpu.memory_space<vmem>>, vector<128x4xbf16>,
    return
  }
  func.func @transform_0(%arg0: i32) -> (i32, i32) {
    %c0_i32 = arith.constant 0 : i32
    %c0_i32_0 = arith.constant 0 : i32
    return %arg0, %c0_i32 : i32, i32
  }
  func.func @transform_1(%arg0: i32) -> (i32, i32) {
    %c0_i32 = arith.constant 0 : i32
    %c0_i32_0 = arith.constant 0 : i32
    %c0_i32_1 = arith.constant 0 : i32
    return %c0_i32, %c0_i32_0 : i32, i32
  }
  func.func @transform_2(%arg0: i32) -> (i32, i32) {
    %c0_i32 = arith.constant 0 : i32
    %c0_i32_0 = arith.constant 0 : i32
    %c0_i32_1 = arith.constant 0 : i32
    return %c0_i32, %c0_i32_0 : i32, i32
  }
  func.func @transform_3(%arg0: i32) -> (i32, i32) {
    %c0_i32 = arith.constant 0 : i32
    %c0_i32_0 = arith.constant 0 : i32
    return %arg0, %c0_i32 : i32, i32
  }
}

module attributes {stable_mosaic.version = 11 : i64} {
  func.func @_ffn_ln_kernel(%arg0: i32, %arg1: memref<128x32xf32, #tpu.memory_space<vmem>>, %arg2: memref<32x64xbf16, #tpu.memory_space<vmem>>, %arg3: memref<1x64xf32, #tpu.memory_space<vmem>>, %arg4: memref<64x32xbf16, #tpu.memory_space<vmem>>, %arg5: memref<1x32xf32, #tpu.memory_space<vmem>>, %arg6: memref<1x32xf32, #tpu.memory_space<vmem>>, %arg7: memref<1x32xf32, #tpu.memory_space<vmem>>, %arg8: memref<128x32xf32, #tpu.memory_space<vmem>>) attributes {dimension_semantics = [#tpu.dimension_semantics<parallel>], iteration_bounds = array<i64: 1>, scalar_prefetch = 0 : i64, scratch_operands = 0 : i64, tpu.core_type = #tpu.core_type<tc>, window_params = [{transform_indices = @transform_0, window_bounds = array<i64: 128, 32>}, {pipeline_mode = #tpu.pipeline_mode<synchronous>, transform_indices = @transform_1, window_bounds = array<i64: 32, 64>}, {pipeline_mode = #tpu.pipeline_mode<synchronous>, transform_indices = @transform_2, window_bounds = array<i64: 1, 64>}, {pipeline_mode = #tpu.pipeline_mode<synchronous>, transform_indices = @transform_3, window_bounds = array<i64: 64, 32>}, {pipeline_mode = #tpu.pipeline_mode<synchronous>, transform_indices = @transform_4, window_bounds = array<i64: 1, 32>}, {pipeline_mode = #tpu.pipeline_mode<synchronous>, transform_indices = @transform_5, window_bounds = array<i64: 1, 32>}, {pipeline_mode = #tpu.pipeline_mode<synchronous>, transform_indices = @transform_6, window_bounds = array<i64: 1, 32>}, {transform_indices = @transform_7, window_bounds = array<i64: 128, 32>}]} {
    %c0 = arith.constant 0 : index
    %c0_0 = arith.constant 0 : index
    %0 = vector.load %arg1[%c0, %c0_0] : memref<128x32xf32, #tpu.memory_space<vmem>>, vector<128x32xf32>
    %1 = arith.truncf %0 : vector<128x32xf32> to vector<128x32xbf16>
    %c0_1 = arith.constant 0 : index
    %c0_2 = arith.constant 0 : index
    %2 = vector.load %arg2[%c0_1, %c0_2] : memref<32x64xbf16, #tpu.memory_space<vmem>>, vector<32x64xbf16>
    %cst = arith.constant dense<0.000000e+00> : vector<128x64xf32>
    %3 = tpu.matmul %1, %2, %cst {dimension_numbers = #tpu.dot_dimension_numbers<[1], [0], [0], [1], [0, 0, 1, 1], [], []>} : vector<128x32xbf16>, vector<32x64xbf16>, vector<128x64xf32> -> vector<128x64xf32>
    %c0_3 = arith.constant 0 : index
    %c0_4 = arith.constant 0 : index
    %4 = vector.load %arg3[%c0_3, %c0_4] : memref<1x64xf32, #tpu.memory_space<vmem>>, vector<1x64xf32>
    %5 = vector.broadcast %4 : vector<1x64xf32> to vector<128x64xf32>
    %6 = arith.addf %3, %5 : vector<128x64xf32>
    %cst_5 = arith.constant 0.000000e+00 : f32
    %7 = vector.broadcast %cst_5 : f32 to vector<128x64xf32>
    %8 = arith.maximumf %6, %7 : vector<128x64xf32>
    %9 = arith.truncf %8 : vector<128x64xf32> to vector<128x64xbf16>
    %c0_6 = arith.constant 0 : index
    %c0_7 = arith.constant 0 : index
    %10 = vector.load %arg4[%c0_6, %c0_7] : memref<64x32xbf16, #tpu.memory_space<vmem>>, vector<64x32xbf16>
    %cst_8 = arith.constant dense<0.000000e+00> : vector<128x32xf32>
    %11 = tpu.matmul %9, %10, %cst_8 {dimension_numbers = #tpu.dot_dimension_numbers<[1], [0], [0], [1], [0, 0, 1, 1], [], []>} : vector<128x64xbf16>, vector<64x32xbf16>, vector<128x32xf32> -> vector<128x32xf32>
    %c0_9 = arith.constant 0 : index
    %c0_10 = arith.constant 0 : index
    %12 = vector.load %arg5[%c0_9, %c0_10] : memref<1x32xf32, #tpu.memory_space<vmem>>, vector<1x32xf32>
    %13 = vector.broadcast %12 : vector<1x32xf32> to vector<128x32xf32>
    %14 = arith.addf %11, %13 : vector<128x32xf32>
    %15 = arith.addf %0, %14 : vector<128x32xf32>
    %cst_11 = arith.constant dense<0.000000e+00> : vector<128xf32>
    %16 = vector.multi_reduction <add>, %15, %cst_11 [1] : vector<128x32xf32> to vector<128xf32>
    %17 = vector.shape_cast %16 : vector<128xf32> to vector<128x1xf32>
    %cst_12 = arith.constant 3.200000e+01 : f32
    %18 = vector.broadcast %cst_12 : f32 to vector<128x1xf32>
    %19 = arith.divf %17, %18 : vector<128x1xf32>
    %20 = vector.broadcast %19 : vector<128x1xf32> to vector<128x32xf32>
    %21 = arith.subf %15, %20 : vector<128x32xf32>
    %22 = arith.mulf %21, %21 : vector<128x32xf32>
    %cst_13 = arith.constant dense<0.000000e+00> : vector<128xf32>
    %23 = vector.multi_reduction <add>, %22, %cst_13 [1] : vector<128x32xf32> to vector<128xf32>
    %24 = vector.shape_cast %23 : vector<128xf32> to vector<128x1xf32>
    %cst_14 = arith.constant 3.200000e+01 : f32
    %25 = vector.broadcast %cst_14 : f32 to vector<128x1xf32>
    %26 = arith.divf %24, %25 : vector<128x1xf32>
    %cst_15 = arith.constant 9.99999974E-6 : f32
    %27 = vector.broadcast %cst_15 : f32 to vector<128x1xf32>
    %28 = arith.addf %26, %27 : vector<128x1xf32>
    %29 = math.rsqrt %28 : vector<128x1xf32>
    %30 = vector.broadcast %29 : vector<128x1xf32> to vector<128x32xf32>
    %31 = arith.mulf %21, %30 : vector<128x32xf32>
    %c0_16 = arith.constant 0 : index
    %c0_17 = arith.constant 0 : index
    %32 = vector.load %arg6[%c0_16, %c0_17] : memref<1x32xf32, #tpu.memory_space<vmem>>, vector<1x32xf32>
    %33 = vector.broadcast %32 : vector<1x32xf32> to vector<128x32xf32>
    %34 = arith.mulf %31, %33 : vector<128x32xf32>
    %c0_18 = arith.constant 0 : index
    %c0_19 = arith.constant 0 : index
    %35 = vector.load %arg7[%c0_18, %c0_19] : memref<1x32xf32, #tpu.memory_space<vmem>>, vector<1x32xf32>
    %36 = vector.broadcast %35 : vector<1x32xf32> to vector<128x32xf32>
    %37 = arith.addf %34, %36 : vector<128x32xf32>
    %c0_20 = arith.constant 0 : index
    %c0_21 = arith.constant 0 : index
    %38 = vector.load %arg8[%c0_20, %c0_21] : memref<128x32xf32, #tpu.memory_space<vmem>>, vector<128x32xf32>
    tpu.vector_store %arg8[%c0_20, %c0_21], %37 {strides = array<i32>} : memref<128x32xf32, #tpu.memory_space<vmem>>, vector<128x32xf32>,
    return
  }
  func.func @transform_0(%arg0: i32) -> (i32, i32) {
    %c0_i32 = arith.constant 0 : i32
    %c0_i32_0 = arith.constant 0 : i32
    return %arg0, %c0_i32 : i32, i32
  }
  func.func @transform_1(%arg0: i32) -> (i32, i32) {
    %c0_i32 = arith.constant 0 : i32
    %c0_i32_0 = arith.constant 0 : i32
    %c0_i32_1 = arith.constant 0 : i32
    return %c0_i32, %c0_i32_0 : i32, i32
  }
  func.func @transform_2(%arg0: i32) -> (i32, i32) {
    %c0_i32 = arith.constant 0 : i32
    %c0_i32_0 = arith.constant 0 : i32
    %c0_i32_1 = arith.constant 0 : i32
    return %c0_i32, %c0_i32_0 : i32, i32
  }
  func.func @transform_3(%arg0: i32) -> (i32, i32) {
    %c0_i32 = arith.constant 0 : i32
    %c0_i32_0 = arith.constant 0 : i32
    %c0_i32_1 = arith.constant 0 : i32
    return %c0_i32, %c0_i32_0 : i32, i32
  }
  func.func @transform_4(%arg0: i32) -> (i32, i32) {
    %c0_i32 = arith.constant 0 : i32
    %c0_i32_0 = arith.constant 0 : i32
    %c0_i32_1 = arith.constant 0 : i32
    return %c0_i32, %c0_i32_0 : i32, i32
  }
  func.func @transform_5(%arg0: i32) -> (i32, i32) {
    %c0_i32 = arith.constant 0 : i32
    %c0_i32_0 = arith.constant 0 : i32
    %c0_i32_1 = arith.constant 0 : i32
    return %c0_i32, %c0_i32_0 : i32, i32
  }
  func.func @transform_6(%arg0: i32) -> (i32, i32) {
    %c0_i32 = arith.constant 0 : i32
    %c0_i32_0 = arith.constant 0 : i32
    %c0_i32_1 = arith.constant 0 : i32
    return %c0_i32, %c0_i32_0 : i32, i32
  }
  func.func @transform_7(%arg0: i32) -> (i32, i32) {
    %c0_i32 = arith.constant 0 : i32
    %c0_i32_0 = arith.constant 0 : i32
    return %arg0, %c0_i32 : i32, i32
  }
}

module attributes {stable_mosaic.version = 11 : i64} {
  func.func @_linear_kernel(%arg0: i32, %arg1: memref<512x36xbf16, #tpu.memory_space<vmem>>, %arg2: memref<36x4xbf16, #tpu.memory_space<vmem>>, %arg3: memref<1x4xf32, #tpu.memory_space<vmem>>, %arg4: memref<512x4xf32, #tpu.memory_space<vmem>>) attributes {dimension_semantics = [#tpu.dimension_semantics<parallel>], iteration_bounds = array<i64: 1>, scalar_prefetch = 0 : i64, scratch_operands = 0 : i64, tpu.core_type = #tpu.core_type<tc>, window_params = [{transform_indices = @transform_0, window_bounds = array<i64: 512, 36>}, {pipeline_mode = #tpu.pipeline_mode<synchronous>, transform_indices = @transform_1, window_bounds = array<i64: 36, 4>}, {pipeline_mode = #tpu.pipeline_mode<synchronous>, transform_indices = @transform_2, window_bounds = array<i64: 1, 4>}, {transform_indices = @transform_3, window_bounds = array<i64: 512, 4>}]} {
    %c0 = arith.constant 0 : index
    %c0_0 = arith.constant 0 : index
    %0 = vector.load %arg1[%c0, %c0_0] : memref<512x36xbf16, #tpu.memory_space<vmem>>, vector<512x36xbf16>
    %c0_1 = arith.constant 0 : index
    %c0_2 = arith.constant 0 : index
    %1 = vector.load %arg2[%c0_1, %c0_2] : memref<36x4xbf16, #tpu.memory_space<vmem>>, vector<36x4xbf16>
    %cst = arith.constant dense<0.000000e+00> : vector<512x4xf32>
    %2 = tpu.matmul %0, %1, %cst {dimension_numbers = #tpu.dot_dimension_numbers<[1], [0], [0], [1], [0, 0, 1, 1], [], []>} : vector<512x36xbf16>, vector<36x4xbf16>, vector<512x4xf32> -> vector<512x4xf32>
    %c0_3 = arith.constant 0 : index
    %c0_4 = arith.constant 0 : index
    %3 = vector.load %arg3[%c0_3, %c0_4] : memref<1x4xf32, #tpu.memory_space<vmem>>, vector<1x4xf32>
    %4 = vector.broadcast %3 : vector<1x4xf32> to vector<512x4xf32>
    %5 = arith.addf %2, %4 : vector<512x4xf32>
    %cst_5 = arith.constant 0.000000e+00 : f32
    %6 = vector.broadcast %cst_5 : f32 to vector<512x4xf32>
    %7 = arith.subf %6, %5 : vector<512x4xf32>
    %8 = math.exp %7 : vector<512x4xf32>
    %cst_6 = arith.constant 1.000000e+00 : f32
    %9 = vector.broadcast %cst_6 : f32 to vector<512x4xf32>
    %10 = arith.addf %9, %8 : vector<512x4xf32>
    %cst_7 = arith.constant 1.000000e+00 : f32
    %11 = vector.broadcast %cst_7 : f32 to vector<512x4xf32>
    %12 = arith.divf %11, %10 : vector<512x4xf32>
    %c0_8 = arith.constant 0 : index
    %c0_9 = arith.constant 0 : index
    %13 = vector.load %arg4[%c0_8, %c0_9] : memref<512x4xf32, #tpu.memory_space<vmem>>, vector<512x4xf32>
    tpu.vector_store %arg4[%c0_8, %c0_9], %12 {strides = array<i32>} : memref<512x4xf32, #tpu.memory_space<vmem>>, vector<512x4xf32>,
    return
  }
  func.func @transform_0(%arg0: i32) -> (i32, i32) {
    %c0_i32 = arith.constant 0 : i32
    %c0_i32_0 = arith.constant 0 : i32
    return %arg0, %c0_i32 : i32, i32
  }
  func.func @transform_1(%arg0: i32) -> (i32, i32) {
    %c0_i32 = arith.constant 0 : i32
    %c0_i32_0 = arith.constant 0 : i32
    %c0_i32_1 = arith.constant 0 : i32
    return %c0_i32, %c0_i32_0 : i32, i32
  }
  func.func @transform_2(%arg0: i32) -> (i32, i32) {
    %c0_i32 = arith.constant 0 : i32
    %c0_i32_0 = arith.constant 0 : i32
    %c0_i32_1 = arith.constant 0 : i32
    return %c0_i32, %c0_i32_0 : i32, i32
  }
  func.func @transform_3(%arg0: i32) -> (i32, i32) {
    %c0_i32 = arith.constant 0 : i32
    %c0_i32_0 = arith.constant 0 : i32
    return %arg0, %c0_i32 : i32, i32
  }
}

</mosaic_0001>

<llo_original>
// kernel: spatial_transformer_forward.9
$region0: #{spatial_transformer_forward.9}
  #allocation0 [shape = 'u32[]', space=smem, size = 0x4, offset = 0x4, fixed_abs, tag = 'smem constant byte address 0x4 - core index']
  #allocation1 [shape = 'u32[144,128]{1,0:T(1,128)}', space=vmem, size = 0x12000, scoped, tag = 'internal scratch']
  %s0 = inlined_call_operand.vmem [shape: f32[128,36], index: 0, kind: input, shape index: {}]
  %s1 = inlined_call_operand.vmem [shape: bf16[36,32], index: 1, kind: input, shape index: {}]
  %s2 = inlined_call_operand.vmem [shape: f32[1,32], index: 2, kind: input, shape index: {}]
  %s3 = inlined_call_operand.vmem [shape: f32[128,32], index: 3, kind: output, shape index: {}]
  %s4 = sld [smem:[#allocation0]]
  $region22: #{spatial_transformer_forward.9} parent=0
    _
  %s6 = ssub.s32 1, %s4
  %s7 = scalar_select 0, %s6, %s4
  // Predicated region
  $region2: #{spatial_transformer_forward.9} parent=0 // pred_check
    _
  $region3: #{spatial_transformer_forward.9} parent=0 // pred_check_branch
    %9 = sbr.rel (0) target = $region5
  $region4: #{spatial_transformer_forward.9} parent=0 // pred_region
    _
  $region5: #{spatial_transformer_forward.9} parent=0 // pred_fallthru
    _
  // Predicated region
  $region6: #{spatial_transformer_forward.9} parent=0 // pred_check
    _
  $region7: #{spatial_transformer_forward.9} parent=0 // pred_check_branch
    %11 = sbr.rel (0) target = $region9
  $region8: #{spatial_transformer_forward.9} parent=0 // pred_region
    _
  $region9: #{spatial_transformer_forward.9} parent=0 // pred_fallthru
    _
  // Predicated region
  $region10: #{spatial_transformer_forward.9} parent=0 // pred_check
    _
  $region11: #{spatial_transformer_forward.9} parent=0 // pred_check_branch
    %13 = sbr.rel (0) target = $region13
  $region12: #{spatial_transformer_forward.9} parent=0 // pred_region
    _
  $region13: #{spatial_transformer_forward.9} parent=0 // pred_fallthru
    _
  %v15 = vld [vmem:[%s0] sm:$0xff]
  %v16 = vld [vmem:[%s0 + $0x8] sm:$0xff]
  %v17 = vld [vmem:[%s0 + $0x10] sm:$0xff]
  %v18 = vld [vmem:[%s0 + $0x18] sm:$0xff]
  %v19 = vld [vmem:[%s0 + $0x20] sm:$0xff]
  %v20 = vld [vmem:[%s0 + $0x28] sm:$0xff]
  %v21 = vld [vmem:[%s0 + $0x30] sm:$0xff]
  %v22 = vld [vmem:[%s0 + $0x38] sm:$0xff]
  %v23 = vld [vmem:[%s0 + $0x40] sm:$0xff]
  %v24 = vld [vmem:[%s0 + $0x48] sm:$0xff]
  %v25 = vld [vmem:[%s0 + $0x50] sm:$0xff]
  %v26 = vld [vmem:[%s0 + $0x58] sm:$0xff]
  %v27 = vld [vmem:[%s0 + $0x60] sm:$0xff]
  %v28 = vld [vmem:[%s0 + $0x68] sm:$0xff]
  %v29 = vld [vmem:[%s0 + $0x70] sm:$0xff]
  %v30 = vld [vmem:[%s0 + $0x78] sm:$0xff]
  %v31 = vpack.c.bf16 %v16, %v15
  %v32 = vpack.c.bf16 %v18, %v17
  %v33 = vpack.c.bf16 %v20, %v19
  %v34 = vpack.c.bf16 %v22, %v21
  %v35 = vpack.c.bf16 %v24, %v23
  %v36 = vpack.c.bf16 %v26, %v25
  %v37 = vpack.c.bf16 %v28, %v27
  %v38 = vpack.c.bf16 %v30, %v29
  %v39 = vld [vmem:[%s1] sm:$0xf]
  %v40 = vld [vmem:[%s1 + $0x4] sm:$0xf]
  %v41 = vld [vmem:[%s1 + $0x8] sm:$0xf]
  %v42 = vld [vmem:[%s1 + $0xc] sm:$0xf]
  %v43 = vld [vmem:[%s1 + $0x10] sm:$0x3]
  %v44 = vld [vmem:[%s2] sm:$0x1]
  %v46 = vlaneseq
  %v47 = vshrl.u32 %v46, 7
  %v48 = vsub.s32 0, %v47
  %v49 = vrot.slane %v44, %v48
  %v56 = vunpack.c.l.b16 %v39
  %v57 = vunpack.c.l.b16 %v40
  %v58 = vunpack.c.l.b16 %v41
  %v59 = vunpack.c.l.b16 %v42
  %v60 = vunpack.c.l.b16 %v43
  %v61 = vpack.c.b16 %v57, %v56
  %v62 = vpack.c.b16 %v59, %v58
  %v63 = vpack.c.b16 %v60, %v60
  %vm66 = vcmask 293888
  %v68 = vsel %vm66, %v31, 0
  %v71 = vsel %vm66, %v32, 0
  %v74 = vsel %vm66, %v33, 0
  %v77 = vsel %vm66, %v34, 0
  %v80 = vsel %vm66, %v35, 0
  %v83 = vsel %vm66, %v36, 0
  %v86 = vsel %vm66, %v37, 0
  %v89 = vsel %vm66, %v38, 0
  %vm91 = vcmask 1041408
  %v93 = vsel %vm91, %v63, 0
  %95 = vmatprep.subr.bf16.mxu0 0
  %96 = vmatpush1.bf16.msra.mxu0 %v61
  %97 = vmatprep.subr.bf16.mxu0 0
  %98 = vmatpush1.bf16.msra.mxu0 %v62
  %99 = vmatprep.subr.bf16.mxu0 0
  %100 = vmatpush1.bf16.msra.mxu0 %v93
  %101 = vmatprep.subr.bf16.mxu0 0
  %102 = vmatpush1.bf16.msra.mxu0 0
  %103 = vmatprep.subr.bf16.mxu0 0
  %104 = vmatpush1.bf16.msra.mxu0 0
  %105 = vmatprep.subr.bf16.mxu0 0
  %106 = vmatpush1.bf16.msra.mxu0 0
  %107 = vmatprep.subr.bf16.mxu0 0
  %108 = vmatpush1.bf16.msra.mxu0 0
  %109 = vmatprep.subr.bf16.mxu0 0
  %110 = vmatpush1.bf16.msra.mxu0 0
  %111 = vmatprep.subr.bf16.mxu0 0
  %112 = vmatpush1.bf16.msra.mxu0 0
  %113 = vmatprep.subr.bf16.mxu0 0
  %114 = vmatpush1.bf16.msra.mxu0 0
  %115 = vmatprep.subr.bf16.mxu0 0
  %116 = vmatpush1.bf16.msra.mxu0 0
  %117 = vmatprep.subr.bf16.mxu0 0
  %118 = vmatpush1.bf16.msra.mxu0 0
  %119 = vmatprep.subr.bf16.mxu0 0
  %120 = vmatpush1.bf16.msra.mxu0 0
  %121 = vmatprep.subr.bf16.mxu0 0
  %122 = vmatpush1.bf16.msra.mxu0 0
  %123 = vmatprep.subr.bf16.mxu0 0
  %124 = vmatpush1.bf16.msra.mxu0 0
  %125 = vmatprep.subr.bf16.mxu0 0
  %126 = vmatpush1.bf16.msra.mxu0 0
  %127 = vmatprep.mubr.bf16.mxu0 0
  %128 = vmatmul.mubr.bf16.gmra.mrb[0].mxu0 %v68
  %v129 = vpop.f32.mrb[0].mxu0
  %v130 = vadd.f32 %v49, %v129
  %v131 = vpop.f32.mrb[0].mxu0
  %v132 = vpop.f32.mrb[0].mxu0
  %v133 = vadd.f32 %v49, %v132
  %v134 = vpop.f32.mrb[0].mxu0
  %135 = vmatprep.mubr.bf16.mxu0 0
  %136 = vmatmul.mubr.bf16.gmra.mrb[0].mxu0 %v71
  %v137 = vpop.f32.mrb[0].mxu0
  %v138 = vadd.f32 %v49, %v137
  %v139 = vpop.f32.mrb[0].mxu0
  %v140 = vpop.f32.mrb[0].mxu0
  %v141 = vadd.f32 %v49, %v140
  %v142 = vpop.f32.mrb[0].mxu0
  %143 = vmatprep.mubr.bf16.mxu0 0
  %144 = vmatmul.mubr.bf16.gmra.mrb[0].mxu0 %v74
  %v145 = vpop.f32.mrb[0].mxu0
  %v146 = vadd.f32 %v49, %v145
  %v147 = vpop.f32.mrb[0].mxu0
  %v148 = vpop.f32.mrb[0].mxu0
  %v149 = vadd.f32 %v49, %v148
  %v150 = vpop.f32.mrb[0].mxu0
  %151 = vmatprep.mubr.bf16.mxu0 0
  %152 = vmatmul.mubr.bf16.gmra.mrb[0].mxu0 %v77
  %v153 = vpop.f32.mrb[0].mxu0
  %v154 = vadd.f32 %v49, %v153
  %v155 = vpop.f32.mrb[0].mxu0
  %v156 = vpop.f32.mrb[0].mxu0
  %v157 = vadd.f32 %v49, %v156
  %v158 = vpop.f32.mrb[0].mxu0
  %159 = vmatprep.mubr.bf16.mxu0 0
  %160 = vmatmul.mubr.bf16.gmra.mrb[0].mxu0 %v80
  %v161 = vpop.f32.mrb[0].mxu0
  %v162 = vadd.f32 %v49, %v161
  %v163 = vpop.f32.mrb[0].mxu0
  %v164 = vpop.f32.mrb[0].mxu0
  %v165 = vadd.f32 %v49, %v164
  %v166 = vpop.f32.mrb[0].mxu0
  %167 = vmatprep.mubr.bf16.mxu0 0
  %168 = vmatmul.mubr.bf16.gmra.mrb[0].mxu0 %v83
  %v169 = vpop.f32.mrb[0].mxu0
  %v170 = vadd.f32 %v49, %v169
  %v171 = vpop.f32.mrb[0].mxu0
  %v172 = vpop.f32.mrb[0].mxu0
  %v173 = vadd.f32 %v49, %v172
  %v174 = vpop.f32.mrb[0].mxu0
  %175 = vmatprep.mubr.bf16.mxu0 0
  %176 = vmatmul.mubr.bf16.gmra.mrb[0].mxu0 %v86
  %v177 = vpop.f32.mrb[0].mxu0
  %v178 = vadd.f32 %v49, %v177
  %v179 = vpop.f32.mrb[0].mxu0
  %v180 = vpop.f32.mrb[0].mxu0
  %v181 = vadd.f32 %v49, %v180
  %v182 = vpop.f32.mrb[0].mxu0
  %183 = vmatprep.mubr.bf16.mxu0 0
  %184 = vmatmul.mubr.bf16.gmra.mrb[0].mxu0 %v89
  %v185 = vpop.f32.mrb[0].mxu0
  %v186 = vadd.f32 %v49, %v185
  %v187 = vpop.f32.mrb[0].mxu0
  %v188 = vpop.f32.mrb[0].mxu0
  %v189 = vadd.f32 %v49, %v188
  %v190 = vpop.f32.mrb[0].mxu0
  %191 = vdwg.mxu0
  %vm192 = vcmask 261120
  %193 = vst.msk [vmem:[%s3] sm:$0xff] %vm192, %v130
  %194 = vst.msk [vmem:[%s3 + $0x8] sm:$0xff] %vm192, %v133
  %195 = vst.msk [vmem:[%s3 + $0x10] sm:$0xff] %vm192, %v138
  %196 = vst.msk [vmem:[%s3 + $0x18] sm:$0xff] %vm192, %v141
  %197 = vst.msk [vmem:[%s3 + $0x20] sm:$0xff] %vm192, %v146
  %198 = vst.msk [vmem:[%s3 + $0x28] sm:$0xff] %vm192, %v149
  %199 = vst.msk [vmem:[%s3 + $0x30] sm:$0xff] %vm192, %v154
  %200 = vst.msk [vmem:[%s3 + $0x38] sm:$0xff] %vm192, %v157
  %201 = vst.msk [vmem:[%s3 + $0x40] sm:$0xff] %vm192, %v162
  %202 = vst.msk [vmem:[%s3 + $0x48] sm:$0xff] %vm192, %v165
  %203 = vst.msk [vmem:[%s3 + $0x50] sm:$0xff] %vm192, %v170
  %204 = vst.msk [vmem:[%s3 + $0x58] sm:$0xff] %vm192, %v173
  %205 = vst.msk [vmem:[%s3 + $0x60] sm:$0xff] %vm192, %v178
  %206 = vst.msk [vmem:[%s3 + $0x68] sm:$0xff] %vm192, %v181
  %207 = vst.msk [vmem:[%s3 + $0x70] sm:$0xff] %vm192, %v186
  %208 = vst.msk [vmem:[%s3 + $0x78] sm:$0xff] %vm192, %v189
  // Predicated region
  $region14: #{spatial_transformer_forward.9} parent=0 // pred_check
    _
  $region15: #{spatial_transformer_forward.9} parent=0 // pred_check_branch
    %210 = sbr.rel (0) target = $region17
  $region16: #{spatial_transformer_forward.9} parent=0 // pred_region
    _
  $region17: #{spatial_transformer_forward.9} parent=0 // pred_fallthru
    _
  // Predicated region
  $region18: #{spatial_transformer_forward.9} parent=0 // pred_check
    _
  $region19: #{spatial_transformer_forward.9} parent=0 // pred_check_branch
    %212 = sbr.rel (0) target = $region21
  $region20: #{spatial_transformer_forward.9} parent=0 // pred_region
    _
  $region21: #{spatial_transformer_forward.9} parent=0 // pred_fallthru
    _

// kernel: spatial_transformer_forward.10
$region0: #{spatial_transformer_forward.10}
  #allocation0 [shape = 'u32[]', space=smem, size = 0x4, offset = 0x4, fixed_abs, tag = 'smem constant byte address 0x4 - core index']
  #allocation1 [shape = 'u32[144,128]{1,0:T(1,128)}', space=vmem, size = 0x12000, scoped, tag = 'internal scratch']
  %s0 = inlined_call_operand.vmem [shape: f32[128,32], index: 0, kind: input, shape index: {}]
  %s1 = inlined_call_operand.vmem [shape: bf16[32,96], index: 1, kind: input, shape index: {}]
  %s2 = inlined_call_operand.vmem [shape: f32[1,96], index: 2, kind: input, shape index: {}]
  %s3 = inlined_call_operand.vmem [shape: bf16[128,96], index: 3, kind: output, shape index: {}]
  %s4 = sld [smem:[#allocation0]]
  $region22: #{spatial_transformer_forward.10} parent=0
    _
  %s6 = ssub.s32 1, %s4
  %s7 = scalar_select 0, %s6, %s4
  // Predicated region
  $region2: #{spatial_transformer_forward.10} parent=0 // pred_check
    _
  $region3: #{spatial_transformer_forward.10} parent=0 // pred_check_branch
    %9 = sbr.rel (0) target = $region5
  $region4: #{spatial_transformer_forward.10} parent=0 // pred_region
    _
  $region5: #{spatial_transformer_forward.10} parent=0 // pred_fallthru
    _
  // Predicated region
  $region6: #{spatial_transformer_forward.10} parent=0 // pred_check
    _
  $region7: #{spatial_transformer_forward.10} parent=0 // pred_check_branch
    %11 = sbr.rel (0) target = $region9
  $region8: #{spatial_transformer_forward.10} parent=0 // pred_region
    _
  $region9: #{spatial_transformer_forward.10} parent=0 // pred_fallthru
    _
  // Predicated region
  $region10: #{spatial_transformer_forward.10} parent=0 // pred_check
    _
  $region11: #{spatial_transformer_forward.10} parent=0 // pred_check_branch
    %13 = sbr.rel (0) target = $region13
  $region12: #{spatial_transformer_forward.10} parent=0 // pred_region
    _
  $region13: #{spatial_transformer_forward.10} parent=0 // pred_fallthru
    _
  %v15 = vld [vmem:[%s0] sm:$0xff]
  %v16 = vld [vmem:[%s0 + $0x8] sm:$0xff]
  %v17 = vld [vmem:[%s0 + $0x10] sm:$0xff]
  %v18 = vld [vmem:[%s0 + $0x18] sm:$0xff]
  %v19 = vld [vmem:[%s0 + $0x20] sm:$0xff]
  %v20 = vld [vmem:[%s0 + $0x28] sm:$0xff]
  %v21 = vld [vmem:[%s0 + $0x30] sm:$0xff]
  %v22 = vld [vmem:[%s0 + $0x38] sm:$0xff]
  %v23 = vld [vmem:[%s0 + $0x40] sm:$0xff]
  %v24 = vld [vmem:[%s0 + $0x48] sm:$0xff]
  %v25 = vld [vmem:[%s0 + $0x50] sm:$0xff]
  %v26 = vld [vmem:[%s0 + $0x58] sm:$0xff]
  %v27 = vld [vmem:[%s0 + $0x60] sm:$0xff]
  %v28 = vld [vmem:[%s0 + $0x68] sm:$0xff]
  %v29 = vld [vmem:[%s0 + $0x70] sm:$0xff]
  %v30 = vld [vmem:[%s0 + $0x78] sm:$0xff]
  %v31 = vpack.c.bf16 %v16, %v15
  %v32 = vpack.c.bf16 %v18, %v17
  %v33 = vpack.c.bf16 %v20, %v19
  %v34 = vpack.c.bf16 %v22, %v21
  %v35 = vpack.c.bf16 %v24, %v23
  %v36 = vpack.c.bf16 %v26, %v25
  %v37 = vpack.c.bf16 %v28, %v27
  %v38 = vpack.c.bf16 %v30, %v29
  %v39 = vld [vmem:[%s1] sm:$0xf]
  %v40 = vld [vmem:[%s1 + $0x4] sm:$0xf]
  %v41 = vld [vmem:[%s1 + $0x8] sm:$0xf]
  %v42 = vld [vmem:[%s1 + $0xc] sm:$0xf]
  %v43 = vld [vmem:[%s2] sm:$0x1]
  %v45 = vlaneseq
  %v46 = vshrl.u32 %v45, 7
  %v47 = vsub.s32 0, %v46
  %v48 = vrot.slane %v43, %v47
  %v54 = vunpack.c.l.b16 %v39
  %v55 = vunpack.c.l.b16 %v40
  %v56 = vunpack.c.l.b16 %v41
  %v57 = vunpack.c.l.b16 %v42
  %v58 = vpack.c.b16 %v55, %v54
  %v59 = vpack.c.b16 %v57, %v56
  %vm62 = vcmask 261120
  %v64 = vsel %vm62, %v31, 0
  %v67 = vsel %vm62, %v32, 0
  %v70 = vsel %vm62, %v33, 0
  %v73 = vsel %vm62, %v34, 0
  %v76 = vsel %vm62, %v35, 0
  %v79 = vsel %vm62, %v36, 0
  %v82 = vsel %vm62, %v37, 0
  %v85 = vsel %vm62, %v38, 0
  %87 = vmatprep.subr.bf16.mxu0 0
  %88 = vmatpush1.bf16.msra.mxu0 %v58
  %89 = vmatprep.subr.bf16.mxu0 0
  %90 = vmatpush1.bf16.msra.mxu0 %v59
  %91 = vmatprep.subr.bf16.mxu0 0
  %92 = vmatpush1.bf16.msra.mxu0 0
  %93 = vmatprep.subr.bf16.mxu0 0
  %94 = vmatpush1.bf16.msra.mxu0 0
  %95 = vmatprep.subr.bf16.mxu0 0
  %96 = vmatpush1.bf16.msra.mxu0 0
  %97 = vmatprep.subr.bf16.mxu0 0
  %98 = vmatpush1.bf16.msra.mxu0 0
  %99 = vmatprep.subr.bf16.mxu0 0
  %100 = vmatpush1.bf16.msra.mxu0 0
  %101 = vmatprep.subr.bf16.mxu0 0
  %102 = vmatpush1.bf16.msra.mxu0 0
  %103 = vmatprep.subr.bf16.mxu0 0
  %104 = vmatpush1.bf16.msra.mxu0 0
  %105 = vmatprep.subr.bf16.mxu0 0
  %106 = vmatpush1.bf16.msra.mxu0 0
  %107 = vmatprep.subr.bf16.mxu0 0
  %108 = vmatpush1.bf16.msra.mxu0 0
  %109 = vmatprep.subr.bf16.mxu0 0
  %110 = vmatpush1.bf16.msra.mxu0 0
  %111 = vmatprep.subr.bf16.mxu0 0
  %112 = vmatpush1.bf16.msra.mxu0 0
  %113 = vmatprep.subr.bf16.mxu0 0
  %114 = vmatpush1.bf16.msra.mxu0 0
  %115 = vmatprep.subr.bf16.mxu0 0
  %116 = vmatpush1.bf16.msra.mxu0 0
  %117 = vmatprep.subr.bf16.mxu0 0
  %118 = vmatpush1.bf16.msra.mxu0 0
  %119 = vmatprep.mubr.bf16.mxu0 0
  %120 = vmatmul.mubr.bf16.gmra.mrb[0].mxu0 %v64
  %v121 = vpop.f32.mrb[0].mxu0
  %v122 = vadd.f32 %v48, %v121
  %v123 = vpop.f32.mrb[0].mxu0
  %v124 = vpop.f32.mrb[0].mxu0
  %v125 = vadd.f32 %v48, %v124
  %v126 = vpop.f32.mrb[0].mxu0
  %127 = vmatprep.mubr.bf16.mxu0 0
  %128 = vmatmul.mubr.bf16.gmra.mrb[0].mxu0 %v67
  %v129 = vpop.f32.mrb[0].mxu0
  %v130 = vadd.f32 %v48, %v129
  %v131 = vpop.f32.mrb[0].mxu0
  %v132 = vpop.f32.mrb[0].mxu0
  %v133 = vadd.f32 %v48, %v132
  %v134 = vpop.f32.mrb[0].mxu0
  %135 = vmatprep.mubr.bf16.mxu0 0
  %136 = vmatmul.mubr.bf16.gmra.mrb[0].mxu0 %v70
  %v137 = vpop.f32.mrb[0].mxu0
  %v138 = vadd.f32 %v48, %v137
  %v139 = vpop.f32.mrb[0].mxu0
  %v140 = vpop.f32.mrb[0].mxu0
  %v141 = vadd.f32 %v48, %v140
  %v142 = vpop.f32.mrb[0].mxu0
  %143 = vmatprep.mubr.bf16.mxu0 0
  %144 = vmatmul.mubr.bf16.gmra.mrb[0].mxu0 %v73
  %v145 = vpop.f32.mrb[0].mxu0
  %v146 = vadd.f32 %v48, %v145
  %v147 = vpop.f32.mrb[0].mxu0
  %v148 = vpop.f32.mrb[0].mxu0
  %v149 = vadd.f32 %v48, %v148
  %v150 = vpop.f32.mrb[0].mxu0
  %151 = vmatprep.mubr.bf16.mxu0 0
  %152 = vmatmul.mubr.bf16.gmra.mrb[0].mxu0 %v76
  %v153 = vpop.f32.mrb[0].mxu0
  %v154 = vadd.f32 %v48, %v153
  %v155 = vpop.f32.mrb[0].mxu0
  %v156 = vpop.f32.mrb[0].mxu0
  %v157 = vadd.f32 %v48, %v156
  %v158 = vpop.f32.mrb[0].mxu0
  %159 = vmatprep.mubr.bf16.mxu0 0
  %160 = vmatmul.mubr.bf16.gmra.mrb[0].mxu0 %v79
  %v161 = vpop.f32.mrb[0].mxu0
  %v162 = vadd.f32 %v48, %v161
  %v163 = vpop.f32.mrb[0].mxu0
  %v164 = vpop.f32.mrb[0].mxu0
  %v165 = vadd.f32 %v48, %v164
  %v166 = vpop.f32.mrb[0].mxu0
  %167 = vmatprep.mubr.bf16.mxu0 0
  %168 = vmatmul.mubr.bf16.gmra.mrb[0].mxu0 %v82
  %v169 = vpop.f32.mrb[0].mxu0
  %v170 = vadd.f32 %v48, %v169
  %v171 = vpop.f32.mrb[0].mxu0
  %v172 = vpop.f32.mrb[0].mxu0
  %v173 = vadd.f32 %v48, %v172
  %v174 = vpop.f32.mrb[0].mxu0
  %175 = vmatprep.mubr.bf16.mxu0 0
  %176 = vmatmul.mubr.bf16.gmra.mrb[0].mxu0 %v85
  %v177 = vpop.f32.mrb[0].mxu0
  %v178 = vadd.f32 %v48, %v177
  %v179 = vpop.f32.mrb[0].mxu0
  %v180 = vpop.f32.mrb[0].mxu0
  %v181 = vadd.f32 %v48, %v180
  %v182 = vpop.f32.mrb[0].mxu0
  %183 = vdwg.mxu0
  %v184 = vpack.c.bf16 %v125, %v122
  %v185 = vpack.c.bf16 %v133, %v130
  %v186 = vpack.c.bf16 %v141, %v138
  %v187 = vpack.c.bf16 %v149, %v146
  %v188 = vpack.c.bf16 %v157, %v154
  %v189 = vpack.c.bf16 %v165, %v162
  %v190 = vpack.c.bf16 %v173, %v170
  %v191 = vpack.c.bf16 %v181, %v178
  %v200 = vunpack.c.l.b16 %v184
  %v201 = vunpack.c.h.b16 %v184
  %v202 = vunpack.c.l.b16 %v185
  %v203 = vunpack.c.h.b16 %v185
  %v204 = vunpack.c.l.b16 %v186
  %v205 = vunpack.c.h.b16 %v186
  %v206 = vunpack.c.l.b16 %v187
  %v207 = vunpack.c.h.b16 %v187
  %v208 = vunpack.c.l.b16 %v188
  %v209 = vunpack.c.h.b16 %v188
  %v210 = vunpack.c.l.b16 %v189
  %v211 = vunpack.c.h.b16 %v189
  %v212 = vunpack.c.l.b16 %v190
  %v213 = vunpack.c.h.b16 %v190
  %v214 = vunpack.c.l.b16 %v191
  %v215 = vunpack.c.h.b16 %v191
  %v216 = vpack.c.b16 %v200, %v200
  %v217 = vpack.c.b16 %v201, %v201
  %v218 = vpack.c.b16 %v202, %v202
  %v219 = vpack.c.b16 %v203, %v203
  %v220 = vpack.c.b16 %v204, %v204
  %v221 = vpack.c.b16 %v205, %v205
  %v222 = vpack.c.b16 %v206, %v206
  %v223 = vpack.c.b16 %v207, %v207
  %v224 = vpack.c.b16 %v208, %v208
  %v225 = vpack.c.b16 %v209, %v209
  %v226 = vpack.c.b16 %v210, %v210
  %v227 = vpack.c.b16 %v211, %v211
  %v228 = vpack.c.b16 %v212, %v212
  %v229 = vpack.c.b16 %v213, %v213
  %v230 = vpack.c.b16 %v214, %v214
  %v231 = vpack.c.b16 %v215, %v215
  %vm248 = vcmask 781312
  %249 = vst.msk [vmem:[%s3] sm:$0xf] %vm248, %v216
  %250 = vst.msk [vmem:[%s3 + $0x4] sm:$0xf] %vm248, %v217
  %251 = vst.msk [vmem:[%s3 + $0x8] sm:$0xf] %vm248, %v218
  %252 = vst.msk [vmem:[%s3 + $0xc] sm:$0xf] %vm248, %v219
  %253 = vst.msk [vmem:[%s3 + $0x10] sm:$0xf] %vm248, %v220
  %254 = vst.msk [vmem:[%s3 + $0x14] sm:$0xf] %vm248, %v221
  %255 = vst.msk [vmem:[%s3 + $0x18] sm:$0xf] %vm248, %v222
  %256 = vst.msk [vmem:[%s3 + $0x1c] sm:$0xf] %vm248, %v223
  %257 = vst.msk [vmem:[%s3 + $0x20] sm:$0xf] %vm248, %v224
  %258 = vst.msk [vmem:[%s3 + $0x24] sm:$0xf] %vm248, %v225
  %259 = vst.msk [vmem:[%s3 + $0x28] sm:$0xf] %vm248, %v226
  %260 = vst.msk [vmem:[%s3 + $0x2c] sm:$0xf] %vm248, %v227
  %261 = vst.msk [vmem:[%s3 + $0x30] sm:$0xf] %vm248, %v228
  %262 = vst.msk [vmem:[%s3 + $0x34] sm:$0xf] %vm248, %v229
  %263 = vst.msk [vmem:[%s3 + $0x38] sm:$0xf] %vm248, %v230
  %264 = vst.msk [vmem:[%s3 + $0x3c] sm:$0xf] %vm248, %v231
  // Predicated region
  $region14: #{spatial_transformer_forward.10} parent=0 // pred_check
    _
  $region15: #{spatial_transformer_forward.10} parent=0 // pred_check_branch
    %266 = sbr.rel (0) target = $region17
  $region16: #{spatial_transformer_forward.10} parent=0 // pred_region
    _
  $region17: #{spatial_transformer_forward.10} parent=0 // pred_fallthru
    _
  // Predicated region
  $region18: #{spatial_transformer_forward.10} parent=0 // pred_check
    _
  $region19: #{spatial_transformer_forward.10} parent=0 // pred_check_branch
    %268 = sbr.rel (0) target = $region21
  $region20: #{spatial_transformer_forward.10} parent=0 // pred_region
    _
  $region21: #{spatial_transformer_forward.10} parent=0 // pred_fallthru
    _

// kernel: spatial_transformer_forward.16
$region0: #{spatial_transformer_forward.16}
  #allocation0 [shape = 'u32[]', space=smem, size = 0x4, offset = 0x4, fixed_abs, tag = 'smem constant byte address 0x4 - core index']
  #allocation1 [shape = 'u32[144,128]{1,0:T(1,128)}', space=vmem, size = 0x12000, scoped, tag = 'internal scratch']
  %s0 = inlined_call_operand.vmem [shape: f32[128,32], index: 0, kind: input, shape index: {}]
  %s1 = inlined_call_operand.vmem [shape: bf16[32,4], index: 1, kind: input, shape index: {}]
  %s2 = inlined_call_operand.vmem [shape: f32[1,4], index: 2, kind: input, shape index: {}]
  %s3 = inlined_call_operand.vmem [shape: bf16[128,4], index: 3, kind: output, shape index: {}]
  %s4 = sld [smem:[#allocation0]]
  $region22: #{spatial_transformer_forward.16} parent=0
    _
  %s6 = ssub.s32 1, %s4
  %s7 = scalar_select 0, %s6, %s4
  // Predicated region
  $region2: #{spatial_transformer_forward.16} parent=0 // pred_check
    _
  $region3: #{spatial_transformer_forward.16} parent=0 // pred_check_branch
    %9 = sbr.rel (0) target = $region5
  $region4: #{spatial_transformer_forward.16} parent=0 // pred_region
    _
  $region5: #{spatial_transformer_forward.16} parent=0 // pred_fallthru
    _
  // Predicated region
  $region6: #{spatial_transformer_forward.16} parent=0 // pred_check
    _
  $region7: #{spatial_transformer_forward.16} parent=0 // pred_check_branch
    %11 = sbr.rel (0) target = $region9
  $region8: #{spatial_transformer_forward.16} parent=0 // pred_region
    _
  $region9: #{spatial_transformer_forward.16} parent=0 // pred_fallthru
    _
  // Predicated region
  $region10: #{spatial_transformer_forward.16} parent=0 // pred_check
    _
  $region11: #{spatial_transformer_forward.16} parent=0 // pred_check_branch
    %13 = sbr.rel (0) target = $region13
  $region12: #{spatial_transformer_forward.16} parent=0 // pred_region
    _
  $region13: #{spatial_transformer_forward.16} parent=0 // pred_fallthru
    _
  %v15 = vld [vmem:[%s0] sm:$0xff]
  %v16 = vld [vmem:[%s0 + $0x8] sm:$0xff]
  %v17 = vld [vmem:[%s0 + $0x10] sm:$0xff]
  %v18 = vld [vmem:[%s0 + $0x18] sm:$0xff]
  %v19 = vld [vmem:[%s0 + $0x20] sm:$0xff]
  %v20 = vld [vmem:[%s0 + $0x28] sm:$0xff]
  %v21 = vld [vmem:[%s0 + $0x30] sm:$0xff]
  %v22 = vld [vmem:[%s0 + $0x38] sm:$0xff]
  %v23 = vld [vmem:[%s0 + $0x40] sm:$0xff]
  %v24 = vld [vmem:[%s0 + $0x48] sm:$0xff]
  %v25 = vld [vmem:[%s0 + $0x50] sm:$0xff]
  %v26 = vld [vmem:[%s0 + $0x58] sm:$0xff]
  %v27 = vld [vmem:[%s0 + $0x60] sm:$0xff]
  %v28 = vld [vmem:[%s0 + $0x68] sm:$0xff]
  %v29 = vld [vmem:[%s0 + $0x70] sm:$0xff]
  %v30 = vld [vmem:[%s0 + $0x78] sm:$0xff]
  %v31 = vpack.c.bf16 %v16, %v15
  %v32 = vpack.c.bf16 %v18, %v17
  %v33 = vpack.c.bf16 %v20, %v19
  %v34 = vpack.c.bf16 %v22, %v21
  %v35 = vpack.c.bf16 %v24, %v23
  %v36 = vpack.c.bf16 %v26, %v25
  %v37 = vpack.c.bf16 %v28, %v27
  %v38 = vpack.c.bf16 %v30, %v29
  %v39 = vld [vmem:[%s1] sm:$0xf]
  %v40 = vld [vmem:[%s1 + $0x4] sm:$0xf]
  %v41 = vld [vmem:[%s1 + $0x8] sm:$0xf]
  %v42 = vld [vmem:[%s1 + $0xc] sm:$0xf]
  %v43 = vld [vmem:[%s2] sm:$0x1]
  %v45 = vlaneseq
  %v46 = vshrl.u32 %v45, 7
  %v47 = vsub.s32 0, %v46
  %v48 = vrot.slane %v43, %v47
  %v54 = vunpack.c.l.b16 %v39
  %v55 = vunpack.c.l.b16 %v40
  %v56 = vunpack.c.l.b16 %v41
  %v57 = vunpack.c.l.b16 %v42
  %v58 = vpack.c.b16 %v55, %v54
  %v59 = vpack.c.b16 %v57, %v56
  %vm62 = vcmask 261120
  %v64 = vsel %vm62, %v31, 0
  %v67 = vsel %vm62, %v32, 0
  %v70 = vsel %vm62, %v33, 0
  %v73 = vsel %vm62, %v34, 0
  %v76 = vsel %vm62, %v35, 0
  %v79 = vsel %vm62, %v36, 0
  %v82 = vsel %vm62, %v37, 0
  %v85 = vsel %vm62, %v38, 0
  %87 = vmatprep.subr.bf16.mxu0 0
  %88 = vmatpush1.bf16.msra.mxu0 %v58
  %89 = vmatprep.subr.bf16.mxu0 0
  %90 = vmatpush1.bf16.msra.mxu0 %v59
  %91 = vmatprep.subr.bf16.mxu0 0
  %92 = vmatpush1.bf16.msra.mxu0 0
  %93 = vmatprep.subr.bf16.mxu0 0
  %94 = vmatpush1.bf16.msra.mxu0 0
  %95 = vmatprep.subr.bf16.mxu0 0
  %96 = vmatpush1.bf16.msra.mxu0 0
  %97 = vmatprep.subr.bf16.mxu0 0
  %98 = vmatpush1.bf16.msra.mxu0 0
  %99 = vmatprep.subr.bf16.mxu0 0
  %100 = vmatpush1.bf16.msra.mxu0 0
  %101 = vmatprep.subr.bf16.mxu0 0
  %102 = vmatpush1.bf16.msra.mxu0 0
  %103 = vmatprep.subr.bf16.mxu0 0
  %104 = vmatpush1.bf16.msra.mxu0 0
  %105 = vmatprep.subr.bf16.mxu0 0
  %106 = vmatpush1.bf16.msra.mxu0 0
  %107 = vmatprep.subr.bf16.mxu0 0
  %108 = vmatpush1.bf16.msra.mxu0 0
  %109 = vmatprep.subr.bf16.mxu0 0
  %110 = vmatpush1.bf16.msra.mxu0 0
  %111 = vmatprep.subr.bf16.mxu0 0
  %112 = vmatpush1.bf16.msra.mxu0 0
  %113 = vmatprep.subr.bf16.mxu0 0
  %114 = vmatpush1.bf16.msra.mxu0 0
  %115 = vmatprep.subr.bf16.mxu0 0
  %116 = vmatpush1.bf16.msra.mxu0 0
  %117 = vmatprep.subr.bf16.mxu0 0
  %118 = vmatpush1.bf16.msra.mxu0 0
  %119 = vmatprep.mubr.bf16.mxu0 0
  %120 = vmatmul.mubr.bf16.gmra.mrb[0].mxu0 %v64
  %v121 = vpop.f32.mrb[0].mxu0
  %v122 = vadd.f32 %v48, %v121
  %v123 = vpop.f32.mrb[0].mxu0
  %v124 = vpop.f32.mrb[0].mxu0
  %v125 = vadd.f32 %v48, %v124
  %v126 = vpop.f32.mrb[0].mxu0
  %127 = vmatprep.mubr.bf16.mxu0 0
  %128 = vmatmul.mubr.bf16.gmra.mrb[0].mxu0 %v67
  %v129 = vpop.f32.mrb[0].mxu0
  %v130 = vadd.f32 %v48, %v129
  %v131 = vpop.f32.mrb[0].mxu0
  %v132 = vpop.f32.mrb[0].mxu0
  %v133 = vadd.f32 %v48, %v132
  %v134 = vpop.f32.mrb[0].mxu0
  %135 = vmatprep.mubr.bf16.mxu0 0
  %136 = vmatmul.mubr.bf16.gmra.mrb[0].mxu0 %v70
  %v137 = vpop.f32.mrb[0].mxu0
  %v138 = vadd.f32 %v48, %v137
  %v139 = vpop.f32.mrb[0].mxu0
  %v140 = vpop.f32.mrb[0].mxu0
  %v141 = vadd.f32 %v48, %v140
  %v142 = vpop.f32.mrb[0].mxu0
  %143 = vmatprep.mubr.bf16.mxu0 0
  %144 = vmatmul.mubr.bf16.gmra.mrb[0].mxu0 %v73
  %v145 = vpop.f32.mrb[0].mxu0
  %v146 = vadd.f32 %v48, %v145
  %v147 = vpop.f32.mrb[0].mxu0
  %v148 = vpop.f32.mrb[0].mxu0
  %v149 = vadd.f32 %v48, %v148
  %v150 = vpop.f32.mrb[0].mxu0
  %151 = vmatprep.mubr.bf16.mxu0 0
  %152 = vmatmul.mubr.bf16.gmra.mrb[0].mxu0 %v76
  %v153 = vpop.f32.mrb[0].mxu0
  %v154 = vadd.f32 %v48, %v153
  %v155 = vpop.f32.mrb[0].mxu0
  %v156 = vpop.f32.mrb[0].mxu0
  %v157 = vadd.f32 %v48, %v156
  %v158 = vpop.f32.mrb[0].mxu0
  %159 = vmatprep.mubr.bf16.mxu0 0
  %160 = vmatmul.mubr.bf16.gmra.mrb[0].mxu0 %v79
  %v161 = vpop.f32.mrb[0].mxu0
  %v162 = vadd.f32 %v48, %v161
  %v163 = vpop.f32.mrb[0].mxu0
  %v164 = vpop.f32.mrb[0].mxu0
  %v165 = vadd.f32 %v48, %v164
  %v166 = vpop.f32.mrb[0].mxu0
  %167 = vmatprep.mubr.bf16.mxu0 0
  %168 = vmatmul.mubr.bf16.gmra.mrb[0].mxu0 %v82
  %v169 = vpop.f32.mrb[0].mxu0
  %v170 = vadd.f32 %v48, %v169
  %v171 = vpop.f32.mrb[0].mxu0
  %v172 = vpop.f32.mrb[0].mxu0
  %v173 = vadd.f32 %v48, %v172
  %v174 = vpop.f32.mrb[0].mxu0
  %175 = vmatprep.mubr.bf16.mxu0 0
  %176 = vmatmul.mubr.bf16.gmra.mrb[0].mxu0 %v85
  %v177 = vpop.f32.mrb[0].mxu0
  %v178 = vadd.f32 %v48, %v177
  %v179 = vpop.f32.mrb[0].mxu0
  %v180 = vpop.f32.mrb[0].mxu0
  %v181 = vadd.f32 %v48, %v180
  %v182 = vpop.f32.mrb[0].mxu0
  %183 = vdwg.mxu0
  %v184 = vpack.c.bf16 %v125, %v122
  %v185 = vpack.c.bf16 %v133, %v130
  %v186 = vpack.c.bf16 %v141, %v138
  %v187 = vpack.c.bf16 %v149, %v146
  %v188 = vpack.c.bf16 %v157, %v154
  %v189 = vpack.c.bf16 %v165, %v162
  %v190 = vpack.c.bf16 %v173, %v170
  %v191 = vpack.c.bf16 %v181, %v178
  %v200 = vunpack.c.l.b16 %v184
  %v201 = vunpack.c.h.b16 %v184
  %v202 = vunpack.c.l.b16 %v185
  %v203 = vunpack.c.h.b16 %v185
  %v204 = vunpack.c.l.b16 %v186
  %v205 = vunpack.c.h.b16 %v186
  %v206 = vunpack.c.l.b16 %v187
  %v207 = vunpack.c.h.b16 %v187
  %v208 = vunpack.c.l.b16 %v188
  %v209 = vunpack.c.h.b16 %v188
  %v210 = vunpack.c.l.b16 %v189
  %v211 = vunpack.c.h.b16 %v189
  %v212 = vunpack.c.l.b16 %v190
  %v213 = vunpack.c.h.b16 %v190
  %v214 = vunpack.c.l.b16 %v191
  %v215 = vunpack.c.h.b16 %v191
  %v216 = vpack.c.b16 %v200, %v200
  %v217 = vpack.c.b16 %v201, %v201
  %v218 = vpack.c.b16 %v202, %v202
  %v219 = vpack.c.b16 %v203, %v203
  %v220 = vpack.c.b16 %v204, %v204
  %v221 = vpack.c.b16 %v205, %v205
  %v222 = vpack.c.b16 %v206, %v206
  %v223 = vpack.c.b16 %v207, %v207
  %v224 = vpack.c.b16 %v208, %v208
  %v225 = vpack.c.b16 %v209, %v209
  %v226 = vpack.c.b16 %v210, %v210
  %v227 = vpack.c.b16 %v211, %v211
  %v228 = vpack.c.b16 %v212, %v212
  %v229 = vpack.c.b16 %v213, %v213
  %v230 = vpack.c.b16 %v214, %v214
  %v231 = vpack.c.b16 %v215, %v215
  %vm248 = vcmask 27648
  %249 = vst.msk [vmem:[%s3] sm:$0xf] %vm248, %v216
  %250 = vst.msk [vmem:[%s3 + $0x4] sm:$0xf] %vm248, %v217
  %251 = vst.msk [vmem:[%s3 + $0x8] sm:$0xf] %vm248, %v218
  %252 = vst.msk [vmem:[%s3 + $0xc] sm:$0xf] %vm248, %v219
  %253 = vst.msk [vmem:[%s3 + $0x10] sm:$0xf] %vm248, %v220
  %254 = vst.msk [vmem:[%s3 + $0x14] sm:$0xf] %vm248, %v221
  %255 = vst.msk [vmem:[%s3 + $0x18] sm:$0xf] %vm248, %v222
  %256 = vst.msk [vmem:[%s3 + $0x1c] sm:$0xf] %vm248, %v223
  %257 = vst.msk [vmem:[%s3 + $0x20] sm:$0xf] %vm248, %v224
  %258 = vst.msk [vmem:[%s3 + $0x24] sm:$0xf] %vm248, %v225
  %259 = vst.msk [vmem:[%s3 + $0x28] sm:$0xf] %vm248, %v226
  %260 = vst.msk [vmem:[%s3 + $0x2c] sm:$0xf] %vm248, %v227
  %261 = vst.msk [vmem:[%s3 + $0x30] sm:$0xf] %vm248, %v228
  %262 = vst.msk [vmem:[%s3 + $0x34] sm:$0xf] %vm248, %v229
  %263 = vst.msk [vmem:[%s3 + $0x38] sm:$0xf] %vm248, %v230
  %264 = vst.msk [vmem:[%s3 + $0x3c] sm:$0xf] %vm248, %v231
  // Predicated region
  $region14: #{spatial_transformer_forward.16} parent=0 // pred_check
    _
  $region15: #{spatial_transformer_forward.16} parent=0 // pred_check_branch
    %266 = sbr.rel (0) target = $region17
  $region16: #{spatial_transformer_forward.16} parent=0 // pred_region
    _
  $region17: #{spatial_transformer_forward.16} parent=0 // pred_fallthru
    _
  // Predicated region
  $region18: #{spatial_transformer_forward.16} parent=0 // pred_check
    _
  $region19: #{spatial_transformer_forward.16} parent=0 // pred_check_branch
    %268 = sbr.rel (0) target = $region21
  $region20: #{spatial_transformer_forward.16} parent=0 // pred_region
    _
  $region21: #{spatial_transformer_forward.16} parent=0 // pred_fallthru
    _

// kernel: spatial_transformer_forward.12
$region0: #{spatial_transformer_forward.12}
  #allocation0 [shape = 'u32[]', space=smem, size = 0x4, offset = 0x4, fixed_abs, tag = 'smem constant byte address 0x4 - core index']
  #allocation1 [shape = 'u32[144,128]{1,0:T(1,128)}', space=vmem, size = 0x12000, scoped, tag = 'internal scratch']
  %s0 = inlined_call_operand.vmem [shape: f32[128,32], index: 0, kind: input, shape index: {}]
  %s1 = inlined_call_operand.vmem [shape: bf16[32,64], index: 1, kind: input, shape index: {}]
  %s2 = inlined_call_operand.vmem [shape: f32[1,64], index: 2, kind: input, shape index: {}]
  %s3 = inlined_call_operand.vmem [shape: bf16[64,32], index: 3, kind: input, shape index: {}]
  %s4 = inlined_call_operand.vmem [shape: f32[1,32], index: 4, kind: input, shape index: {}]
  %s5 = inlined_call_operand.vmem [shape: f32[1,32], index: 5, kind: input, shape index: {}]
  %s6 = inlined_call_operand.vmem [shape: f32[1,32], index: 6, kind: input, shape index: {}]
  %s7 = inlined_call_operand.vmem [shape: f32[128,32], index: 7, kind: output, shape index: {}]
  %s8 = sld [smem:[#allocation0]]
  $region38: #{spatial_transformer_forward.12} parent=0
    _
  %s10 = ssub.s32 1, %s8
  %s11 = scalar_select 0, %s10, %s8
  // Predicated region
  $region2: #{spatial_transformer_forward.12} parent=0 // pred_check
    _
  $region3: #{spatial_transformer_forward.12} parent=0 // pred_check_branch
    %13 = sbr.rel (0) target = $region5
  $region4: #{spatial_transformer_forward.12} parent=0 // pred_region
    _
  $region5: #{spatial_transformer_forward.12} parent=0 // pred_fallthru
    _
  // Predicated region
  $region6: #{spatial_transformer_forward.12} parent=0 // pred_check
    _
  $region7: #{spatial_transformer_forward.12} parent=0 // pred_check_branch
    %15 = sbr.rel (0) target = $region9
  $region8: #{spatial_transformer_forward.12} parent=0 // pred_region
    _
  $region9: #{spatial_transformer_forward.12} parent=0 // pred_fallthru
    _
  // Predicated region
  $region10: #{spatial_transformer_forward.12} parent=0 // pred_check
    _
  $region11: #{spatial_transformer_forward.12} parent=0 // pred_check_branch
    %17 = sbr.rel (0) target = $region13
  $region12: #{spatial_transformer_forward.12} parent=0 // pred_region
    _
  $region13: #{spatial_transformer_forward.12} parent=0 // pred_fallthru
    _
  // Predicated region
  $region14: #{spatial_transformer_forward.12} parent=0 // pred_check
    _
  $region15: #{spatial_transformer_forward.12} parent=0 // pred_check_branch
    %19 = sbr.rel (0) target = $region17
  $region16: #{spatial_transformer_forward.12} parent=0 // pred_region
    _
  $region17: #{spatial_transformer_forward.12} parent=0 // pred_fallthru
    _
  // Predicated region
  $region18: #{spatial_transformer_forward.12} parent=0 // pred_check
    _
  $region19: #{spatial_transformer_forward.12} parent=0 // pred_check_branch
    %21 = sbr.rel (0) target = $region21
  $region20: #{spatial_transformer_forward.12} parent=0 // pred_region
    _
  $region21: #{spatial_transformer_forward.12} parent=0 // pred_fallthru
    _
  // Predicated region
  $region22: #{spatial_transformer_forward.12} parent=0 // pred_check
    _
  $region23: #{spatial_transformer_forward.12} parent=0 // pred_check_branch
    %23 = sbr.rel (0) target = $region25
  $region24: #{spatial_transformer_forward.12} parent=0 // pred_region
    _
  $region25: #{spatial_transformer_forward.12} parent=0 // pred_fallthru
    _
  // Predicated region
  $region26: #{spatial_transformer_forward.12} parent=0 // pred_check
    _
  $region27: #{spatial_transformer_forward.12} parent=0 // pred_check_branch
    %25 = sbr.rel (0) target = $region29
  $region28: #{spatial_transformer_forward.12} parent=0 // pred_region
    _
  $region29: #{spatial_transformer_forward.12} parent=0 // pred_fallthru
    _
  %v27 = vld [vmem:[%s0] sm:$0xff]
  %v28 = vld [vmem:[%s0 + $0x8] sm:$0xff]
  %v29 = vld [vmem:[%s0 + $0x10] sm:$0xff]
  %v30 = vld [vmem:[%s0 + $0x18] sm:$0xff]
  %v31 = vld [vmem:[%s0 + $0x20] sm:$0xff]
  %v32 = vld [vmem:[%s0 + $0x28] sm:$0xff]
  %v33 = vld [vmem:[%s0 + $0x30] sm:$0xff]
  %v34 = vld [vmem:[%s0 + $0x38] sm:$0xff]
  %v35 = vld [vmem:[%s0 + $0x40] sm:$0xff]
  %v36 = vld [vmem:[%s0 + $0x48] sm:$0xff]
  %v37 = vld [vmem:[%s0 + $0x50] sm:$0xff]
  %v38 = vld [vmem:[%s0 + $0x58] sm:$0xff]
  %v39 = vld [vmem:[%s0 + $0x60] sm:$0xff]
  %v40 = vld [vmem:[%s0 + $0x68] sm:$0xff]
  %v41 = vld [vmem:[%s0 + $0x70] sm:$0xff]
  %v42 = vld [vmem:[%s0 + $0x78] sm:$0xff]
  %v43 = vpack.c.bf16 %v28, %v27
  %v44 = vpack.c.bf16 %v30, %v29
  %v45 = vpack.c.bf16 %v32, %v31
  %v46 = vpack.c.bf16 %v34, %v33
  %v47 = vpack.c.bf16 %v36, %v35
  %v48 = vpack.c.bf16 %v38, %v37
  %v49 = vpack.c.bf16 %v40, %v39
  %v50 = vpack.c.bf16 %v42, %v41
  %v51 = vld [vmem:[%s1] sm:$0xf]
  %v52 = vld [vmem:[%s1 + $0x4] sm:$0xf]
  %v53 = vld [vmem:[%s1 + $0x8] sm:$0xf]
  %v54 = vld [vmem:[%s1 + $0xc] sm:$0xf]
  %v55 = vld [vmem:[%s2] sm:$0x1]
  %v57 = vlaneseq
  %v58 = vshrl.u32 %v57, 7
  %v59 = vsub.s32 0, %v58
  %v60 = vrot.slane %v55, %v59
  %v66 = vunpack.c.l.b16 %v51
  %v67 = vunpack.c.l.b16 %v52
  %v68 = vunpack.c.l.b16 %v53
  %v69 = vunpack.c.l.b16 %v54
  %v70 = vpack.c.b16 %v67, %v66
  %v71 = vpack.c.b16 %v69, %v68
  %vm74 = vcmask 261120
  %v76 = vsel %vm74, %v43, 0
  %v79 = vsel %vm74, %v44, 0
  %v82 = vsel %vm74, %v45, 0
  %v85 = vsel %vm74, %v46, 0
  %v88 = vsel %vm74, %v47, 0
  %v91 = vsel %vm74, %v48, 0
  %v94 = vsel %vm74, %v49, 0
  %v97 = vsel %vm74, %v50, 0
  %99 = vmatprep.subr.bf16.mxu0 0
  %100 = vmatpush1.bf16.msra.mxu0 %v70
  %101 = vmatprep.subr.bf16.mxu0 0
  %102 = vmatpush1.bf16.msra.mxu0 %v71
  %103 = vmatprep.subr.bf16.mxu0 0
  %104 = vmatpush1.bf16.msra.mxu0 0
  %105 = vmatprep.subr.bf16.mxu0 0
  %106 = vmatpush1.bf16.msra.mxu0 0
  %107 = vmatprep.subr.bf16.mxu0 0
  %108 = vmatpush1.bf16.msra.mxu0 0
  %109 = vmatprep.subr.bf16.mxu0 0
  %110 = vmatpush1.bf16.msra.mxu0 0
  %111 = vmatprep.subr.bf16.mxu0 0
  %112 = vmatpush1.bf16.msra.mxu0 0
  %113 = vmatprep.subr.bf16.mxu0 0
  %114 = vmatpush1.bf16.msra.mxu0 0
  %115 = vmatprep.subr.bf16.mxu0 0
  %116 = vmatpush1.bf16.msra.mxu0 0
  %117 = vmatprep.subr.bf16.mxu0 0
  %118 = vmatpush1.bf16.msra.mxu0 0
  %119 = vmatprep.subr.bf16.mxu0 0
  %120 = vmatpush1.bf16.msra.mxu0 0
  %121 = vmatprep.subr.bf16.mxu0 0
  %122 = vmatpush1.bf16.msra.mxu0 0
  %123 = vmatprep.subr.bf16.mxu0 0
  %124 = vmatpush1.bf16.msra.mxu0 0
  %125 = vmatprep.subr.bf16.mxu0 0
  %126 = vmatpush1.bf16.msra.mxu0 0
  %127 = vmatprep.subr.bf16.mxu0 0
  %128 = vmatpush1.bf16.msra.mxu0 0
  %129 = vmatprep.subr.bf16.mxu0 0
  %130 = vmatpush1.bf16.msra.mxu0 0
  %131 = vmatprep.mubr.bf16.mxu0 0
  %132 = vmatmul.mubr.bf16.gmra.mrb[0].mxu0 %v76
  %v133 = vpop.f32.mrb[0].mxu0
  %v134 = vadd.f32 %v60, %v133
  %v135 = vpop.f32.mrb[0].mxu0
  %v136 = vpop.f32.mrb[0].mxu0
  %v137 = vadd.f32 %v60, %v136
  %v138 = vpop.f32.mrb[0].mxu0
  %139 = vmatprep.mubr.bf16.mxu0 0
  %140 = vmatmul.mubr.bf16.gmra.mrb[0].mxu0 %v79
  %v141 = vpop.f32.mrb[0].mxu0
  %v142 = vadd.f32 %v60, %v141
  %v143 = vpop.f32.mrb[0].mxu0
  %v144 = vpop.f32.mrb[0].mxu0
  %v145 = vadd.f32 %v60, %v144
  %v146 = vpop.f32.mrb[0].mxu0
  %147 = vmatprep.mubr.bf16.mxu0 0
  %148 = vmatmul.mubr.bf16.gmra.mrb[0].mxu0 %v82
  %v149 = vpop.f32.mrb[0].mxu0
  %v150 = vadd.f32 %v60, %v149
  %v151 = vpop.f32.mrb[0].mxu0
  %v152 = vpop.f32.mrb[0].mxu0
  %v153 = vadd.f32 %v60, %v152
  %v154 = vpop.f32.mrb[0].mxu0
  %155 = vmatprep.mubr.bf16.mxu0 0
  %156 = vmatmul.mubr.bf16.gmra.mrb[0].mxu0 %v85
  %v157 = vpop.f32.mrb[0].mxu0
  %v158 = vadd.f32 %v60, %v157
  %v159 = vpop.f32.mrb[0].mxu0
  %v160 = vpop.f32.mrb[0].mxu0
  %v161 = vadd.f32 %v60, %v160
  %v162 = vpop.f32.mrb[0].mxu0
  %163 = vmatprep.mubr.bf16.mxu0 0
  %164 = vmatmul.mubr.bf16.gmra.mrb[0].mxu0 %v88
  %v165 = vpop.f32.mrb[0].mxu0
  %v166 = vadd.f32 %v60, %v165
  %v167 = vpop.f32.mrb[0].mxu0
  %v168 = vpop.f32.mrb[0].mxu0
  %v169 = vadd.f32 %v60, %v168
  %v170 = vpop.f32.mrb[0].mxu0
  %171 = vmatprep.mubr.bf16.mxu0 0
  %172 = vmatmul.mubr.bf16.gmra.mrb[0].mxu0 %v91
  %v173 = vpop.f32.mrb[0].mxu0
  %v174 = vadd.f32 %v60, %v173
  %v175 = vpop.f32.mrb[0].mxu0
  %v176 = vpop.f32.mrb[0].mxu0
  %v177 = vadd.f32 %v60, %v176
  %v178 = vpop.f32.mrb[0].mxu0
  %179 = vmatprep.mubr.bf16.mxu0 0
  %180 = vmatmul.mubr.bf16.gmra.mrb[0].mxu0 %v94
  %v181 = vpop.f32.mrb[0].mxu0
  %v182 = vadd.f32 %v60, %v181
  %v183 = vpop.f32.mrb[0].mxu0
  %v184 = vpop.f32.mrb[0].mxu0
  %v185 = vadd.f32 %v60, %v184
  %v186 = vpop.f32.mrb[0].mxu0
  %187 = vmatprep.mubr.bf16.mxu0 0
  %188 = vmatmul.mubr.bf16.gmra.mrb[0].mxu0 %v97
  %v189 = vpop.f32.mrb[0].mxu0
  %v190 = vadd.f32 %v60, %v189
  %v191 = vpop.f32.mrb[0].mxu0
  %v192 = vpop.f32.mrb[0].mxu0
  %v193 = vadd.f32 %v60, %v192
  %v194 = vpop.f32.mrb[0].mxu0
  %195 = vdwg.mxu0
  %v196 = vmax.f32 %v134, 0.0
  %v197 = vmax.f32 %v137, 0.0
  %v198 = vmax.f32 %v142, 0.0
  %v199 = vmax.f32 %v145, 0.0
  %v200 = vmax.f32 %v150, 0.0
  %v201 = vmax.f32 %v153, 0.0
  %v202 = vmax.f32 %v158, 0.0
  %v203 = vmax.f32 %v161, 0.0
  %v204 = vmax.f32 %v166, 0.0
  %v205 = vmax.f32 %v169, 0.0
  %v206 = vmax.f32 %v174, 0.0
  %v207 = vmax.f32 %v177, 0.0
  %v208 = vmax.f32 %v182, 0.0
  %v209 = vmax.f32 %v185, 0.0
  %v210 = vmax.f32 %v190, 0.0
  %v211 = vmax.f32 %v193, 0.0
  %v212 = vpack.c.bf16 %v197, %v196
  %v213 = vpack.c.bf16 %v199, %v198
  %v214 = vpack.c.bf16 %v201, %v200
  %v215 = vpack.c.bf16 %v203, %v202
  %v216 = vpack.c.bf16 %v205, %v204
  %v217 = vpack.c.bf16 %v207, %v206
  %v218 = vpack.c.bf16 %v209, %v208
  %v219 = vpack.c.bf16 %v211, %v210
  %v220 = vld [vmem:[%s3] sm:$0xf]
  %v221 = vld [vmem:[%s3 + $0x4] sm:$0xf]
  %v222 = vld [vmem:[%s3 + $0x8] sm:$0xf]
  %v223 = vld [vmem:[%s3 + $0xc] sm:$0xf]
  %v224 = vld [vmem:[%s3 + $0x10] sm:$0xf]
  %v225 = vld [vmem:[%s3 + $0x14] sm:$0xf]
  %v226 = vld [vmem:[%s3 + $0x18] sm:$0xf]
  %v227 = vld [vmem:[%s3 + $0x1c] sm:$0xf]
  %v228 = vld [vmem:[%s4] sm:$0x1]
  %v230 = vlaneseq
  %v231 = vshrl.u32 %v230, 7
  %v232 = vsub.s32 0, %v231
  %v233 = vrot.slane %v228, %v232
  %v243 = vunpack.c.l.b16 %v220
  %v244 = vunpack.c.l.b16 %v221
  %v245 = vunpack.c.l.b16 %v222
  %v246 = vunpack.c.l.b16 %v223
  %v247 = vunpack.c.l.b16 %v224
  %v248 = vunpack.c.l.b16 %v225
  %v249 = vunpack.c.l.b16 %v226
  %v250 = vunpack.c.l.b16 %v227
  %v251 = vpack.c.b16 %v244, %v243
  %v252 = vpack.c.b16 %v246, %v245
  %v253 = vpack.c.b16 %v248, %v247
  %v254 = vpack.c.b16 %v250, %v249
  %vm259 = vcmask 523264
  %v261 = vsel %vm259, %v212, 0
  %v264 = vsel %vm259, %v213, 0
  %v267 = vsel %vm259, %v214, 0
  %v270 = vsel %vm259, %v215, 0
  %v273 = vsel %vm259, %v216, 0
  %v276 = vsel %vm259, %v217, 0
  %v279 = vsel %vm259, %v218, 0
  %v282 = vsel %vm259, %v219, 0
  %284 = vmatprep.subr.bf16.mxu0 0
  %285 = vmatpush1.bf16.msra.mxu0 %v251
  %286 = vmatprep.subr.bf16.mxu0 0
  %287 = vmatpush1.bf16.msra.mxu0 %v252
  %288 = vmatprep.subr.bf16.mxu0 0
  %289 = vmatpush1.bf16.msra.mxu0 %v253
  %290 = vmatprep.subr.bf16.mxu0 0
  %291 = vmatpush1.bf16.msra.mxu0 %v254
  %292 = vmatprep.subr.bf16.mxu0 0
  %293 = vmatpush1.bf16.msra.mxu0 0
  %294 = vmatprep.subr.bf16.mxu0 0
  %295 = vmatpush1.bf16.msra.mxu0 0
  %296 = vmatprep.subr.bf16.mxu0 0
  %297 = vmatpush1.bf16.msra.mxu0 0
  %298 = vmatprep.subr.bf16.mxu0 0
  %299 = vmatpush1.bf16.msra.mxu0 0
  %300 = vmatprep.subr.bf16.mxu0 0
  %301 = vmatpush1.bf16.msra.mxu0 0
  %302 = vmatprep.subr.bf16.mxu0 0
  %303 = vmatpush1.bf16.msra.mxu0 0
  %304 = vmatprep.subr.bf16.mxu0 0
  %305 = vmatpush1.bf16.msra.mxu0 0
  %306 = vmatprep.subr.bf16.mxu0 0
  %307 = vmatpush1.bf16.msra.mxu0 0
  %308 = vmatprep.subr.bf16.mxu0 0
  %309 = vmatpush1.bf16.msra.mxu0 0
  %310 = vmatprep.subr.bf16.mxu0 0
  %311 = vmatpush1.bf16.msra.mxu0 0
  %312 = vmatprep.subr.bf16.mxu0 0
  %313 = vmatpush1.bf16.msra.mxu0 0
  %314 = vmatprep.subr.bf16.mxu0 0
  %315 = vmatpush1.bf16.msra.mxu0 0
  %316 = vmatprep.mubr.bf16.mxu0 0
  %317 = vmatmul.mubr.bf16.gmra.mrb[0].mxu0 %v261
  %v318 = vpop.f32.mrb[0].mxu0
  %v319 = vadd.f32 %v233, %v318
  %v320 = vpop.f32.mrb[0].mxu0
  %v321 = vpop.f32.mrb[0].mxu0
  %v322 = vadd.f32 %v233, %v321
  %v323 = vpop.f32.mrb[0].mxu0
  %324 = vmatprep.mubr.bf16.mxu0 0
  %325 = vmatmul.mubr.bf16.gmra.mrb[0].mxu0 %v264
  %v326 = vpop.f32.mrb[0].mxu0
  %v327 = vadd.f32 %v233, %v326
  %v328 = vpop.f32.mrb[0].mxu0
  %v329 = vpop.f32.mrb[0].mxu0
  %v330 = vadd.f32 %v233, %v329
  %v331 = vpop.f32.mrb[0].mxu0
  %332 = vmatprep.mubr.bf16.mxu0 0
  %333 = vmatmul.mubr.bf16.gmra.mrb[0].mxu0 %v267
  %v334 = vpop.f32.mrb[0].mxu0
  %v335 = vadd.f32 %v233, %v334
  %v336 = vpop.f32.mrb[0].mxu0
  %v337 = vpop.f32.mrb[0].mxu0
  %v338 = vadd.f32 %v233, %v337
  %v339 = vpop.f32.mrb[0].mxu0
  %340 = vmatprep.mubr.bf16.mxu0 0
  %341 = vmatmul.mubr.bf16.gmra.mrb[0].mxu0 %v270
  %v342 = vpop.f32.mrb[0].mxu0
  %v343 = vadd.f32 %v233, %v342
  %v344 = vpop.f32.mrb[0].mxu0
  %v345 = vpop.f32.mrb[0].mxu0
  %v346 = vadd.f32 %v233, %v345
  %v347 = vpop.f32.mrb[0].mxu0
  %348 = vmatprep.mubr.bf16.mxu0 0
  %349 = vmatmul.mubr.bf16.gmra.mrb[0].mxu0 %v273
  %v350 = vpop.f32.mrb[0].mxu0
  %v351 = vadd.f32 %v233, %v350
  %v352 = vpop.f32.mrb[0].mxu0
  %v353 = vpop.f32.mrb[0].mxu0
  %v354 = vadd.f32 %v233, %v353
  %v355 = vpop.f32.mrb[0].mxu0
  %356 = vmatprep.mubr.bf16.mxu0 0
  %357 = vmatmul.mubr.bf16.gmra.mrb[0].mxu0 %v276
  %v358 = vpop.f32.mrb[0].mxu0
  %v359 = vadd.f32 %v233, %v358
  %v360 = vpop.f32.mrb[0].mxu0
  %v361 = vpop.f32.mrb[0].mxu0
  %v362 = vadd.f32 %v233, %v361
  %v363 = vpop.f32.mrb[0].mxu0
  %364 = vmatprep.mubr.bf16.mxu0 0
  %365 = vmatmul.mubr.bf16.gmra.mrb[0].mxu0 %v279
  %v366 = vpop.f32.mrb[0].mxu0
  %v367 = vadd.f32 %v233, %v366
  %v368 = vpop.f32.mrb[0].mxu0
  %v369 = vpop.f32.mrb[0].mxu0
  %v370 = vadd.f32 %v233, %v369
  %v371 = vpop.f32.mrb[0].mxu0
  %372 = vmatprep.mubr.bf16.mxu0 0
  %373 = vmatmul.mubr.bf16.gmra.mrb[0].mxu0 %v282
  %v374 = vpop.f32.mrb[0].mxu0
  %v375 = vadd.f32 %v233, %v374
  %v376 = vpop.f32.mrb[0].mxu0
  %v377 = vpop.f32.mrb[0].mxu0
  %v378 = vadd.f32 %v233, %v377
  %v379 = vpop.f32.mrb[0].mxu0
  %380 = vdwg.mxu0
  %v381 = vadd.f32 %v27, %v319
  %v382 = vadd.f32 %v28, %v322
  %v383 = vadd.f32 %v29, %v327
  %v384 = vadd.f32 %v30, %v330
  %v385 = vadd.f32 %v31, %v335
  %v386 = vadd.f32 %v32, %v338
  %v387 = vadd.f32 %v33, %v343
  %v388 = vadd.f32 %v34, %v346
  %v389 = vadd.f32 %v35, %v351
  %v390 = vadd.f32 %v36, %v354
  %v391 = vadd.f32 %v37, %v359
  %v392 = vadd.f32 %v38, %v362
  %v393 = vadd.f32 %v39, %v367
  %v394 = vadd.f32 %v40, %v370
  %v395 = vadd.f32 %v41, %v375
  %v396 = vadd.f32 %v42, %v378
  %v397 = vsel %vm74, %v381, 0.0
  %398 = vadd.xlane.f32.xlu0 %v397
  %v399 = vpop.xlane.xlu0 %398
  %v400 = vsel %vm74, %v382, 0.0
  %401 = vadd.xlane.f32.xlu0 %v400
  %v402 = vpop.xlane.xlu0 %401
  %v403 = vsel %vm74, %v383, 0.0
  %404 = vadd.xlane.f32.xlu0 %v403
  %v405 = vpop.xlane.xlu0 %404
  %v406 = vsel %vm74, %v384, 0.0
  %407 = vadd.xlane.f32.xlu0 %v406
  %v408 = vpop.xlane.xlu0 %407
  %v409 = vsel %vm74, %v385, 0.0
  %410 = vadd.xlane.f32.xlu0 %v409
  %v411 = vpop.xlane.xlu0 %410
  %v412 = vsel %vm74, %v386, 0.0
  %413 = vadd.xlane.f32.xlu0 %v412
  %v414 = vpop.xlane.xlu0 %413
  %v415 = vsel %vm74, %v387, 0.0
  %416 = vadd.xlane.f32.xlu0 %v415
  %v417 = vpop.xlane.xlu0 %416
  %v418 = vsel %vm74, %v388, 0.0
  %419 = vadd.xlane.f32.xlu0 %v418
  %v420 = vpop.xlane.xlu0 %419
  %v421 = vsel %vm74, %v389, 0.0
  %422 = vadd.xlane.f32.xlu0 %v421
  %v423 = vpop.xlane.xlu0 %422
  %v424 = vsel %vm74, %v390, 0.0
  %425 = vadd.xlane.f32.xlu0 %v424
  %v426 = vpop.xlane.xlu0 %425
  %v427 = vsel %vm74, %v391, 0.0
  %428 = vadd.xlane.f32.xlu0 %v427
  %v429 = vpop.xlane.xlu0 %428
  %v430 = vsel %vm74, %v392, 0.0
  %431 = vadd.xlane.f32.xlu0 %v430
  %v432 = vpop.xlane.xlu0 %431
  %v433 = vsel %vm74, %v393, 0.0
  %434 = vadd.xlane.f32.xlu0 %v433
  %v435 = vpop.xlane.xlu0 %434
  %v436 = vsel %vm74, %v394, 0.0
  %437 = vadd.xlane.f32.xlu0 %v436
  %v438 = vpop.xlane.xlu0 %437
  %v439 = vsel %vm74, %v395, 0.0
  %440 = vadd.xlane.f32.xlu0 %v439
  %v441 = vpop.xlane.xlu0 %440
  %v442 = vsel %vm74, %v396, 0.0
  %443 = vadd.xlane.f32.xlu0 %v442
  %v444 = vpop.xlane.xlu0 %443
  %v445 = vrcp.pop 32.0
  %v446 = vmul.f32 %v399, %v445
  %v447 = vmul.f32 %v402, %v445
  %v448 = vmul.f32 %v405, %v445
  %v449 = vmul.f32 %v408, %v445
  %v450 = vmul.f32 %v411, %v445
  %v451 = vmul.f32 %v414, %v445
  %v452 = vmul.f32 %v417, %v445
  %v453 = vmul.f32 %v420, %v445
  %v454 = vmul.f32 %v423, %v445
  %v455 = vmul.f32 %v426, %v445
  %v456 = vmul.f32 %v429, %v445
  %v457 = vmul.f32 %v432, %v445
  %v458 = vmul.f32 %v435, %v445
  %v459 = vmul.f32 %v438, %v445
  %v460 = vmul.f32 %v441, %v445
  %v461 = vmul.f32 %v444, %v445
  %v462 = vsub.f32 %v381, %v446
  %v463 = vsub.f32 %v382, %v447
  %v464 = vsub.f32 %v383, %v448
  %v465 = vsub.f32 %v384, %v449
  %v466 = vsub.f32 %v385, %v450
  %v467 = vsub.f32 %v386, %v451
  %v468 = vsub.f32 %v387, %v452
  %v469 = vsub.f32 %v388, %v453
  %v470 = vsub.f32 %v389, %v454
  %v471 = vsub.f32 %v390, %v455
  %v472 = vsub.f32 %v391, %v456
  %v473 = vsub.f32 %v392, %v457
  %v474 = vsub.f32 %v393, %v458
  %v475 = vsub.f32 %v394, %v459
  %v476 = vsub.f32 %v395, %v460
  %v477 = vsub.f32 %v396, %v461
  %v478 = vmul.f32 %v462, %v462
  %v479 = vmul.f32 %v463, %v463
  %v480 = vmul.f32 %v464, %v464
  %v481 = vmul.f32 %v465, %v465
  %v482 = vmul.f32 %v466, %v466
  %v483 = vmul.f32 %v467, %v467
  %v484 = vmul.f32 %v468, %v468
  %v485 = vmul.f32 %v469, %v469
  %v486 = vmul.f32 %v470, %v470
  %v487 = vmul.f32 %v471, %v471
  %v488 = vmul.f32 %v472, %v472
  %v489 = vmul.f32 %v473, %v473
  %v490 = vmul.f32 %v474, %v474
  %v491 = vmul.f32 %v475, %v475
  %v492 = vmul.f32 %v476, %v476
  %v493 = vmul.f32 %v477, %v477
  %v494 = vsel %vm74, %v478, 0.0
  %495 = vadd.xlane.f32.xlu0 %v494
  %v496 = vpop.xlane.xlu0 %495
  %v497 = vsel %vm74, %v479, 0.0
  %498 = vadd.xlane.f32.xlu0 %v497
  %v499 = vpop.xlane.xlu0 %498
  %v500 = vsel %vm74, %v480, 0.0
  %501 = vadd.xlane.f32.xlu0 %v500
  %v502 = vpop.xlane.xlu0 %501
  %v503 = vsel %vm74, %v481, 0.0
  %504 = vadd.xlane.f32.xlu0 %v503
  %v505 = vpop.xlane.xlu0 %504
  %v506 = vsel %vm74, %v482, 0.0
  %507 = vadd.xlane.f32.xlu0 %v506
  %v508 = vpop.xlane.xlu0 %507
  %v509 = vsel %vm74, %v483, 0.0
  %510 = vadd.xlane.f32.xlu0 %v509
  %v511 = vpop.xlane.xlu0 %510
  %v512 = vsel %vm74, %v484, 0.0
  %513 = vadd.xlane.f32.xlu0 %v512
  %v514 = vpop.xlane.xlu0 %513
  %v515 = vsel %vm74, %v485, 0.0
  %516 = vadd.xlane.f32.xlu0 %v515
  %v517 = vpop.xlane.xlu0 %516
  %v518 = vsel %vm74, %v486, 0.0
  %519 = vadd.xlane.f32.xlu0 %v518
  %v520 = vpop.xlane.xlu0 %519
  %v521 = vsel %vm74, %v487, 0.0
  %522 = vadd.xlane.f32.xlu0 %v521
  %v523 = vpop.xlane.xlu0 %522
  %v524 = vsel %vm74, %v488, 0.0
  %525 = vadd.xlane.f32.xlu0 %v524
  %v526 = vpop.xlane.xlu0 %525
  %v527 = vsel %vm74, %v489, 0.0
  %528 = vadd.xlane.f32.xlu0 %v527
  %v529 = vpop.xlane.xlu0 %528
  %v530 = vsel %vm74, %v490, 0.0
  %531 = vadd.xlane.f32.xlu0 %v530
  %v532 = vpop.xlane.xlu0 %531
  %v533 = vsel %vm74, %v491, 0.0
  %534 = vadd.xlane.f32.xlu0 %v533
  %v535 = vpop.xlane.xlu0 %534
  %v536 = vsel %vm74, %v492, 0.0
  %537 = vadd.xlane.f32.xlu0 %v536
  %v538 = vpop.xlane.xlu0 %537
  %v539 = vsel %vm74, %v493, 0.0
  %540 = vadd.xlane.f32.xlu0 %v539
  %v541 = vpop.xlane.xlu0 %540
  %v542 = vmul.f32 %v496, %v445
  %v543 = vmul.f32 %v499, %v445
  %v544 = vmul.f32 %v502, %v445
  %v545 = vmul.f32 %v505, %v445
  %v546 = vmul.f32 %v508, %v445
  %v547 = vmul.f32 %v511, %v445
  %v548 = vmul.f32 %v514, %v445
  %v549 = vmul.f32 %v517, %v445
  %v550 = vmul.f32 %v520, %v445
  %v551 = vmul.f32 %v523, %v445
  %v552 = vmul.f32 %v526, %v445
  %v553 = vmul.f32 %v529, %v445
  %v554 = vmul.f32 %v532, %v445
  %v555 = vmul.f32 %v535, %v445
  %v556 = vmul.f32 %v538, %v445
  %v557 = vmul.f32 %v541, %v445
  %v558 = vadd.f32 %v542, 1e-05
  %v559 = vadd.f32 %v543, 1e-05
  %v560 = vadd.f32 %v544, 1e-05
  %v561 = vadd.f32 %v545, 1e-05
  %v562 = vadd.f32 %v546, 1e-05
  %v563 = vadd.f32 %v547, 1e-05
  %v564 = vadd.f32 %v548, 1e-05
  %v565 = vadd.f32 %v549, 1e-05
  %v566 = vadd.f32 %v550, 1e-05
  %v567 = vadd.f32 %v551, 1e-05
  %v568 = vadd.f32 %v552, 1e-05
  %v569 = vadd.f32 %v553, 1e-05
  %v570 = vadd.f32 %v554, 1e-05
  %v571 = vadd.f32 %v555, 1e-05
  %v572 = vadd.f32 %v556, 1e-05
  %v573 = vadd.f32 %v557, 1e-05
  %v574 = vrsqrt.pop %v558
  %v575 = vrsqrt.pop %v559
  %v576 = vrsqrt.pop %v560
  %v577 = vrsqrt.pop %v561
  %v578 = vrsqrt.pop %v562
  %v579 = vrsqrt.pop %v563
  %v580 = vrsqrt.pop %v564
  %v581 = vrsqrt.pop %v565
  %v582 = vrsqrt.pop %v566
  %v583 = vrsqrt.pop %v567
  %v584 = vrsqrt.pop %v568
  %v585 = vrsqrt.pop %v569
  %v586 = vrsqrt.pop %v570
  %v587 = vrsqrt.pop %v571
  %v588 = vrsqrt.pop %v572
  %v589 = vrsqrt.pop %v573
  %v590 = vmul.f32 %v462, %v574
  %v591 = vmul.f32 %v463, %v575
  %v592 = vmul.f32 %v464, %v576
  %v593 = vmul.f32 %v465, %v577
  %v594 = vmul.f32 %v466, %v578
  %v595 = vmul.f32 %v467, %v579
  %v596 = vmul.f32 %v468, %v580
  %v597 = vmul.f32 %v469, %v581
  %v598 = vmul.f32 %v470, %v582
  %v599 = vmul.f32 %v471, %v583
  %v600 = vmul.f32 %v472, %v584
  %v601 = vmul.f32 %v473, %v585
  %v602 = vmul.f32 %v474, %v586
  %v603 = vmul.f32 %v475, %v587
  %v604 = vmul.f32 %v476, %v588
  %v605 = vmul.f32 %v477, %v589
  %v606 = vld [vmem:[%s5] sm:$0x1]
  %v608 = vlaneseq
  %v609 = vshrl.u32 %v608, 7
  %v610 = vsub.s32 0, %v609
  %v611 = vrot.slane %v606, %v610
  %v613 = vmul.f32 %v590, %v611
  %v614 = vmul.f32 %v591, %v611
  %v615 = vmul.f32 %v592, %v611
  %v616 = vmul.f32 %v593, %v611
  %v617 = vmul.f32 %v594, %v611
  %v618 = vmul.f32 %v595, %v611
  %v619 = vmul.f32 %v596, %v611
  %v620 = vmul.f32 %v597, %v611
  %v621 = vmul.f32 %v598, %v611
  %v622 = vmul.f32 %v599, %v611
  %v623 = vmul.f32 %v600, %v611
  %v624 = vmul.f32 %v601, %v611
  %v625 = vmul.f32 %v602, %v611
  %v626 = vmul.f32 %v603, %v611
  %v627 = vmul.f32 %v604, %v611
  %v628 = vmul.f32 %v605, %v611
  %v629 = vld [vmem:[%s6] sm:$0x1]
  %v631 = vlaneseq
  %v632 = vshrl.u32 %v631, 7
  %v633 = vsub.s32 0, %v632
  %v634 = vrot.slane %v629, %v633
  %v636 = vadd.f32 %v613, %v634
  %v637 = vadd.f32 %v614, %v634
  %v638 = vadd.f32 %v615, %v634
  %v639 = vadd.f32 %v616, %v634
  %v640 = vadd.f32 %v617, %v634
  %v641 = vadd.f32 %v618, %v634
  %v642 = vadd.f32 %v619, %v634
  %v643 = vadd.f32 %v620, %v634
  %v644 = vadd.f32 %v621, %v634
  %v645 = vadd.f32 %v622, %v634
  %v646 = vadd.f32 %v623, %v634
  %v647 = vadd.f32 %v624, %v634
  %v648 = vadd.f32 %v625, %v634
  %v649 = vadd.f32 %v626, %v634
  %v650 = vadd.f32 %v627, %v634
  %v651 = vadd.f32 %v628, %v634
  %652 = vst.msk [vmem:[%s7] sm:$0xff] %vm74, %v636
  %653 = vst.msk [vmem:[%s7 + $0x8] sm:$0xff] %vm74, %v637
  %654 = vst.msk [vmem:[%s7 + $0x10] sm:$0xff] %vm74, %v638
  %655 = vst.msk [vmem:[%s7 + $0x18] sm:$0xff] %vm74, %v639
  %656 = vst.msk [vmem:[%s7 + $0x20] sm:$0xff] %vm74, %v640
  %657 = vst.msk [vmem:[%s7 + $0x28] sm:$0xff] %vm74, %v641
  %658 = vst.msk [vmem:[%s7 + $0x30] sm:$0xff] %vm74, %v642
  %659 = vst.msk [vmem:[%s7 + $0x38] sm:$0xff] %vm74, %v643
  %660 = vst.msk [vmem:[%s7 + $0x40] sm:$0xff] %vm74, %v644
  %661 = vst.msk [vmem:[%s7 + $0x48] sm:$0xff] %vm74, %v645
  %662 = vst.msk [vmem:[%s7 + $0x50] sm:$0xff] %vm74, %v646
  %663 = vst.msk [vmem:[%s7 + $0x58] sm:$0xff] %vm74, %v647
  %664 = vst.msk [vmem:[%s7 + $0x60] sm:$0xff] %vm74, %v648
  %665 = vst.msk [vmem:[%s7 + $0x68] sm:$0xff] %vm74, %v649
  %666 = vst.msk [vmem:[%s7 + $0x70] sm:$0xff] %vm74, %v650
  %667 = vst.msk [vmem:[%s7 + $0x78] sm:$0xff] %vm74, %v651
  // Predicated region
  $region30: #{spatial_transformer_forward.12} parent=0 // pred_check
    _
  $region31: #{spatial_transformer_forward.12} parent=0 // pred_check_branch
    %669 = sbr.rel (0) target = $region33
  $region32: #{spatial_transformer_forward.12} parent=0 // pred_region
    _
  $region33: #{spatial_transformer_forward.12} parent=0 // pred_fallthru
    _
  // Predicated region
  $region34: #{spatial_transformer_forward.12} parent=0 // pred_check
    _
  $region35: #{spatial_transformer_forward.12} parent=0 // pred_check_branch
    %671 = sbr.rel (0) target = $region37
  $region36: #{spatial_transformer_forward.12} parent=0 // pred_region
    _
  $region37: #{spatial_transformer_forward.12} parent=0 // pred_fallthru
    _

// kernel: spatial_transformer_forward.11
$region0: #{spatial_transformer_forward.11}
  #allocation0 [shape = 'u32[]', space=smem, size = 0x4, offset = 0x4, fixed_abs, tag = 'smem constant byte address 0x4 - core index']
  #allocation1 [shape = 'u32[144,128]{1,0:T(1,128)}', space=vmem, size = 0x12000, scoped, tag = 'internal scratch']
  %s0 = inlined_call_operand.vmem [shape: bf16[2,4,64,8], index: 0, kind: input, shape index: {}]
  %s1 = inlined_call_operand.vmem [shape: bf16[2,4,64,8], index: 1, kind: input, shape index: {}]
  %s2 = inlined_call_operand.vmem [shape: bf16[2,4,64,8], index: 2, kind: input, shape index: {}]
  %s3 = inlined_call_operand.vmem [shape: f32[2,64,32], index: 3, kind: input, shape index: {}]
  %s4 = inlined_call_operand.vmem [shape: bf16[4,8,32], index: 4, kind: input, shape index: {}]
  %s5 = inlined_call_operand.vmem [shape: f32[1,32], index: 5, kind: input, shape index: {}]
  %s6 = inlined_call_operand.vmem [shape: f32[1,32], index: 6, kind: input, shape index: {}]
  %s7 = inlined_call_operand.vmem [shape: f32[1,32], index: 7, kind: input, shape index: {}]
  %s8 = inlined_call_operand.vmem [shape: f32[2,64,32], index: 8, kind: output, shape index: {}]
  %s9 = sld [smem:[#allocation0]]
  $region65: #{spatial_transformer_forward.11} parent=0
    _
  %s11 = ssub.s32 1, %s9
  %s12 = scalar_select 0, %s11, %s9
  loop: start=0, step=1, limit=4
  $region2: #{spatial_transformer_forward.11} parent=0 // loop_pre_header
    _
  $region3: #{spatial_transformer_forward.11} parent=0 // loop_header
    %s14 = sphi 0, %s18
    %p15 = scmp.ge.s32.totalorder %s14, 4
    %s24 = sphi 0, %s26
    %s27 = sphi 0, %s24
    %s28 = sphi 0, %s27
    %s44 = sphi 0, %s28
    %s50 = sphi 0, %s52
    %s53 = sphi 0, %s50
    %s54 = sphi 0, %s53
    %s70 = sphi 0, %s54
    %s76 = sphi 0, %s78
    %s79 = sphi 0, %s76
    %s80 = sphi 0, %s79
    %s96 = sphi 0, %s80
    %s102 = sphi 0, %s104
    %s105 = sphi 0, %s102
    %s106 = sphi 0, %s105
    %s122 = sphi 0, %s106
    %s126 = sphi 0, %s126
    %s128 = sphi 0, %s126
    %s129 = sphi 0, %s128
    %s143 = sphi 0, %s129
    %s147 = sphi 0, %s147
    %s149 = sphi 0, %s147
    %s150 = sphi 0, %s149
    %s164 = sphi 0, %s150
    %s168 = sphi 0, %s168
    %s170 = sphi 0, %s168
    %s171 = sphi 0, %s170
    %s185 = sphi 0, %s171
    %s189 = sphi 0, %s189
    %s191 = sphi 0, %s189
    %s192 = sphi 0, %s191
    %s206 = sphi 0, %s192
    %s212 = sphi 0, %s214
    %s215 = sphi 0, %s212
    %s216 = sphi 0, %s215
    %s232 = sphi 0, %s216
  $region4: #{spatial_transformer_forward.11} parent=0 // loop_header_branch
    %17 = sbr.rel (%p15) target = $region8
  $region5: #{spatial_transformer_forward.11} parent=0 // loop_body
    %s19 = ssub.s32 %s14, 1
    %s20 = ssub.s32 %s14, 2
    %s21 = sadd.s32 %s14, 1
    %s22 = ssub.s32 %s14, %s21
    %p23 = scmp.eq.s32.totalorder %s22, 0
    %s25 = sadd.s32 %s24, 1
    %s26 = scalar_select %p23, %s24, %s25
    %p29 = pneg %p23
    %p30 = scmp.eq.s32.totalorder %s14, 1
    %p31 = por %p29, %p30
    %p32 = scmp.ne.s32.totalorder %s24, %s27
    %p33 = scmp.eq.s32.totalorder %s14, 0
    %p34 = por %p32, %p33
    %p35 = scmp.ne.s32.totalorder %s24, %s27
    %p36 = scmp.eq.s32.totalorder %s19, 1
    %p37 = por %p35, %p36
    %p38 = scmp.ne.s32.totalorder %s27, %s28
    %p39 = scmp.eq.s32.totalorder %s19, 0
    %p40 = por %p38, %p39
    %p41 = scmp.ne.s32.totalorder %s27, %s28
    %p42 = scmp.eq.s32.totalorder %s20, 1
    %p43 = por %p41, %p42
    %p45 = scmp.ne.s32.totalorder %s28, %s44
    %p46 = scmp.eq.s32.totalorder %s20, 0
    %p47 = por %p45, %p46
    %s48 = ssub.s32 %s14, %s21
    %p49 = scmp.eq.s32.totalorder %s48, 0
    %s51 = sadd.s32 %s50, 1
    %s52 = scalar_select %p49, %s50, %s51
    %p55 = pneg %p49
    %p56 = scmp.eq.s32.totalorder %s14, 1
    %p57 = por %p55, %p56
    %p58 = scmp.ne.s32.totalorder %s50, %s53
    %p59 = scmp.eq.s32.totalorder %s14, 0
    %p60 = por %p58, %p59
    %p61 = scmp.ne.s32.totalorder %s50, %s53
    %p62 = scmp.eq.s32.totalorder %s19, 1
    %p63 = por %p61, %p62
    %p64 = scmp.ne.s32.totalorder %s53, %s54
    %p65 = scmp.eq.s32.totalorder %s19, 0
    %p66 = por %p64, %p65
    %p67 = scmp.ne.s32.totalorder %s53, %s54
    %p68 = scmp.eq.s32.totalorder %s20, 1
    %p69 = por %p67, %p68
    %p71 = scmp.ne.s32.totalorder %s54, %s70
    %p72 = scmp.eq.s32.totalorder %s20, 0
    %p73 = por %p71, %p72
    %s74 = ssub.s32 %s14, %s21
    %p75 = scmp.eq.s32.totalorder %s74, 0
    %s77 = sadd.s32 %s76, 1
    %s78 = scalar_select %p75, %s76, %s77
    %p81 = pneg %p75
    %p82 = scmp.eq.s32.totalorder %s14, 1
    %p83 = por %p81, %p82
    %p84 = scmp.ne.s32.totalorder %s76, %s79
    %p85 = scmp.eq.s32.totalorder %s14, 0
    %p86 = por %p84, %p85
    %p87 = scmp.ne.s32.totalorder %s76, %s79
    %p88 = scmp.eq.s32.totalorder %s19, 1
    %p89 = por %p87, %p88
    %p90 = scmp.ne.s32.totalorder %s79, %s80
    %p91 = scmp.eq.s32.totalorder %s19, 0
    %p92 = por %p90, %p91
    %p93 = scmp.ne.s32.totalorder %s79, %s80
    %p94 = scmp.eq.s32.totalorder %s20, 1
    %p95 = por %p93, %p94
    %p97 = scmp.ne.s32.totalorder %s80, %s96
    %p98 = scmp.eq.s32.totalorder %s20, 0
    %p99 = por %p97, %p98
    %s100 = ssub.s32 %s14, %s21
    %p101 = scmp.eq.s32.totalorder %s100, 0
    %s103 = sadd.s32 %s102, 1
    %s104 = scalar_select %p101, %s102, %s103
    %p107 = pneg %p101
    %p108 = scmp.eq.s32.totalorder %s14, 1
    %p109 = por %p107, %p108
    %p110 = scmp.ne.s32.totalorder %s102, %s105
    %p111 = scmp.eq.s32.totalorder %s14, 0
    %p112 = por %p110, %p111
    %p113 = scmp.ne.s32.totalorder %s102, %s105
    %p114 = scmp.eq.s32.totalorder %s19, 1
    %p115 = por %p113, %p114
    %p116 = scmp.ne.s32.totalorder %s105, %s106
    %p117 = scmp.eq.s32.totalorder %s19, 0
    %p118 = por %p116, %p117
    %p119 = scmp.ne.s32.totalorder %s105, %s106
    %p120 = scmp.eq.s32.totalorder %s20, 1
    %p121 = por %p119, %p120
    %p123 = scmp.ne.s32.totalorder %s106, %s122
    %p124 = scmp.eq.s32.totalorder %s20, 0
    %p125 = por %p123, %p124
    %s127 = sadd.s32 %s126, 1
    %p130 = scmp.eq.s32.totalorder %s14, 1
    %p131 = scmp.ne.s32.totalorder %s126, %s128
    %p132 = scmp.eq.s32.totalorder %s14, 0
    %p133 = por %p131, %p132
    %p134 = scmp.ne.s32.totalorder %s126, %s128
    %p135 = scmp.eq.s32.totalorder %s19, 1
    %p136 = por %p134, %p135
    %p137 = scmp.ne.s32.totalorder %s128, %s129
    %p138 = scmp.eq.s32.totalorder %s19, 0
    %p139 = por %p137, %p138
    %p140 = scmp.ne.s32.totalorder %s128, %s129
    %p141 = scmp.eq.s32.totalorder %s20, 1
    %p142 = por %p140, %p141
    %p144 = scmp.ne.s32.totalorder %s129, %s143
    %p145 = scmp.eq.s32.totalorder %s20, 0
    %p146 = por %p144, %p145
    %s148 = sadd.s32 %s147, 1
    %p151 = scmp.eq.s32.totalorder %s14, 1
    %p152 = scmp.ne.s32.totalorder %s147, %s149
    %p153 = scmp.eq.s32.totalorder %s14, 0
    %p154 = por %p152, %p153
    %p155 = scmp.ne.s32.totalorder %s147, %s149
    %p156 = scmp.eq.s32.totalorder %s19, 1
    %p157 = por %p155, %p156
    %p158 = scmp.ne.s32.totalorder %s149, %s150
    %p159 = scmp.eq.s32.totalorder %s19, 0
    %p160 = por %p158, %p159
    %p161 = scmp.ne.s32.totalorder %s149, %s150
    %p162 = scmp.eq.s32.totalorder %s20, 1
    %p163 = por %p161, %p162
    %p165 = scmp.ne.s32.totalorder %s150, %s164
    %p166 = scmp.eq.s32.totalorder %s20, 0
    %p167 = por %p165, %p166
    %s169 = sadd.s32 %s168, 1
    %p172 = scmp.eq.s32.totalorder %s14, 1
    %p173 = scmp.ne.s32.totalorder %s168, %s170
    %p174 = scmp.eq.s32.totalorder %s14, 0
    %p175 = por %p173, %p174
    %p176 = scmp.ne.s32.totalorder %s168, %s170
    %p177 = scmp.eq.s32.totalorder %s19, 1
    %p178 = por %p176, %p177
    %p179 = scmp.ne.s32.totalorder %s170, %s171
    %p180 = scmp.eq.s32.totalorder %s19, 0
    %p181 = por %p179, %p180
    %p182 = scmp.ne.s32.totalorder %s170, %s171
    %p183 = scmp.eq.s32.totalorder %s20, 1
    %p184 = por %p182, %p183
    %p186 = scmp.ne.s32.totalorder %s171, %s185
    %p187 = scmp.eq.s32.totalorder %s20, 0
    %p188 = por %p186, %p187
    %s190 = sadd.s32 %s189, 1
    %p193 = scmp.eq.s32.totalorder %s14, 1
    %p194 = scmp.ne.s32.totalorder %s189, %s191
    %p195 = scmp.eq.s32.totalorder %s14, 0
    %p196 = por %p194, %p195
    %p197 = scmp.ne.s32.totalorder %s189, %s191
    %p198 = scmp.eq.s32.totalorder %s19, 1
    %p199 = por %p197, %p198
    %p200 = scmp.ne.s32.totalorder %s191, %s192
    %p201 = scmp.eq.s32.totalorder %s19, 0
    %p202 = por %p200, %p201
    %p203 = scmp.ne.s32.totalorder %s191, %s192
    %p204 = scmp.eq.s32.totalorder %s20, 1
    %p205 = por %p203, %p204
    %p207 = scmp.ne.s32.totalorder %s192, %s206
    %p208 = scmp.eq.s32.totalorder %s20, 0
    %p209 = por %p207, %p208
    %s210 = ssub.s32 %s14, %s21
    %p211 = scmp.eq.s32.totalorder %s210, 0
    %s213 = sadd.s32 %s212, 1
    %s214 = scalar_select %p211, %s212, %s213
    %p217 = pneg %p211
    %p218 = scmp.eq.s32.totalorder %s14, 1
    %p219 = por %p217, %p218
    %p220 = scmp.ne.s32.totalorder %s212, %s215
    %p221 = scmp.eq.s32.totalorder %s14, 0
    %p222 = por %p220, %p221
    %p223 = scmp.ne.s32.totalorder %s212, %s215
    %p224 = scmp.eq.s32.totalorder %s19, 1
    %p225 = por %p223, %p224
    %p226 = scmp.ne.s32.totalorder %s215, %s216
    %p227 = scmp.eq.s32.totalorder %s19, 0
    %p228 = por %p226, %p227
    %p229 = scmp.ne.s32.totalorder %s215, %s216
    %p230 = scmp.eq.s32.totalorder %s20, 1
    %p231 = por %p229, %p230
    %p233 = scmp.ne.s32.totalorder %s216, %s232
    %p234 = scmp.eq.s32.totalorder %s20, 0
    %p235 = por %p233, %p234
    %p236 = scmp.le.s32.totalorder 1, %s14
    %p237 = scmp.lt.s32.totalorder %s14, 3
    %p238 = pnand %p236, %p237
    %p239 = pneg %p238
    // Predicated region
    $region9: #{spatial_transformer_forward.11} parent=5 // pred_check
      _
    $region10: #{spatial_transformer_forward.11} parent=5 // pred_check_branch
      %241 = sbr.rel (%p238) target = $region12
    $region11: #{spatial_transformer_forward.11} parent=5 // pred_region
      %s242 = ssub.s32 %s14, 1
      // Predicated region
      $region13: #{spatial_transformer_forward.11} parent=11 // pred_check
        %p243 = pneg %p139
      $region14: #{spatial_transformer_forward.11} parent=11 // pred_check_branch
        %245 = sbr.rel (%p243) target = $region16
      $region15: #{spatial_transformer_forward.11} parent=11 // pred_region
        _
      $region16: #{spatial_transformer_forward.11} parent=11 // pred_fallthru
        _
      // Predicated region
      $region17: #{spatial_transformer_forward.11} parent=11 // pred_check
        %p246 = pneg %p160
      $region18: #{spatial_transformer_forward.11} parent=11 // pred_check_branch
        %248 = sbr.rel (%p246) target = $region20
      $region19: #{spatial_transformer_forward.11} parent=11 // pred_region
        _
      $region20: #{spatial_transformer_forward.11} parent=11 // pred_fallthru
        _
      // Predicated region
      $region21: #{spatial_transformer_forward.11} parent=11 // pred_check
        %p249 = pneg %p181
      $region22: #{spatial_transformer_forward.11} parent=11 // pred_check_branch
        %251 = sbr.rel (%p249) target = $region24
      $region23: #{spatial_transformer_forward.11} parent=11 // pred_region
        _
      $region24: #{spatial_transformer_forward.11} parent=11 // pred_fallthru
        _
      // Predicated region
      $region25: #{spatial_transformer_forward.11} parent=11 // pred_check
        %p252 = pneg %p202
      $region26: #{spatial_transformer_forward.11} parent=11 // pred_check_branch
        %254 = sbr.rel (%p252) target = $region28
      $region27: #{spatial_transformer_forward.11} parent=11 // pred_region
        _
      $region28: #{spatial_transformer_forward.11} parent=11 // pred_fallthru
        _
    $region12: #{spatial_transformer_forward.11} parent=5 // pred_fallthru
      _
    %p255 = scmp.lt.s32.totalorder %s14, 2
    // Predicated region
    $region29: #{spatial_transformer_forward.11} parent=5 // pred_check
      %p256 = pneg %p255
    $region30: #{spatial_transformer_forward.11} parent=5 // pred_check_branch
      %258 = sbr.rel (%p256) target = $region32
    $region31: #{spatial_transformer_forward.11} parent=5 // pred_region
      // Predicated region
      $region33: #{spatial_transformer_forward.11} parent=31 // pred_check
        %p259 = pneg %p34
      $region34: #{spatial_transformer_forward.11} parent=31 // pred_check_branch
        %261 = sbr.rel (%p259) target = $region36
      $region35: #{spatial_transformer_forward.11} parent=31 // pred_region
        %p262 = scmp.lt.s32.totalorder %s14, 1
        %s263 = scalar_select %p262, %s14, 1
        %s264 = smul.addr %s263, 32
        %s265 = smul.addr %s264, 4
        %s266 = scalar_lea.vmem %s0, %s265
      $region36: #{spatial_transformer_forward.11} parent=31 // pred_fallthru
        _
      // Predicated region
      $region37: #{spatial_transformer_forward.11} parent=31 // pred_check
        %p267 = pneg %p60
      $region38: #{spatial_transformer_forward.11} parent=31 // pred_check_branch
        %269 = sbr.rel (%p267) target = $region40
      $region39: #{spatial_transformer_forward.11} parent=31 // pred_region
        %p270 = scmp.lt.s32.totalorder %s14, 1
        %s271 = scalar_select %p270, %s14, 1
        %s272 = smul.addr %s271, 32
        %s273 = smul.addr %s272, 4
        %s274 = scalar_lea.vmem %s1, %s273
      $region40: #{spatial_transformer_forward.11} parent=31 // pred_fallthru
        _
      // Predicated region
      $region41: #{spatial_transformer_forward.11} parent=31 // pred_check
        %p275 = pneg %p86
      $region42: #{spatial_transformer_forward.11} parent=31 // pred_check_branch
        %277 = sbr.rel (%p275) target = $region44
      $region43: #{spatial_transformer_forward.11} parent=31 // pred_region
        %p278 = scmp.lt.s32.totalorder %s14, 1
        %s279 = scalar_select %p278, %s14, 1
        %s280 = smul.addr %s279, 32
        %s281 = smul.addr %s280, 4
        %s282 = scalar_lea.vmem %s2, %s281
      $region44: #{spatial_transformer_forward.11} parent=31 // pred_fallthru
        _
      // Predicated region
      $region45: #{spatial_transformer_forward.11} parent=31 // pred_check
        %p283 = pneg %p112
      $region46: #{spatial_transformer_forward.11} parent=31 // pred_check_branch
        %285 = sbr.rel (%p283) target = $region48
      $region47: #{spatial_transformer_forward.11} parent=31 // pred_region
        %p286 = scmp.lt.s32.totalorder %s14, 1
        %s287 = scalar_select %p286, %s14, 1
        %s288 = smul.addr %s287, 8
        %s289 = smul.addr %s288, 8
        %s290 = scalar_lea.vmem %s3, %s289
      $region48: #{spatial_transformer_forward.11} parent=31 // pred_fallthru
        _
    $region32: #{spatial_transformer_forward.11} parent=5 // pred_fallthru
      _
    %p291 = scmp.le.s32.totalorder 1, %s14
    %p292 = scmp.lt.s32.totalorder %s14, 3
    %p293 = pnand %p291, %p292
    %p294 = pneg %p293
    // Predicated region
    $region49: #{spatial_transformer_forward.11} parent=5 // pred_check
      _
    $region50: #{spatial_transformer_forward.11} parent=5 // pred_check_branch
      %296 = sbr.rel (%p293) target = $region52
    $region51: #{spatial_transformer_forward.11} parent=5 // pred_region
      %s297 = ssub.s32 %s14, 1
      %p298 = scmp.lt.s32.totalorder %s19, 1
      %s299 = scalar_select %p298, %s19, 1
      %s300 = smul.addr %s299, 32
      %s301 = smul.addr %s300, 4
      %s302 = scalar_lea.vmem %s0, %s301
      %p303 = pneg %p40
      %p304 = pneg %p37
      %p305 = scmp.lt.s32.totalorder %s19, 1
      %s306 = scalar_select %p305, %s19, 1
      %s307 = smul.addr %s306, 32
      %s308 = smul.addr %s307, 4
      %s309 = scalar_lea.vmem %s1, %s308
      %p310 = pneg %p66
      %p311 = pneg %p63
      %p312 = scmp.lt.s32.totalorder %s19, 1
      %s313 = scalar_select %p312, %s19, 1
      %s314 = smul.addr %s313, 32
      %s315 = smul.addr %s314, 4
      %s316 = scalar_lea.vmem %s2, %s315
      %p317 = pneg %p92
      %p318 = pneg %p89
      %p319 = scmp.lt.s32.totalorder %s19, 1
      %s320 = scalar_select %p319, %s19, 1
      %s321 = smul.addr %s320, 8
      %s322 = smul.addr %s321, 8
      %s323 = scalar_lea.vmem %s3, %s322
      %p324 = pneg %p118
      %p325 = pneg %p115
      %p326 = pneg %p139
      %p327 = pneg %p136
      %p328 = pneg %p160
      %p329 = pneg %p157
      %p330 = pneg %p181
      %p331 = pneg %p178
      %p332 = pneg %p202
      %p333 = pneg %p199
      %p334 = pneg %p228
      %p335 = pneg %p225
      %p336 = scmp.lt.s32.totalorder %s19, 1
      %s337 = scalar_select %p336, %s19, 1
      %s338 = smul.addr %s337, 8
      %s339 = smul.addr %s338, 8
      %s340 = scalar_lea.vmem %s8, %s339
      %p341 = scmp.lt.s32.totalorder %s19, 1
      %s342 = scalar_select %p341, %s19, 1
      %s343 = smul.addr %s342, 32
      %s344 = smul.addr %s343, 4
      %s345 = scalar_lea.vmem %s0, %s344
      %p346 = scmp.lt.s32.totalorder %s19, 1
      %s347 = scalar_select %p346, %s19, 1
      %s348 = smul.addr %s347, 32
      %s349 = smul.addr %s348, 4
      %s350 = scalar_lea.vmem %s1, %s349
      %p351 = scmp.lt.s32.totalorder %s19, 1
      %s352 = scalar_select %p351, %s19, 1
      %s353 = smul.addr %s352, 32
      %s354 = smul.addr %s353, 4
      %s355 = scalar_lea.vmem %s2, %s354
      %p356 = scmp.lt.s32.totalorder %s19, 1
      %s357 = scalar_select %p356, %s19, 1
      %s358 = smul.addr %s357, 8
      %s359 = smul.addr %s358, 8
      %s360 = scalar_lea.vmem %s3, %s359
      %p361 = scmp.lt.s32.totalorder %s19, 1
      %s362 = scalar_select %p361, %s19, 1
      %s363 = smul.addr %s362, 8
      %s364 = smul.addr %s363, 8
      %s365 = scalar_lea.vmem %s8, %s364
      %v367 = vld [vmem:[%s345] sm:$0xf]
      %v368 = vld [vmem:[%s345 + $0x4] sm:$0xf]
      %v369 = vld [vmem:[%s345 + $0x8] sm:$0xf]
      %v370 = vld [vmem:[%s345 + $0xc] sm:$0xf]
      %v371 = vld [vmem:[%s345 + $0x10] sm:$0xf]
      %v372 = vld [vmem:[%s345 + $0x14] sm:$0xf]
      %v373 = vld [vmem:[%s345 + $0x18] sm:$0xf]
      %v374 = vld [vmem:[%s345 + $0x1c] sm:$0xf]
      %v375 = vld [vmem:[%s345 + $0x20] sm:$0xf]
      %v376 = vld [vmem:[%s345 + $0x24] sm:$0xf]
      %v377 = vld [vmem:[%s345 + $0x28] sm:$0xf]
      %v378 = vld [vmem:[%s345 + $0x2c] sm:$0xf]
      %v379 = vld [vmem:[%s345 + $0x30] sm:$0xf]
      %v380 = vld [vmem:[%s345 + $0x34] sm:$0xf]
      %v381 = vld [vmem:[%s345 + $0x38] sm:$0xf]
      %v382 = vld [vmem:[%s345 + $0x3c] sm:$0xf]
      %v383 = vld [vmem:[%s345 + $0x40] sm:$0xf]
      %v384 = vld [vmem:[%s345 + $0x44] sm:$0xf]
      %v385 = vld [vmem:[%s345 + $0x48] sm:$0xf]
      %v386 = vld [vmem:[%s345 + $0x4c] sm:$0xf]
      %v387 = vld [vmem:[%s345 + $0x50] sm:$0xf]
      %v388 = vld [vmem:[%s345 + $0x54] sm:$0xf]
      %v389 = vld [vmem:[%s345 + $0x58] sm:$0xf]
      %v390 = vld [vmem:[%s345 + $0x5c] sm:$0xf]
      %v391 = vld [vmem:[%s345 + $0x60] sm:$0xf]
      %v392 = vld [vmem:[%s345 + $0x64] sm:$0xf]
      %v393 = vld [vmem:[%s345 + $0x68] sm:$0xf]
      %v394 = vld [vmem:[%s345 + $0x6c] sm:$0xf]
      %v395 = vld [vmem:[%s345 + $0x70] sm:$0xf]
      %v396 = vld [vmem:[%s345 + $0x74] sm:$0xf]
      %v397 = vld [vmem:[%s345 + $0x78] sm:$0xf]
      %v398 = vld [vmem:[%s345 + $0x7c] sm:$0xf]
      %v399 = vld [vmem:[%s350] sm:$0xf]
      %v400 = vld [vmem:[%s350 + $0x4] sm:$0xf]
      %v401 = vld [vmem:[%s350 + $0x8] sm:$0xf]
      %v402 = vld [vmem:[%s350 + $0xc] sm:$0xf]
      %v403 = vld [vmem:[%s350 + $0x10] sm:$0xf]
      %v404 = vld [vmem:[%s350 + $0x14] sm:$0xf]
      %v405 = vld [vmem:[%s350 + $0x18] sm:$0xf]
      %v406 = vld [vmem:[%s350 + $0x1c] sm:$0xf]
      %v407 = vld [vmem:[%s350 + $0x20] sm:$0xf]
      %v408 = vld [vmem:[%s350 + $0x24] sm:$0xf]
      %v409 = vld [vmem:[%s350 + $0x28] sm:$0xf]
      %v410 = vld [vmem:[%s350 + $0x2c] sm:$0xf]
      %v411 = vld [vmem:[%s350 + $0x30] sm:$0xf]
      %v412 = vld [vmem:[%s350 + $0x34] sm:$0xf]
      %v413 = vld [vmem:[%s350 + $0x38] sm:$0xf]
      %v414 = vld [vmem:[%s350 + $0x3c] sm:$0xf]
      %v415 = vld [vmem:[%s350 + $0x40] sm:$0xf]
      %v416 = vld [vmem:[%s350 + $0x44] sm:$0xf]
      %v417 = vld [vmem:[%s350 + $0x48] sm:$0xf]
      %v418 = vld [vmem:[%s350 + $0x4c] sm:$0xf]
      %v419 = vld [vmem:[%s350 + $0x50] sm:$0xf]
      %v420 = vld [vmem:[%s350 + $0x54] sm:$0xf]
      %v421 = vld [vmem:[%s350 + $0x58] sm:$0xf]
      %v422 = vld [vmem:[%s350 + $0x5c] sm:$0xf]
      %v423 = vld [vmem:[%s350 + $0x60] sm:$0xf]
      %v424 = vld [vmem:[%s350 + $0x64] sm:$0xf]
      %v425 = vld [vmem:[%s350 + $0x68] sm:$0xf]
      %v426 = vld [vmem:[%s350 + $0x6c] sm:$0xf]
      %v427 = vld [vmem:[%s350 + $0x70] sm:$0xf]
      %v428 = vld [vmem:[%s350 + $0x74] sm:$0xf]
      %v429 = vld [vmem:[%s350 + $0x78] sm:$0xf]
      %v430 = vld [vmem:[%s350 + $0x7c] sm:$0xf]
      %v431 = vld [vmem:[%s355] sm:$0xf]
      %v432 = vld [vmem:[%s355 + $0x4] sm:$0xf]
      %v433 = vld [vmem:[%s355 + $0x8] sm:$0xf]
      %v434 = vld [vmem:[%s355 + $0xc] sm:$0xf]
      %v435 = vld [vmem:[%s355 + $0x10] sm:$0xf]
      %v436 = vld [vmem:[%s355 + $0x14] sm:$0xf]
      %v437 = vld [vmem:[%s355 + $0x18] sm:$0xf]
      %v438 = vld [vmem:[%s355 + $0x1c] sm:$0xf]
      %v439 = vld [vmem:[%s355 + $0x20] sm:$0xf]
      %v440 = vld [vmem:[%s355 + $0x24] sm:$0xf]
      %v441 = vld [vmem:[%s355 + $0x28] sm:$0xf]
      %v442 = vld [vmem:[%s355 + $0x2c] sm:$0xf]
      %v443 = vld [vmem:[%s355 + $0x30] sm:$0xf]
      %v444 = vld [vmem:[%s355 + $0x34] sm:$0xf]
      %v445 = vld [vmem:[%s355 + $0x38] sm:$0xf]
      %v446 = vld [vmem:[%s355 + $0x3c] sm:$0xf]
      %v447 = vld [vmem:[%s355 + $0x40] sm:$0xf]
      %v448 = vld [vmem:[%s355 + $0x44] sm:$0xf]
      %v449 = vld [vmem:[%s355 + $0x48] sm:$0xf]
      %v450 = vld [vmem:[%s355 + $0x4c] sm:$0xf]
      %v451 = vld [vmem:[%s355 + $0x50] sm:$0xf]
      %v452 = vld [vmem:[%s355 + $0x54] sm:$0xf]
      %v453 = vld [vmem:[%s355 + $0x58] sm:$0xf]
      %v454 = vld [vmem:[%s355 + $0x5c] sm:$0xf]
      %v455 = vld [vmem:[%s355 + $0x60] sm:$0xf]
      %v456 = vld [vmem:[%s355 + $0x64] sm:$0xf]
      %v457 = vld [vmem:[%s355 + $0x68] sm:$0xf]
      %v458 = vld [vmem:[%s355 + $0x6c] sm:$0xf]
      %v459 = vld [vmem:[%s355 + $0x70] sm:$0xf]
      %v460 = vld [vmem:[%s355 + $0x74] sm:$0xf]
      %v461 = vld [vmem:[%s355 + $0x78] sm:$0xf]
      %v462 = vld [vmem:[%s355 + $0x7c] sm:$0xf]
      %v471 = vunpack.c.l.b16 %v367
      %v472 = vunpack.c.l.b16 %v368
      %v473 = vunpack.c.l.b16 %v369
      %v474 = vunpack.c.l.b16 %v370
      %v475 = vunpack.c.l.b16 %v371
      %v476 = vunpack.c.l.b16 %v372
      %v477 = vunpack.c.l.b16 %v373
      %v478 = vunpack.c.l.b16 %v374
      %v479 = vpack.c.b16 %v472, %v471
      %v480 = vpack.c.b16 %v474, %v473
      %v481 = vpack.c.b16 %v476, %v475
      %v482 = vpack.c.b16 %v478, %v477
      %v491 = vunpack.c.l.b16 %v399
      %v492 = vunpack.c.l.b16 %v400
      %v493 = vunpack.c.l.b16 %v401
      %v494 = vunpack.c.l.b16 %v402
      %v495 = vunpack.c.l.b16 %v403
      %v496 = vunpack.c.l.b16 %v404
      %v497 = vunpack.c.l.b16 %v405
      %v498 = vunpack.c.l.b16 %v406
      %v499 = vpack.c.b16 %v492, %v491
      %v500 = vpack.c.b16 %v494, %v493
      %v501 = vpack.c.b16 %v496, %v495
      %v502 = vpack.c.b16 %v498, %v497
      %vm503 = vcmask 64512
      %v505 = vsel %vm503, %v479, 0
      %v508 = vsel %vm503, %v480, 0
      %v511 = vsel %vm503, %v481, 0
      %v514 = vsel %vm503, %v482, 0
      %v517 = vsel %vm503, %v499, 0
      %v520 = vsel %vm503, %v500, 0
      %v523 = vsel %vm503, %v501, 0
      %v526 = vsel %vm503, %v502, 0
      %528 = vmatprep.subr.bf16.mxu0 0
      %529 = vmatpush1.bf16.xpose.msra.mxu0 %v517
      %530 = vmatprep.subr.bf16.mxu0 0
      %531 = vmatpush1.bf16.xpose.msra.mxu0 %v520
      %532 = vmatprep.subr.bf16.mxu0 0
      %533 = vmatpush1.bf16.xpose.msra.mxu0 %v523
      %534 = vmatprep.subr.bf16.mxu0 0
      %535 = vmatpush1.bf16.xpose.msra.mxu0 %v526
      %536 = vmatprep.subr.bf16.mxu0 0
      %537 = vmatpush1.bf16.xpose.msra.mxu0 0
      %538 = vmatprep.subr.bf16.mxu0 0
      %539 = vmatpush1.bf16.xpose.msra.mxu0 0
      %540 = vmatprep.subr.bf16.mxu0 0
      %541 = vmatpush1.bf16.xpose.msra.mxu0 0
      %542 = vmatprep.subr.bf16.mxu0 0
      %543 = vmatpush1.bf16.xpose.msra.mxu0 0
      %544 = vmatprep.subr.bf16.mxu0 0
      %545 = vmatpush1.bf16.xpose.msra.mxu0 0
      %546 = vmatprep.subr.bf16.mxu0 0
      %547 = vmatpush1.bf16.xpose.msra.mxu0 0
      %548 = vmatprep.subr.bf16.mxu0 0
      %549 = vmatpush1.bf16.xpose.msra.mxu0 0
      %550 = vmatprep.subr.bf16.mxu0 0
      %551 = vmatpush1.bf16.xpose.msra.mxu0 0
      %552 = vmatprep.subr.bf16.mxu0 0
      %553 = vmatpush1.bf16.xpose.msra.mxu0 0
      %554 = vmatprep.subr.bf16.mxu0 0
      %555 = vmatpush1.bf16.xpose.msra.mxu0 0
      %556 = vmatprep.subr.bf16.mxu0 0
      %557 = vmatpush1.bf16.xpose.msra.mxu0 0
      %558 = vmatprep.subr.bf16.mxu0 0
      %559 = vmatpush1.bf16.xpose.msra.mxu0 0
      %560 = vmatprep.mubr.bf16.mxu0 0
      %561 = vmatmul.mubr.bf16.gmra.mrb[0].mxu0 %v505
      %v562 = vpop.f32.mrb[0].mxu0
      %v563 = vadd.f32 0.0, %v562
      %v564 = vpop.f32.mrb[0].mxu0
      %v565 = vpop.f32.mrb[0].mxu0
      %v566 = vadd.f32 0.0, %v565
      %v567 = vpop.f32.mrb[0].mxu0
      %568 = vmatprep.mubr.bf16.mxu0 0
      %569 = vmatmul.mubr.bf16.gmra.mrb[0].mxu0 %v508
      %v570 = vpop.f32.mrb[0].mxu0
      %v571 = vadd.f32 0.0, %v570
      %v572 = vpop.f32.mrb[0].mxu0
      %v573 = vpop.f32.mrb[0].mxu0
      %v574 = vadd.f32 0.0, %v573
      %v575 = vpop.f32.mrb[0].mxu0
      %576 = vmatprep.mubr.bf16.mxu0 0
      %577 = vmatmul.mubr.bf16.gmra.mrb[0].mxu0 %v511
      %v578 = vpop.f32.mrb[0].mxu0
      %v579 = vadd.f32 0.0, %v578
      %v580 = vpop.f32.mrb[0].mxu0
      %v581 = vpop.f32.mrb[0].mxu0
      %v582 = vadd.f32 0.0, %v581
      %v583 = vpop.f32.mrb[0].mxu0
      %584 = vmatprep.mubr.bf16.mxu0 0
      %585 = vmatmul.mubr.bf16.gmra.mrb[0].mxu0 %v514
      %v586 = vpop.f32.mrb[0].mxu0
      %v587 = vadd.f32 0.0, %v586
      %v588 = vpop.f32.mrb[0].mxu0
      %v589 = vpop.f32.mrb[0].mxu0
      %v590 = vadd.f32 0.0, %v589
      %v591 = vpop.f32.mrb[0].mxu0
      %592 = vdwg.mxu0
      %v601 = vunpack.c.l.b16 %v375
      %v602 = vunpack.c.l.b16 %v376
      %v603 = vunpack.c.l.b16 %v377
      %v604 = vunpack.c.l.b16 %v378
      %v605 = vunpack.c.l.b16 %v379
      %v606 = vunpack.c.l.b16 %v380
      %v607 = vunpack.c.l.b16 %v381
      %v608 = vunpack.c.l.b16 %v382
      %v609 = vpack.c.b16 %v602, %v601
      %v610 = vpack.c.b16 %v604, %v603
      %v611 = vpack.c.b16 %v606, %v605
      %v612 = vpack.c.b16 %v608, %v607
      %v621 = vunpack.c.l.b16 %v407
      %v622 = vunpack.c.l.b16 %v408
      %v623 = vunpack.c.l.b16 %v409
      %v624 = vunpack.c.l.b16 %v410
      %v625 = vunpack.c.l.b16 %v411
      %v626 = vunpack.c.l.b16 %v412
      %v627 = vunpack.c.l.b16 %v413
      %v628 = vunpack.c.l.b16 %v414
      %v629 = vpack.c.b16 %v622, %v621
      %v630 = vpack.c.b16 %v624, %v623
      %v631 = vpack.c.b16 %v626, %v625
      %v632 = vpack.c.b16 %v628, %v627
      %v634 = vsel %vm503, %v609, 0
      %v637 = vsel %vm503, %v610, 0
      %v640 = vsel %vm503, %v611, 0
      %v643 = vsel %vm503, %v612, 0
      %v646 = vsel %vm503, %v629, 0
      %v649 = vsel %vm503, %v630, 0
      %v652 = vsel %vm503, %v631, 0
      %v655 = vsel %vm503, %v632, 0
      %657 = vmatprep.subr.bf16.mxu0 0
      %658 = vmatpush1.bf16.xpose.msra.mxu0 %v646
      %659 = vmatprep.subr.bf16.mxu0 0
      %660 = vmatpush1.bf16.xpose.msra.mxu0 %v649
      %661 = vmatprep.subr.bf16.mxu0 0
      %662 = vmatpush1.bf16.xpose.msra.mxu0 %v652
      %663 = vmatprep.subr.bf16.mxu0 0
      %664 = vmatpush1.bf16.xpose.msra.mxu0 %v655
      %665 = vmatprep.subr.bf16.mxu0 0
      %666 = vmatpush1.bf16.xpose.msra.mxu0 0
      %667 = vmatprep.subr.bf16.mxu0 0
      %668 = vmatpush1.bf16.xpose.msra.mxu0 0
      %669 = vmatprep.subr.bf16.mxu0 0
      %670 = vmatpush1.bf16.xpose.msra.mxu0 0
      %671 = vmatprep.subr.bf16.mxu0 0
      %672 = vmatpush1.bf16.xpose.msra.mxu0 0
      %673 = vmatprep.subr.bf16.mxu0 0
      %674 = vmatpush1.bf16.xpose.msra.mxu0 0
      %675 = vmatprep.subr.bf16.mxu0 0
      %676 = vmatpush1.bf16.xpose.msra.mxu0 0
      %677 = vmatprep.subr.bf16.mxu0 0
      %678 = vmatpush1.bf16.xpose.msra.mxu0 0
      %679 = vmatprep.subr.bf16.mxu0 0
      %680 = vmatpush1.bf16.xpose.msra.mxu0 0
      %681 = vmatprep.subr.bf16.mxu0 0
      %682 = vmatpush1.bf16.xpose.msra.mxu0 0
      %683 = vmatprep.subr.bf16.mxu0 0
      %684 = vmatpush1.bf16.xpose.msra.mxu0 0
      %685 = vmatprep.subr.bf16.mxu0 0
      %686 = vmatpush1.bf16.xpose.msra.mxu0 0
      %687 = vmatprep.subr.bf16.mxu0 0
      %688 = vmatpush1.bf16.xpose.msra.mxu0 0
      %689 = vmatprep.mubr.bf16.mxu0 0
      %690 = vmatmul.mubr.bf16.gmra.mrb[0].mxu0 %v634
      %v691 = vpop.f32.mrb[0].mxu0
      %v692 = vadd.f32 0.0, %v691
      %v693 = vpop.f32.mrb[0].mxu0
      %v694 = vpop.f32.mrb[0].mxu0
      %v695 = vadd.f32 0.0, %v694
      %v696 = vpop.f32.mrb[0].mxu0
      %697 = vmatprep.mubr.bf16.mxu0 0
      %698 = vmatmul.mubr.bf16.gmra.mrb[0].mxu0 %v637
      %v699 = vpop.f32.mrb[0].mxu0
      %v700 = vadd.f32 0.0, %v699
      %v701 = vpop.f32.mrb[0].mxu0
      %v702 = vpop.f32.mrb[0].mxu0
      %v703 = vadd.f32 0.0, %v702
      %v704 = vpop.f32.mrb[0].mxu0
      %705 = vmatprep.mubr.bf16.mxu0 0
      %706 = vmatmul.mubr.bf16.gmra.mrb[0].mxu0 %v640
      %v707 = vpop.f32.mrb[0].mxu0
      %v708 = vadd.f32 0.0, %v707
      %v709 = vpop.f32.mrb[0].mxu0
      %v710 = vpop.f32.mrb[0].mxu0
      %v711 = vadd.f32 0.0, %v710
      %v712 = vpop.f32.mrb[0].mxu0
      %713 = vmatprep.mubr.bf16.mxu0 0
      %714 = vmatmul.mubr.bf16.gmra.mrb[0].mxu0 %v643
      %v715 = vpop.f32.mrb[0].mxu0
      %v716 = vadd.f32 0.0, %v715
      %v717 = vpop.f32.mrb[0].mxu0
      %v718 = vpop.f32.mrb[0].mxu0
      %v719 = vadd.f32 0.0, %v718
      %v720 = vpop.f32.mrb[0].mxu0
      %721 = vdwg.mxu0
      %v730 = vunpack.c.l.b16 %v383
      %v731 = vunpack.c.l.b16 %v384
      %v732 = vunpack.c.l.b16 %v385
      %v733 = vunpack.c.l.b16 %v386
      %v734 = vunpack.c.l.b16 %v387
      %v735 = vunpack.c.l.b16 %v388
      %v736 = vunpack.c.l.b16 %v389
      %v737 = vunpack.c.l.b16 %v390
      %v738 = vpack.c.b16 %v731, %v730
      %v739 = vpack.c.b16 %v733, %v732
      %v740 = vpack.c.b16 %v735, %v734
      %v741 = vpack.c.b16 %v737, %v736
      %v750 = vunpack.c.l.b16 %v415
      %v751 = vunpack.c.l.b16 %v416
      %v752 = vunpack.c.l.b16 %v417
      %v753 = vunpack.c.l.b16 %v418
      %v754 = vunpack.c.l.b16 %v419
      %v755 = vunpack.c.l.b16 %v420
      %v756 = vunpack.c.l.b16 %v421
      %v757 = vunpack.c.l.b16 %v422
      %v758 = vpack.c.b16 %v751, %v750
      %v759 = vpack.c.b16 %v753, %v752
      %v760 = vpack.c.b16 %v755, %v754
      %v761 = vpack.c.b16 %v757, %v756
      %v763 = vsel %vm503, %v738, 0
      %v766 = vsel %vm503, %v739, 0
      %v769 = vsel %vm503, %v740, 0
      %v772 = vsel %vm503, %v741, 0
      %v775 = vsel %vm503, %v758, 0
      %v778 = vsel %vm503, %v759, 0
      %v781 = vsel %vm503, %v760, 0
      %v784 = vsel %vm503, %v761, 0
      %786 = vmatprep.subr.bf16.mxu0 0
      %787 = vmatpush1.bf16.xpose.msra.mxu0 %v775
      %788 = vmatprep.subr.bf16.mxu0 0
      %789 = vmatpush1.bf16.xpose.msra.mxu0 %v778
      %790 = vmatprep.subr.bf16.mxu0 0
      %791 = vmatpush1.bf16.xpose.msra.mxu0 %v781
      %792 = vmatprep.subr.bf16.mxu0 0
      %793 = vmatpush1.bf16.xpose.msra.mxu0 %v784
      %794 = vmatprep.subr.bf16.mxu0 0
      %795 = vmatpush1.bf16.xpose.msra.mxu0 0
      %796 = vmatprep.subr.bf16.mxu0 0
      %797 = vmatpush1.bf16.xpose.msra.mxu0 0
      %798 = vmatprep.subr.bf16.mxu0 0
      %799 = vmatpush1.bf16.xpose.msra.mxu0 0
      %800 = vmatprep.subr.bf16.mxu0 0
      %801 = vmatpush1.bf16.xpose.msra.mxu0 0
      %802 = vmatprep.subr.bf16.mxu0 0
      %803 = vmatpush1.bf16.xpose.msra.mxu0 0
      %804 = vmatprep.subr.bf16.mxu0 0
      %805 = vmatpush1.bf16.xpose.msra.mxu0 0
      %806 = vmatprep.subr.bf16.mxu0 0
      %807 = vmatpush1.bf16.xpose.msra.mxu0 0
      %808 = vmatprep.subr.bf16.mxu0 0
      %809 = vmatpush1.bf16.xpose.msra.mxu0 0
      %810 = vmatprep.subr.bf16.mxu0 0
      %811 = vmatpush1.bf16.xpose.msra.mxu0 0
      %812 = vmatprep.subr.bf16.mxu0 0
      %813 = vmatpush1.bf16.xpose.msra.mxu0 0
      %814 = vmatprep.subr.bf16.mxu0 0
      %815 = vmatpush1.bf16.xpose.msra.mxu0 0
      %816 = vmatprep.subr.bf16.mxu0 0
      %817 = vmatpush1.bf16.xpose.msra.mxu0 0
      %818 = vmatprep.mubr.bf16.mxu0 0
      %819 = vmatmul.mubr.bf16.gmra.mrb[0].mxu0 %v763
      %v820 = vpop.f32.mrb[0].mxu0
      %v821 = vadd.f32 0.0, %v820
      %v822 = vpop.f32.mrb[0].mxu0
      %v823 = vpop.f32.mrb[0].mxu0
      %v824 = vadd.f32 0.0, %v823
      %v825 = vpop.f32.mrb[0].mxu0
      %826 = vmatprep.mubr.bf16.mxu0 0
      %827 = vmatmul.mubr.bf16.gmra.mrb[0].mxu0 %v766
      %v828 = vpop.f32.mrb[0].mxu0
      %v829 = vadd.f32 0.0, %v828
      %v830 = vpop.f32.mrb[0].mxu0
      %v831 = vpop.f32.mrb[0].mxu0
      %v832 = vadd.f32 0.0, %v831
      %v833 = vpop.f32.mrb[0].mxu0
      %834 = vmatprep.mubr.bf16.mxu0 0
      %835 = vmatmul.mubr.bf16.gmra.mrb[0].mxu0 %v769
      %v836 = vpop.f32.mrb[0].mxu0
      %v837 = vadd.f32 0.0, %v836
      %v838 = vpop.f32.mrb[0].mxu0
      %v839 = vpop.f32.mrb[0].mxu0
      %v840 = vadd.f32 0.0, %v839
      %v841 = vpop.f32.mrb[0].mxu0
      %842 = vmatprep.mubr.bf16.mxu0 0
      %843 = vmatmul.mubr.bf16.gmra.mrb[0].mxu0 %v772
      %v844 = vpop.f32.mrb[0].mxu0
      %v845 = vadd.f32 0.0, %v844
      %v846 = vpop.f32.mrb[0].mxu0
      %v847 = vpop.f32.mrb[0].mxu0
      %v848 = vadd.f32 0.0, %v847
      %v849 = vpop.f32.mrb[0].mxu0
      %850 = vdwg.mxu0
      %v859 = vunpack.c.l.b16 %v391
      %v860 = vunpack.c.l.b16 %v392
      %v861 = vunpack.c.l.b16 %v393
      %v862 = vunpack.c.l.b16 %v394
      %v863 = vunpack.c.l.b16 %v395
      %v864 = vunpack.c.l.b16 %v396
      %v865 = vunpack.c.l.b16 %v397
      %v866 = vunpack.c.l.b16 %v398
      %v867 = vpack.c.b16 %v860, %v859
      %v868 = vpack.c.b16 %v862, %v861
      %v869 = vpack.c.b16 %v864, %v863
      %v870 = vpack.c.b16 %v866, %v865
      %v879 = vunpack.c.l.b16 %v423
      %v880 = vunpack.c.l.b16 %v424
      %v881 = vunpack.c.l.b16 %v425
      %v882 = vunpack.c.l.b16 %v426
      %v883 = vunpack.c.l.b16 %v427
      %v884 = vunpack.c.l.b16 %v428
      %v885 = vunpack.c.l.b16 %v429
      %v886 = vunpack.c.l.b16 %v430
      %v887 = vpack.c.b16 %v880, %v879
      %v888 = vpack.c.b16 %v882, %v881
      %v889 = vpack.c.b16 %v884, %v883
      %v890 = vpack.c.b16 %v886, %v885
      %v892 = vsel %vm503, %v867, 0
      %v895 = vsel %vm503, %v868, 0
      %v898 = vsel %vm503, %v869, 0
      %v901 = vsel %vm503, %v870, 0
      %v904 = vsel %vm503, %v887, 0
      %v907 = vsel %vm503, %v888, 0
      %v910 = vsel %vm503, %v889, 0
      %v913 = vsel %vm503, %v890, 0
      %915 = vmatprep.subr.bf16.mxu0 0
      %916 = vmatpush1.bf16.xpose.msra.mxu0 %v904
      %917 = vmatprep.subr.bf16.mxu0 0
      %918 = vmatpush1.bf16.xpose.msra.mxu0 %v907
      %919 = vmatprep.subr.bf16.mxu0 0
      %920 = vmatpush1.bf16.xpose.msra.mxu0 %v910
      %921 = vmatprep.subr.bf16.mxu0 0
      %922 = vmatpush1.bf16.xpose.msra.mxu0 %v913
      %923 = vmatprep.subr.bf16.mxu0 0
      %924 = vmatpush1.bf16.xpose.msra.mxu0 0
      %925 = vmatprep.subr.bf16.mxu0 0
      %926 = vmatpush1.bf16.xpose.msra.mxu0 0
      %927 = vmatprep.subr.bf16.mxu0 0
      %928 = vmatpush1.bf16.xpose.msra.mxu0 0
      %929 = vmatprep.subr.bf16.mxu0 0
      %930 = vmatpush1.bf16.xpose.msra.mxu0 0
      %931 = vmatprep.subr.bf16.mxu0 0
      %932 = vmatpush1.bf16.xpose.msra.mxu0 0
      %933 = vmatprep.subr.bf16.mxu0 0
      %934 = vmatpush1.bf16.xpose.msra.mxu0 0
      %935 = vmatprep.subr.bf16.mxu0 0
      %936 = vmatpush1.bf16.xpose.msra.mxu0 0
      %937 = vmatprep.subr.bf16.mxu0 0
      %938 = vmatpush1.bf16.xpose.msra.mxu0 0
      %939 = vmatprep.subr.bf16.mxu0 0
      %940 = vmatpush1.bf16.xpose.msra.mxu0 0
      %941 = vmatprep.subr.bf16.mxu0 0
      %942 = vmatpush1.bf16.xpose.msra.mxu0 0
      %943 = vmatprep.subr.bf16.mxu0 0
      %944 = vmatpush1.bf16.xpose.msra.mxu0 0
      %945 = vmatprep.subr.bf16.mxu0 0
      %946 = vmatpush1.bf16.xpose.msra.mxu0 0
      %947 = vmatprep.mubr.bf16.mxu0 0
      %948 = vmatmul.mubr.bf16.gmra.mrb[0].mxu0 %v892
      %v949 = vpop.f32.mrb[0].mxu0
      %v950 = vadd.f32 0.0, %v949
      %v951 = vpop.f32.mrb[0].mxu0
      %v952 = vpop.f32.mrb[0].mxu0
      %v953 = vadd.f32 0.0, %v952
      %v954 = vpop.f32.mrb[0].mxu0
      %955 = vmatprep.mubr.bf16.mxu0 0
      %956 = vmatmul.mubr.bf16.gmra.mrb[0].mxu0 %v895
      %v957 = vpop.f32.mrb[0].mxu0
      %v958 = vadd.f32 0.0, %v957
      %v959 = vpop.f32.mrb[0].mxu0
      %v960 = vpop.f32.mrb[0].mxu0
      %v961 = vadd.f32 0.0, %v960
      %v962 = vpop.f32.mrb[0].mxu0
      %963 = vmatprep.mubr.bf16.mxu0 0
      %964 = vmatmul.mubr.bf16.gmra.mrb[0].mxu0 %v898
      %v965 = vpop.f32.mrb[0].mxu0
      %v966 = vadd.f32 0.0, %v965
      %v967 = vpop.f32.mrb[0].mxu0
      %v968 = vpop.f32.mrb[0].mxu0
      %v969 = vadd.f32 0.0, %v968
      %v970 = vpop.f32.mrb[0].mxu0
      %971 = vmatprep.mubr.bf16.mxu0 0
      %972 = vmatmul.mubr.bf16.gmra.mrb[0].mxu0 %v901
      %v973 = vpop.f32.mrb[0].mxu0
      %v974 = vadd.f32 0.0, %v973
      %v975 = vpop.f32.mrb[0].mxu0
      %v976 = vpop.f32.mrb[0].mxu0
      %v977 = vadd.f32 0.0, %v976
      %v978 = vpop.f32.mrb[0].mxu0
      %979 = vdwg.mxu0
      %v980 = vmul.f32 %v563, 0.35355338
      %v981 = vmul.f32 %v566, 0.35355338
      %v982 = vmul.f32 %v571, 0.35355338
      %v983 = vmul.f32 %v574, 0.35355338
      %v984 = vmul.f32 %v579, 0.35355338
      %v985 = vmul.f32 %v582, 0.35355338
      %v986 = vmul.f32 %v587, 0.35355338
      %v987 = vmul.f32 %v590, 0.35355338
      %v988 = vmul.f32 %v692, 0.35355338
      %v989 = vmul.f32 %v695, 0.35355338
      %v990 = vmul.f32 %v700, 0.35355338
      %v991 = vmul.f32 %v703, 0.35355338
      %v992 = vmul.f32 %v708, 0.35355338
      %v993 = vmul.f32 %v711, 0.35355338
      %v994 = vmul.f32 %v716, 0.35355338
      %v995 = vmul.f32 %v719, 0.35355338
      %v996 = vmul.f32 %v821, 0.35355338
      %v997 = vmul.f32 %v824, 0.35355338
      %v998 = vmul.f32 %v829, 0.35355338
      %v999 = vmul.f32 %v832, 0.35355338
      %v1000 = vmul.f32 %v837, 0.35355338
      %v1001 = vmul.f32 %v840, 0.35355338
      %v1002 = vmul.f32 %v845, 0.35355338
      %v1003 = vmul.f32 %v848, 0.35355338
      %v1004 = vmul.f32 %v950, 0.35355338
      %v1005 = vmul.f32 %v953, 0.35355338
      %v1006 = vmul.f32 %v958, 0.35355338
      %v1007 = vmul.f32 %v961, 0.35355338
      %v1008 = vmul.f32 %v966, 0.35355338
      %v1009 = vmul.f32 %v969, 0.35355338
      %v1010 = vmul.f32 %v974, 0.35355338
      %v1011 = vmul.f32 %v977, 0.35355338
      %vm1012 = vcmask 523264
      %v1013 = vsel %vm1012, %v980, -inf
      %1014 = vmax.xlane.f32.xlu0 %v1013
      %v1015 = vpop.xlane.xlu0 %1014
      %v1016 = vsel %vm1012, %v981, -inf
      %1017 = vmax.xlane.f32.xlu0 %v1016
      %v1018 = vpop.xlane.xlu0 %1017
      %v1019 = vsel %vm1012, %v982, -inf
      %1020 = vmax.xlane.f32.xlu0 %v1019
      %v1021 = vpop.xlane.xlu0 %1020
      %v1022 = vsel %vm1012, %v983, -inf
      %1023 = vmax.xlane.f32.xlu0 %v1022
      %v1024 = vpop.xlane.xlu0 %1023
      %v1025 = vsel %vm1012, %v984, -inf
      %1026 = vmax.xlane.f32.xlu0 %v1025
      %v1027 = vpop.xlane.xlu0 %1026
      %v1028 = vsel %vm1012, %v985, -inf
      %1029 = vmax.xlane.f32.xlu0 %v1028
      %v1030 = vpop.xlane.xlu0 %1029
      %v1031 = vsel %vm1012, %v986, -inf
      %1032 = vmax.xlane.f32.xlu0 %v1031
      %v1033 = vpop.xlane.xlu0 %1032
      %v1034 = vsel %vm1012, %v987, -inf
      %1035 = vmax.xlane.f32.xlu0 %v1034
      %v1036 = vpop.xlane.xlu0 %1035
      %v1037 = vsel %vm1012, %v988, -inf
      %1038 = vmax.xlane.f32.xlu0 %v1037
      %v1039 = vpop.xlane.xlu0 %1038
      %v1040 = vsel %vm1012, %v989, -inf
      %1041 = vmax.xlane.f32.xlu0 %v1040
      %v1042 = vpop.xlane.xlu0 %1041
      %v1043 = vsel %vm1012, %v990, -inf
      %1044 = vmax.xlane.f32.xlu0 %v1043
      %v1045 = vpop.xlane.xlu0 %1044
      %v1046 = vsel %vm1012, %v991, -inf
      %1047 = vmax.xlane.f32.xlu0 %v1046
      %v1048 = vpop.xlane.xlu0 %1047
      %v1049 = vsel %vm1012, %v992, -inf
      %1050 = vmax.xlane.f32.xlu0 %v1049
      %v1051 = vpop.xlane.xlu0 %1050
      %v1052 = vsel %vm1012, %v993, -inf
      %1053 = vmax.xlane.f32.xlu0 %v1052
      %v1054 = vpop.xlane.xlu0 %1053
      %v1055 = vsel %vm1012, %v994, -inf
      %1056 = vmax.xlane.f32.xlu0 %v1055
      %v1057 = vpop.xlane.xlu0 %1056
      %v1058 = vsel %vm1012, %v995, -inf
      %1059 = vmax.xlane.f32.xlu0 %v1058
      %v1060 = vpop.xlane.xlu0 %1059
      %v1061 = vsel %vm1012, %v996, -inf
      %1062 = vmax.xlane.f32.xlu0 %v1061
      %v1063 = vpop.xlane.xlu0 %1062
      %v1064 = vsel %vm1012, %v997, -inf
      %1065 = vmax.xlane.f32.xlu0 %v1064
      %v1066 = vpop.xlane.xlu0 %1065
      %v1067 = vsel %vm1012, %v998, -inf
      %1068 = vmax.xlane.f32.xlu0 %v1067
      %v1069 = vpop.xlane.xlu0 %1068
      %v1070 = vsel %vm1012, %v999, -inf
      %1071 = vmax.xlane.f32.xlu0 %v1070
      %v1072 = vpop.xlane.xlu0 %1071
      %v1073 = vsel %vm1012, %v1000, -inf
      %1074 = vmax.xlane.f32.xlu0 %v1073
      %v1075 = vpop.xlane.xlu0 %1074
      %v1076 = vsel %vm1012, %v1001, -inf
      %1077 = vmax.xlane.f32.xlu0 %v1076
      %v1078 = vpop.xlane.xlu0 %1077
      %v1079 = vsel %vm1012, %v1002, -inf
      %1080 = vmax.xlane.f32.xlu0 %v1079
      %v1081 = vpop.xlane.xlu0 %1080
      %v1082 = vsel %vm1012, %v1003, -inf
      %1083 = vmax.xlane.f32.xlu0 %v1082
      %v1084 = vpop.xlane.xlu0 %1083
      %v1085 = vsel %vm1012, %v1004, -inf
      %1086 = vmax.xlane.f32.xlu0 %v1085
      %v1087 = vpop.xlane.xlu0 %1086
      %v1088 = vsel %vm1012, %v1005, -inf
      %1089 = vmax.xlane.f32.xlu0 %v1088
      %v1090 = vpop.xlane.xlu0 %1089
      %v1091 = vsel %vm1012, %v1006, -inf
      %1092 = vmax.xlane.f32.xlu0 %v1091
      %v1093 = vpop.xlane.xlu0 %1092
      %v1094 = vsel %vm1012, %v1007, -inf
      %1095 = vmax.xlane.f32.xlu0 %v1094
      %v1096 = vpop.xlane.xlu0 %1095
      %v1097 = vsel %vm1012, %v1008, -inf
      %1098 = vmax.xlane.f32.xlu0 %v1097
      %v1099 = vpop.xlane.xlu0 %1098
      %v1100 = vsel %vm1012, %v1009, -inf
      %1101 = vmax.xlane.f32.xlu0 %v1100
      %v1102 = vpop.xlane.xlu0 %1101
      %v1103 = vsel %vm1012, %v1010, -inf
      %1104 = vmax.xlane.f32.xlu0 %v1103
      %v1105 = vpop.xlane.xlu0 %1104
      %v1106 = vsel %vm1012, %v1011, -inf
      %1107 = vmax.xlane.f32.xlu0 %v1106
      %v1108 = vpop.xlane.xlu0 %1107
      %v1109 = vsub.f32 %v980, %v1015
      %v1110 = vsub.f32 %v981, %v1018
      %v1111 = vsub.f32 %v982, %v1021
      %v1112 = vsub.f32 %v983, %v1024
      %v1113 = vsub.f32 %v984, %v1027
      %v1114 = vsub.f32 %v985, %v1030
      %v1115 = vsub.f32 %v986, %v1033
      %v1116 = vsub.f32 %v987, %v1036
      %v1117 = vsub.f32 %v988, %v1039
      %v1118 = vsub.f32 %v989, %v1042
      %v1119 = vsub.f32 %v990, %v1045
      %v1120 = vsub.f32 %v991, %v1048
      %v1121 = vsub.f32 %v992, %v1051
      %v1122 = vsub.f32 %v993, %v1054
      %v1123 = vsub.f32 %v994, %v1057
      %v1124 = vsub.f32 %v995, %v1060
      %v1125 = vsub.f32 %v996, %v1063
      %v1126 = vsub.f32 %v997, %v1066
      %v1127 = vsub.f32 %v998, %v1069
      %v1128 = vsub.f32 %v999, %v1072
      %v1129 = vsub.f32 %v1000, %v1075
      %v1130 = vsub.f32 %v1001, %v1078
      %v1131 = vsub.f32 %v1002, %v1081
      %v1132 = vsub.f32 %v1003, %v1084
      %v1133 = vsub.f32 %v1004, %v1087
      %v1134 = vsub.f32 %v1005, %v1090
      %v1135 = vsub.f32 %v1006, %v1093
      %v1136 = vsub.f32 %v1007, %v1096
      %v1137 = vsub.f32 %v1008, %v1099
      %v1138 = vsub.f32 %v1009, %v1102
      %v1139 = vsub.f32 %v1010, %v1105
      %v1140 = vsub.f32 %v1011, %v1108
      %v1141 = vmul.f32 %v1109, 1.442695
      %v1142 = vpow.pop %v1141
      %v1143 = vmul.f32 %v1110, 1.442695
      %v1144 = vpow.pop %v1143
      %v1145 = vmul.f32 %v1111, 1.442695
      %v1146 = vpow.pop %v1145
      %v1147 = vmul.f32 %v1112, 1.442695
      %v1148 = vpow.pop %v1147
      %v1149 = vmul.f32 %v1113, 1.442695
      %v1150 = vpow.pop %v1149
      %v1151 = vmul.f32 %v1114, 1.442695
      %v1152 = vpow.pop %v1151
      %v1153 = vmul.f32 %v1115, 1.442695
      %v1154 = vpow.pop %v1153
      %v1155 = vmul.f32 %v1116, 1.442695
      %v1156 = vpow.pop %v1155
      %v1157 = vmul.f32 %v1117, 1.442695
      %v1158 = vpow.pop %v1157
      %v1159 = vmul.f32 %v1118, 1.442695
      %v1160 = vpow.pop %v1159
      %v1161 = vmul.f32 %v1119, 1.442695
      %v1162 = vpow.pop %v1161
      %v1163 = vmul.f32 %v1120, 1.442695
      %v1164 = vpow.pop %v1163
      %v1165 = vmul.f32 %v1121, 1.442695
      %v1166 = vpow.pop %v1165
      %v1167 = vmul.f32 %v1122, 1.442695
      %v1168 = vpow.pop %v1167
      %v1169 = vmul.f32 %v1123, 1.442695
      %v1170 = vpow.pop %v1169
      %v1171 = vmul.f32 %v1124, 1.442695
      %v1172 = vpow.pop %v1171
      %v1173 = vmul.f32 %v1125, 1.442695
      %v1174 = vpow.pop %v1173
      %v1175 = vmul.f32 %v1126, 1.442695
      %v1176 = vpow.pop %v1175
      %v1177 = vmul.f32 %v1127, 1.442695
      %v1178 = vpow.pop %v1177
      %v1179 = vmul.f32 %v1128, 1.442695
      %v1180 = vpow.pop %v1179
      %v1181 = vmul.f32 %v1129, 1.442695
      %v1182 = vpow.pop %v1181
      %v1183 = vmul.f32 %v1130, 1.442695
      %v1184 = vpow.pop %v1183
      %v1185 = vmul.f32 %v1131, 1.442695
      %v1186 = vpow.pop %v1185
      %v1187 = vmul.f32 %v1132, 1.442695
      %v1188 = vpow.pop %v1187
      %v1189 = vmul.f32 %v1133, 1.442695
      %v1190 = vpow.pop %v1189
      %v1191 = vmul.f32 %v1134, 1.442695
      %v1192 = vpow.pop %v1191
      %v1193 = vmul.f32 %v1135, 1.442695
      %v1194 = vpow.pop %v1193
      %v1195 = vmul.f32 %v1136, 1.442695
      %v1196 = vpow.pop %v1195
      %v1197 = vmul.f32 %v1137, 1.442695
      %v1198 = vpow.pop %v1197
      %v1199 = vmul.f32 %v1138, 1.442695
      %v1200 = vpow.pop %v1199
      %v1201 = vmul.f32 %v1139, 1.442695
      %v1202 = vpow.pop %v1201
      %v1203 = vmul.f32 %v1140, 1.442695
      %v1204 = vpow.pop %v1203
      %v1205 = vsel %vm1012, %v1142, 0.0
      %1206 = vadd.xlane.f32.xlu0 %v1205
      %v1207 = vpop.xlane.xlu0 %1206
      %v1208 = vsel %vm1012, %v1144, 0.0
      %1209 = vadd.xlane.f32.xlu0 %v1208
      %v1210 = vpop.xlane.xlu0 %1209
      %v1211 = vsel %vm1012, %v1146, 0.0
      %1212 = vadd.xlane.f32.xlu0 %v1211
      %v1213 = vpop.xlane.xlu0 %1212
      %v1214 = vsel %vm1012, %v1148, 0.0
      %1215 = vadd.xlane.f32.xlu0 %v1214
      %v1216 = vpop.xlane.xlu0 %1215
      %v1217 = vsel %vm1012, %v1150, 0.0
      %1218 = vadd.xlane.f32.xlu0 %v1217
      %v1219 = vpop.xlane.xlu0 %1218
      %v1220 = vsel %vm1012, %v1152, 0.0
      %1221 = vadd.xlane.f32.xlu0 %v1220
      %v1222 = vpop.xlane.xlu0 %1221
      %v1223 = vsel %vm1012, %v1154, 0.0
      %1224 = vadd.xlane.f32.xlu0 %v1223
      %v1225 = vpop.xlane.xlu0 %1224
      %v1226 = vsel %vm1012, %v1156, 0.0
      %1227 = vadd.xlane.f32.xlu0 %v1226
      %v1228 = vpop.xlane.xlu0 %1227
      %v1229 = vsel %vm1012, %v1158, 0.0
      %1230 = vadd.xlane.f32.xlu0 %v1229
      %v1231 = vpop.xlane.xlu0 %1230
      %v1232 = vsel %vm1012, %v1160, 0.0
      %1233 = vadd.xlane.f32.xlu0 %v1232
      %v1234 = vpop.xlane.xlu0 %1233
      %v1235 = vsel %vm1012, %v1162, 0.0
      %1236 = vadd.xlane.f32.xlu0 %v1235
      %v1237 = vpop.xlane.xlu0 %1236
      %v1238 = vsel %vm1012, %v1164, 0.0
      %1239 = vadd.xlane.f32.xlu0 %v1238
      %v1240 = vpop.xlane.xlu0 %1239
      %v1241 = vsel %vm1012, %v1166, 0.0
      %1242 = vadd.xlane.f32.xlu0 %v1241
      %v1243 = vpop.xlane.xlu0 %1242
      %v1244 = vsel %vm1012, %v1168, 0.0
      %1245 = vadd.xlane.f32.xlu0 %v1244
      %v1246 = vpop.xlane.xlu0 %1245
      %v1247 = vsel %vm1012, %v1170, 0.0
      %1248 = vadd.xlane.f32.xlu0 %v1247
      %v1249 = vpop.xlane.xlu0 %1248
      %v1250 = vsel %vm1012, %v1172, 0.0
      %1251 = vadd.xlane.f32.xlu0 %v1250
      %v1252 = vpop.xlane.xlu0 %1251
      %v1253 = vsel %vm1012, %v1174, 0.0
      %1254 = vadd.xlane.f32.xlu0 %v1253
      %v1255 = vpop.xlane.xlu0 %1254
      %v1256 = vsel %vm1012, %v1176, 0.0
      %1257 = vadd.xlane.f32.xlu0 %v1256
      %v1258 = vpop.xlane.xlu0 %1257
      %v1259 = vsel %vm1012, %v1178, 0.0
      %1260 = vadd.xlane.f32.xlu0 %v1259
      %v1261 = vpop.xlane.xlu0 %1260
      %v1262 = vsel %vm1012, %v1180, 0.0
      %1263 = vadd.xlane.f32.xlu0 %v1262
      %v1264 = vpop.xlane.xlu0 %1263
      %v1265 = vsel %vm1012, %v1182, 0.0
      %1266 = vadd.xlane.f32.xlu0 %v1265
      %v1267 = vpop.xlane.xlu0 %1266
      %v1268 = vsel %vm1012, %v1184, 0.0
      %1269 = vadd.xlane.f32.xlu0 %v1268
      %v1270 = vpop.xlane.xlu0 %1269
      %v1271 = vsel %vm1012, %v1186, 0.0
      %1272 = vadd.xlane.f32.xlu0 %v1271
      %v1273 = vpop.xlane.xlu0 %1272
      %v1274 = vsel %vm1012, %v1188, 0.0
      %1275 = vadd.xlane.f32.xlu0 %v1274
      %v1276 = vpop.xlane.xlu0 %1275
      %v1277 = vsel %vm1012, %v1190, 0.0
      %1278 = vadd.xlane.f32.xlu0 %v1277
      %v1279 = vpop.xlane.xlu0 %1278
      %v1280 = vsel %vm1012, %v1192, 0.0
      %1281 = vadd.xlane.f32.xlu0 %v1280
      %v1282 = vpop.xlane.xlu0 %1281
      %v1283 = vsel %vm1012, %v1194, 0.0
      %1284 = vadd.xlane.f32.xlu0 %v1283
      %v1285 = vpop.xlane.xlu0 %1284
      %v1286 = vsel %vm1012, %v1196, 0.0
      %1287 = vadd.xlane.f32.xlu0 %v1286
      %v1288 = vpop.xlane.xlu0 %1287
      %v1289 = vsel %vm1012, %v1198, 0.0
      %1290 = vadd.xlane.f32.xlu0 %v1289
      %v1291 = vpop.xlane.xlu0 %1290
      %v1292 = vsel %vm1012, %v1200, 0.0
      %1293 = vadd.xlane.f32.xlu0 %v1292
      %v1294 = vpop.xlane.xlu0 %1293
      %v1295 = vsel %vm1012, %v1202, 0.0
      %1296 = vadd.xlane.f32.xlu0 %v1295
      %v1297 = vpop.xlane.xlu0 %1296
      %v1298 = vsel %vm1012, %v1204, 0.0
      %1299 = vadd.xlane.f32.xlu0 %v1298
      %v1300 = vpop.xlane.xlu0 %1299
      %v1301 = vrcp.pop %v1207
      %v1302 = vrcp.pop %v1210
      %v1303 = vrcp.pop %v1213
      %v1304 = vrcp.pop %v1216
      %v1305 = vrcp.pop %v1219
      %v1306 = vrcp.pop %v1222
      %v1307 = vrcp.pop %v1225
      %v1308 = vrcp.pop %v1228
      %v1309 = vrcp.pop %v1231
      %v1310 = vrcp.pop %v1234
      %v1311 = vrcp.pop %v1237
      %v1312 = vrcp.pop %v1240
      %v1313 = vrcp.pop %v1243
      %v1314 = vrcp.pop %v1246
      %v1315 = vrcp.pop %v1249
      %v1316 = vrcp.pop %v1252
      %v1317 = vrcp.pop %v1255
      %v1318 = vrcp.pop %v1258
      %v1319 = vrcp.pop %v1261
      %v1320 = vrcp.pop %v1264
      %v1321 = vrcp.pop %v1267
      %v1322 = vrcp.pop %v1270
      %v1323 = vrcp.pop %v1273
      %v1324 = vrcp.pop %v1276
      %v1325 = vrcp.pop %v1279
      %v1326 = vrcp.pop %v1282
      %v1327 = vrcp.pop %v1285
      %v1328 = vrcp.pop %v1288
      %v1329 = vrcp.pop %v1291
      %v1330 = vrcp.pop %v1294
      %v1331 = vrcp.pop %v1297
      %v1332 = vrcp.pop %v1300
      %v1333 = vmul.f32 %v1142, %v1301
      %v1334 = vmul.f32 %v1144, %v1302
      %v1335 = vmul.f32 %v1146, %v1303
      %v1336 = vmul.f32 %v1148, %v1304
      %v1337 = vmul.f32 %v1150, %v1305
      %v1338 = vmul.f32 %v1152, %v1306
      %v1339 = vmul.f32 %v1154, %v1307
      %v1340 = vmul.f32 %v1156, %v1308
      %v1341 = vmul.f32 %v1158, %v1309
      %v1342 = vmul.f32 %v1160, %v1310
      %v1343 = vmul.f32 %v1162, %v1311
      %v1344 = vmul.f32 %v1164, %v1312
      %v1345 = vmul.f32 %v1166, %v1313
      %v1346 = vmul.f32 %v1168, %v1314
      %v1347 = vmul.f32 %v1170, %v1315
      %v1348 = vmul.f32 %v1172, %v1316
      %v1349 = vmul.f32 %v1174, %v1317
      %v1350 = vmul.f32 %v1176, %v1318
      %v1351 = vmul.f32 %v1178, %v1319
      %v1352 = vmul.f32 %v1180, %v1320
      %v1353 = vmul.f32 %v1182, %v1321
      %v1354 = vmul.f32 %v1184, %v1322
      %v1355 = vmul.f32 %v1186, %v1323
      %v1356 = vmul.f32 %v1188, %v1324
      %v1357 = vmul.f32 %v1190, %v1325
      %v1358 = vmul.f32 %v1192, %v1326
      %v1359 = vmul.f32 %v1194, %v1327
      %v1360 = vmul.f32 %v1196, %v1328
      %v1361 = vmul.f32 %v1198, %v1329
      %v1362 = vmul.f32 %v1200, %v1330
      %v1363 = vmul.f32 %v1202, %v1331
      %v1364 = vmul.f32 %v1204, %v1332
      %v1365 = vpack.c.bf16 %v1334, %v1333
      %v1366 = vpack.c.bf16 %v1336, %v1335
      %v1367 = vpack.c.bf16 %v1338, %v1337
      %v1368 = vpack.c.bf16 %v1340, %v1339
      %v1369 = vpack.c.bf16 %v1342, %v1341
      %v1370 = vpack.c.bf16 %v1344, %v1343
      %v1371 = vpack.c.bf16 %v1346, %v1345
      %v1372 = vpack.c.bf16 %v1348, %v1347
      %v1373 = vpack.c.bf16 %v1350, %v1349
      %v1374 = vpack.c.bf16 %v1352, %v1351
      %v1375 = vpack.c.bf16 %v1354, %v1353
      %v1376 = vpack.c.bf16 %v1356, %v1355
      %v1377 = vpack.c.bf16 %v1358, %v1357
      %v1378 = vpack.c.bf16 %v1360, %v1359
      %v1379 = vpack.c.bf16 %v1362, %v1361
      %v1380 = vpack.c.bf16 %v1364, %v1363
      %v1389 = vunpack.c.l.b16 %v431
      %v1390 = vunpack.c.l.b16 %v432
      %v1391 = vunpack.c.l.b16 %v433
      %v1392 = vunpack.c.l.b16 %v434
      %v1393 = vunpack.c.l.b16 %v435
      %v1394 = vunpack.c.l.b16 %v436
      %v1395 = vunpack.c.l.b16 %v437
      %v1396 = vunpack.c.l.b16 %v438
      %v1397 = vpack.c.b16 %v1390, %v1389
      %v1398 = vpack.c.b16 %v1392, %v1391
      %v1399 = vpack.c.b16 %v1394, %v1393
      %v1400 = vpack.c.b16 %v1396, %v1395
      %v1406 = vsel %vm1012, %v1365, 0
      %v1409 = vsel %vm1012, %v1366, 0
      %v1412 = vsel %vm1012, %v1367, 0
      %v1415 = vsel %vm1012, %v1368, 0
      %1417 = vmatprep.subr.bf16.mxu0 0
      %1418 = vmatpush1.bf16.msra.mxu0 %v1397
      %1419 = vmatprep.subr.bf16.mxu0 0
      %1420 = vmatpush1.bf16.msra.mxu0 %v1398
      %1421 = vmatprep.subr.bf16.mxu0 0
      %1422 = vmatpush1.bf16.msra.mxu0 %v1399
      %1423 = vmatprep.subr.bf16.mxu0 0
      %1424 = vmatpush1.bf16.msra.mxu0 %v1400
      %1425 = vmatprep.subr.bf16.mxu0 0
      %1426 = vmatpush1.bf16.msra.mxu0 0
      %1427 = vmatprep.subr.bf16.mxu0 0
      %1428 = vmatpush1.bf16.msra.mxu0 0
      %1429 = vmatprep.subr.bf16.mxu0 0
      %1430 = vmatpush1.bf16.msra.mxu0 0
      %1431 = vmatprep.subr.bf16.mxu0 0
      %1432 = vmatpush1.bf16.msra.mxu0 0
      %1433 = vmatprep.subr.bf16.mxu0 0
      %1434 = vmatpush1.bf16.msra.mxu0 0
      %1435 = vmatprep.subr.bf16.mxu0 0
      %1436 = vmatpush1.bf16.msra.mxu0 0
      %1437 = vmatprep.subr.bf16.mxu0 0
      %1438 = vmatpush1.bf16.msra.mxu0 0
      %1439 = vmatprep.subr.bf16.mxu0 0
      %1440 = vmatpush1.bf16.msra.mxu0 0
      %1441 = vmatprep.subr.bf16.mxu0 0
      %1442 = vmatpush1.bf16.msra.mxu0 0
      %1443 = vmatprep.subr.bf16.mxu0 0
      %1444 = vmatpush1.bf16.msra.mxu0 0
      %1445 = vmatprep.subr.bf16.mxu0 0
      %1446 = vmatpush1.bf16.msra.mxu0 0
      %1447 = vmatprep.subr.bf16.mxu0 0
      %1448 = vmatpush1.bf16.msra.mxu0 0
      %1449 = vmatprep.mubr.bf16.mxu0 0
      %1450 = vmatmul.mubr.bf16.gmra.mrb[0].mxu0 %v1406
      %v1451 = vpop.f32.mrb[0].mxu0
      %v1452 = vadd.f32 0.0, %v1451
      %v1453 = vpop.f32.mrb[0].mxu0
      %v1454 = vpop.f32.mrb[0].mxu0
      %v1455 = vadd.f32 0.0, %v1454
      %v1456 = vpop.f32.mrb[0].mxu0
      %1457 = vmatprep.mubr.bf16.mxu0 0
      %1458 = vmatmul.mubr.bf16.gmra.mrb[0].mxu0 %v1409
      %v1459 = vpop.f32.mrb[0].mxu0
      %v1460 = vadd.f32 0.0, %v1459
      %v1461 = vpop.f32.mrb[0].mxu0
      %v1462 = vpop.f32.mrb[0].mxu0
      %v1463 = vadd.f32 0.0, %v1462
      %v1464 = vpop.f32.mrb[0].mxu0
      %1465 = vmatprep.mubr.bf16.mxu0 0
      %1466 = vmatmul.mubr.bf16.gmra.mrb[0].mxu0 %v1412
      %v1467 = vpop.f32.mrb[0].mxu0
      %v1468 = vadd.f32 0.0, %v1467
      %v1469 = vpop.f32.mrb[0].mxu0
      %v1470 = vpop.f32.mrb[0].mxu0
      %v1471 = vadd.f32 0.0, %v1470
      %v1472 = vpop.f32.mrb[0].mxu0
      %1473 = vmatprep.mubr.bf16.mxu0 0
      %1474 = vmatmul.mubr.bf16.gmra.mrb[0].mxu0 %v1415
      %v1475 = vpop.f32.mrb[0].mxu0
      %v1476 = vadd.f32 0.0, %v1475
      %v1477 = vpop.f32.mrb[0].mxu0
      %v1478 = vpop.f32.mrb[0].mxu0
      %v1479 = vadd.f32 0.0, %v1478
      %v1480 = vpop.f32.mrb[0].mxu0
      %1481 = vdwg.mxu0
      %v1490 = vunpack.c.l.b16 %v439
      %v1491 = vunpack.c.l.b16 %v440
      %v1492 = vunpack.c.l.b16 %v441
      %v1493 = vunpack.c.l.b16 %v442
      %v1494 = vunpack.c.l.b16 %v443
      %v1495 = vunpack.c.l.b16 %v444
      %v1496 = vunpack.c.l.b16 %v445
      %v1497 = vunpack.c.l.b16 %v446
      %v1498 = vpack.c.b16 %v1491, %v1490
      %v1499 = vpack.c.b16 %v1493, %v1492
      %v1500 = vpack.c.b16 %v1495, %v1494
      %v1501 = vpack.c.b16 %v1497, %v1496
      %v1507 = vsel %vm1012, %v1369, 0
      %v1510 = vsel %vm1012, %v1370, 0
      %v1513 = vsel %vm1012, %v1371, 0
      %v1516 = vsel %vm1012, %v1372, 0
      %1518 = vmatprep.subr.bf16.mxu0 0
      %1519 = vmatpush1.bf16.msra.mxu0 %v1498
      %1520 = vmatprep.subr.bf16.mxu0 0
      %1521 = vmatpush1.bf16.msra.mxu0 %v1499
      %1522 = vmatprep.subr.bf16.mxu0 0
      %1523 = vmatpush1.bf16.msra.mxu0 %v1500
      %1524 = vmatprep.subr.bf16.mxu0 0
      %1525 = vmatpush1.bf16.msra.mxu0 %v1501
      %1526 = vmatprep.subr.bf16.mxu0 0
      %1527 = vmatpush1.bf16.msra.mxu0 0
      %1528 = vmatprep.subr.bf16.mxu0 0
      %1529 = vmatpush1.bf16.msra.mxu0 0
      %1530 = vmatprep.subr.bf16.mxu0 0
      %1531 = vmatpush1.bf16.msra.mxu0 0
      %1532 = vmatprep.subr.bf16.mxu0 0
      %1533 = vmatpush1.bf16.msra.mxu0 0
      %1534 = vmatprep.subr.bf16.mxu0 0
      %1535 = vmatpush1.bf16.msra.mxu0 0
      %1536 = vmatprep.subr.bf16.mxu0 0
      %1537 = vmatpush1.bf16.msra.mxu0 0
      %1538 = vmatprep.subr.bf16.mxu0 0
      %1539 = vmatpush1.bf16.msra.mxu0 0
      %1540 = vmatprep.subr.bf16.mxu0 0
      %1541 = vmatpush1.bf16.msra.mxu0 0
      %1542 = vmatprep.subr.bf16.mxu0 0
      %1543 = vmatpush1.bf16.msra.mxu0 0
      %1544 = vmatprep.subr.bf16.mxu0 0
      %1545 = vmatpush1.bf16.msra.mxu0 0
      %1546 = vmatprep.subr.bf16.mxu0 0
      %1547 = vmatpush1.bf16.msra.mxu0 0
      %1548 = vmatprep.subr.bf16.mxu0 0
      %1549 = vmatpush1.bf16.msra.mxu0 0
      %1550 = vmatprep.mubr.bf16.mxu0 0
      %1551 = vmatmul.mubr.bf16.gmra.mrb[0].mxu0 %v1507
      %v1552 = vpop.f32.mrb[0].mxu0
      %v1553 = vadd.f32 0.0, %v1552
      %v1554 = vpop.f32.mrb[0].mxu0
      %v1555 = vpop.f32.mrb[0].mxu0
      %v1556 = vadd.f32 0.0, %v1555
      %v1557 = vpop.f32.mrb[0].mxu0
      %1558 = vmatprep.mubr.bf16.mxu0 0
      %1559 = vmatmul.mubr.bf16.gmra.mrb[0].mxu0 %v1510
      %v1560 = vpop.f32.mrb[0].mxu0
      %v1561 = vadd.f32 0.0, %v1560
      %v1562 = vpop.f32.mrb[0].mxu0
      %v1563 = vpop.f32.mrb[0].mxu0
      %v1564 = vadd.f32 0.0, %v1563
      %v1565 = vpop.f32.mrb[0].mxu0
      %1566 = vmatprep.mubr.bf16.mxu0 0
      %1567 = vmatmul.mubr.bf16.gmra.mrb[0].mxu0 %v1513
      %v1568 = vpop.f32.mrb[0].mxu0
      %v1569 = vadd.f32 0.0, %v1568
      %v1570 = vpop.f32.mrb[0].mxu0
      %v1571 = vpop.f32.mrb[0].mxu0
      %v1572 = vadd.f32 0.0, %v1571
      %v1573 = vpop.f32.mrb[0].mxu0
      %1574 = vmatprep.mubr.bf16.mxu0 0
      %1575 = vmatmul.mubr.bf16.gmra.mrb[0].mxu0 %v1516
      %v1576 = vpop.f32.mrb[0].mxu0
      %v1577 = vadd.f32 0.0, %v1576
      %v1578 = vpop.f32.mrb[0].mxu0
      %v1579 = vpop.f32.mrb[0].mxu0
      %v1580 = vadd.f32 0.0, %v1579
      %v1581 = vpop.f32.mrb[0].mxu0
      %1582 = vdwg.mxu0
      %v1591 = vunpack.c.l.b16 %v447
      %v1592 = vunpack.c.l.b16 %v448
      %v1593 = vunpack.c.l.b16 %v449
      %v1594 = vunpack.c.l.b16 %v450
      %v1595 = vunpack.c.l.b16 %v451
      %v1596 = vunpack.c.l.b16 %v452
      %v1597 = vunpack.c.l.b16 %v453
      %v1598 = vunpack.c.l.b16 %v454
      %v1599 = vpack.c.b16 %v1592, %v1591
      %v1600 = vpack.c.b16 %v1594, %v1593
      %v1601 = vpack.c.b16 %v1596, %v1595
      %v1602 = vpack.c.b16 %v1598, %v1597
      %v1608 = vsel %vm1012, %v1373, 0
      %v1611 = vsel %vm1012, %v1374, 0
      %v1614 = vsel %vm1012, %v1375, 0
      %v1617 = vsel %vm1012, %v1376, 0
      %1619 = vmatprep.subr.bf16.mxu0 0
      %1620 = vmatpush1.bf16.msra.mxu0 %v1599
      %1621 = vmatprep.subr.bf16.mxu0 0
      %1622 = vmatpush1.bf16.msra.mxu0 %v1600
      %1623 = vmatprep.subr.bf16.mxu0 0
      %1624 = vmatpush1.bf16.msra.mxu0 %v1601
      %1625 = vmatprep.subr.bf16.mxu0 0
      %1626 = vmatpush1.bf16.msra.mxu0 %v1602
      %1627 = vmatprep.subr.bf16.mxu0 0
      %1628 = vmatpush1.bf16.msra.mxu0 0
      %1629 = vmatprep.subr.bf16.mxu0 0
      %1630 = vmatpush1.bf16.msra.mxu0 0
      %1631 = vmatprep.subr.bf16.mxu0 0
      %1632 = vmatpush1.bf16.msra.mxu0 0
      %1633 = vmatprep.subr.bf16.mxu0 0
      %1634 = vmatpush1.bf16.msra.mxu0 0
      %1635 = vmatprep.subr.bf16.mxu0 0
      %1636 = vmatpush1.bf16.msra.mxu0 0
      %1637 = vmatprep.subr.bf16.mxu0 0
      %1638 = vmatpush1.bf16.msra.mxu0 0
      %1639 = vmatprep.subr.bf16.mxu0 0
      %1640 = vmatpush1.bf16.msra.mxu0 0
      %1641 = vmatprep.subr.bf16.mxu0 0
      %1642 = vmatpush1.bf16.msra.mxu0 0
      %1643 = vmatprep.subr.bf16.mxu0 0
      %1644 = vmatpush1.bf16.msra.mxu0 0
      %1645 = vmatprep.subr.bf16.mxu0 0
      %1646 = vmatpush1.bf16.msra.mxu0 0
      %1647 = vmatprep.subr.bf16.mxu0 0
      %1648 = vmatpush1.bf16.msra.mxu0 0
      %1649 = vmatprep.subr.bf16.mxu0 0
      %1650 = vmatpush1.bf16.msra.mxu0 0
      %1651 = vmatprep.mubr.bf16.mxu0 0
      %1652 = vmatmul.mubr.bf16.gmra.mrb[0].mxu0 %v1608
      %v1653 = vpop.f32.mrb[0].mxu0
      %v1654 = vadd.f32 0.0, %v1653
      %v1655 = vpop.f32.mrb[0].mxu0
      %v1656 = vpop.f32.mrb[0].mxu0
      %v1657 = vadd.f32 0.0, %v1656
      %v1658 = vpop.f32.mrb[0].mxu0
      %1659 = vmatprep.mubr.bf16.mxu0 0
      %1660 = vmatmul.mubr.bf16.gmra.mrb[0].mxu0 %v1611
      %v1661 = vpop.f32.mrb[0].mxu0
      %v1662 = vadd.f32 0.0, %v1661
      %v1663 = vpop.f32.mrb[0].mxu0
      %v1664 = vpop.f32.mrb[0].mxu0
      %v1665 = vadd.f32 0.0, %v1664
      %v1666 = vpop.f32.mrb[0].mxu0
      %1667 = vmatprep.mubr.bf16.mxu0 0
      %1668 = vmatmul.mubr.bf16.gmra.mrb[0].mxu0 %v1614
      %v1669 = vpop.f32.mrb[0].mxu0
      %v1670 = vadd.f32 0.0, %v1669
      %v1671 = vpop.f32.mrb[0].mxu0
      %v1672 = vpop.f32.mrb[0].mxu0
      %v1673 = vadd.f32 0.0, %v1672
      %v1674 = vpop.f32.mrb[0].mxu0
      %1675 = vmatprep.mubr.bf16.mxu0 0
      %1676 = vmatmul.mubr.bf16.gmra.mrb[0].mxu0 %v1617
      %v1677 = vpop.f32.mrb[0].mxu0
      %v1678 = vadd.f32 0.0, %v1677
      %v1679 = vpop.f32.mrb[0].mxu0
      %v1680 = vpop.f32.mrb[0].mxu0
      %v1681 = vadd.f32 0.0, %v1680
      %v1682 = vpop.f32.mrb[0].mxu0
      %1683 = vdwg.mxu0
      %v1692 = vunpack.c.l.b16 %v455
      %v1693 = vunpack.c.l.b16 %v456
      %v1694 = vunpack.c.l.b16 %v457
      %v1695 = vunpack.c.l.b16 %v458
      %v1696 = vunpack.c.l.b16 %v459
      %v1697 = vunpack.c.l.b16 %v460
      %v1698 = vunpack.c.l.b16 %v461
      %v1699 = vunpack.c.l.b16 %v462
      %v1700 = vpack.c.b16 %v1693, %v1692
      %v1701 = vpack.c.b16 %v1695, %v1694
      %v1702 = vpack.c.b16 %v1697, %v1696
      %v1703 = vpack.c.b16 %v1699, %v1698
      %v1709 = vsel %vm1012, %v1377, 0
      %v1712 = vsel %vm1012, %v1378, 0
      %v1715 = vsel %vm1012, %v1379, 0
      %v1718 = vsel %vm1012, %v1380, 0
      %1720 = vmatprep.subr.bf16.mxu0 0
      %1721 = vmatpush1.bf16.msra.mxu0 %v1700
      %1722 = vmatprep.subr.bf16.mxu0 0
      %1723 = vmatpush1.bf16.msra.mxu0 %v1701
      %1724 = vmatprep.subr.bf16.mxu0 0
      %1725 = vmatpush1.bf16.msra.mxu0 %v1702
      %1726 = vmatprep.subr.bf16.mxu0 0
      %1727 = vmatpush1.bf16.msra.mxu0 %v1703
      %1728 = vmatprep.subr.bf16.mxu0 0
      %1729 = vmatpush1.bf16.msra.mxu0 0
      %1730 = vmatprep.subr.bf16.mxu0 0
      %1731 = vmatpush1.bf16.msra.mxu0 0
      %1732 = vmatprep.subr.bf16.mxu0 0
      %1733 = vmatpush1.bf16.msra.mxu0 0
      %1734 = vmatprep.subr.bf16.mxu0 0
      %1735 = vmatpush1.bf16.msra.mxu0 0
      %1736 = vmatprep.subr.bf16.mxu0 0
      %1737 = vmatpush1.bf16.msra.mxu0 0
      %1738 = vmatprep.subr.bf16.mxu0 0
      %1739 = vmatpush1.bf16.msra.mxu0 0
      %1740 = vmatprep.subr.bf16.mxu0 0
      %1741 = vmatpush1.bf16.msra.mxu0 0
      %1742 = vmatprep.subr.bf16.mxu0 0
      %1743 = vmatpush1.bf16.msra.mxu0 0
      %1744 = vmatprep.subr.bf16.mxu0 0
      %1745 = vmatpush1.bf16.msra.mxu0 0
      %1746 = vmatprep.subr.bf16.mxu0 0
      %1747 = vmatpush1.bf16.msra.mxu0 0
      %1748 = vmatprep.subr.bf16.mxu0 0
      %1749 = vmatpush1.bf16.msra.mxu0 0
      %1750 = vmatprep.subr.bf16.mxu0 0
      %1751 = vmatpush1.bf16.msra.mxu0 0
      %1752 = vmatprep.mubr.bf16.mxu0 0
      %1753 = vmatmul.mubr.bf16.gmra.mrb[0].mxu0 %v1709
      %v1754 = vpop.f32.mrb[0].mxu0
      %v1755 = vadd.f32 0.0, %v1754
      %v1756 = vpop.f32.mrb[0].mxu0
      %v1757 = vpop.f32.mrb[0].mxu0
      %v1758 = vadd.f32 0.0, %v1757
      %v1759 = vpop.f32.mrb[0].mxu0
      %1760 = vmatprep.mubr.bf16.mxu0 0
      %1761 = vmatmul.mubr.bf16.gmra.mrb[0].mxu0 %v1712
      %v1762 = vpop.f32.mrb[0].mxu0
      %v1763 = vadd.f32 0.0, %v1762
      %v1764 = vpop.f32.mrb[0].mxu0
      %v1765 = vpop.f32.mrb[0].mxu0
      %v1766 = vadd.f32 0.0, %v1765
      %v1767 = vpop.f32.mrb[0].mxu0
      %1768 = vmatprep.mubr.bf16.mxu0 0
      %1769 = vmatmul.mubr.bf16.gmra.mrb[0].mxu0 %v1715
      %v1770 = vpop.f32.mrb[0].mxu0
      %v1771 = vadd.f32 0.0, %v1770
      %v1772 = vpop.f32.mrb[0].mxu0
      %v1773 = vpop.f32.mrb[0].mxu0
      %v1774 = vadd.f32 0.0, %v1773
      %v1775 = vpop.f32.mrb[0].mxu0
      %1776 = vmatprep.mubr.bf16.mxu0 0
      %1777 = vmatmul.mubr.bf16.gmra.mrb[0].mxu0 %v1718
      %v1778 = vpop.f32.mrb[0].mxu0
      %v1779 = vadd.f32 0.0, %v1778
      %v1780 = vpop.f32.mrb[0].mxu0
      %v1781 = vpop.f32.mrb[0].mxu0
      %v1782 = vadd.f32 0.0, %v1781
      %v1783 = vpop.f32.mrb[0].mxu0
      %1784 = vdwg.mxu0
      %v1785 = vpack.c.bf16 %v1455, %v1452
      %v1786 = vpack.c.bf16 %v1463, %v1460
      %v1787 = vpack.c.bf16 %v1471, %v1468
      %v1788 = vpack.c.bf16 %v1479, %v1476
      %v1789 = vld [vmem:[%s4] sm:$0xf]
      %v1790 = vpack.c.bf16 %v1556, %v1553
      %v1791 = vpack.c.bf16 %v1564, %v1561
      %v1792 = vpack.c.bf16 %v1572, %v1569
      %v1793 = vpack.c.bf16 %v1580, %v1577
      %s1794 = scalar_lea.vmem %s4, 4
      %v1795 = vld [vmem:[%s1794] sm:$0xf]
      %v1797 = vsel %vm503, %v1790, 0
      %v1800 = vsel %vm503, %v1791, 0
      %v1803 = vsel %vm503, %v1792, 0
      %v1806 = vsel %vm503, %v1793, 0
      %vm1808 = vcmask 1043456
      %v1810 = vsel %vm1808, %v1795, 0
      %1812 = vmatprep.subr.bf16.mxu0 0
      %1813 = vmatpush1.bf16.msra.mxu0 %v1810
      %1814 = vmatprep.subr.bf16.mxu0 0
      %1815 = vmatpush1.bf16.msra.mxu0 0
      %1816 = vmatprep.subr.bf16.mxu0 0
      %1817 = vmatpush1.bf16.msra.mxu0 0
      %1818 = vmatprep.subr.bf16.mxu0 0
      %1819 = vmatpush1.bf16.msra.mxu0 0
      %1820 = vmatprep.subr.bf16.mxu0 0
      %1821 = vmatpush1.bf16.msra.mxu0 0
      %1822 = vmatprep.subr.bf16.mxu0 0
      %1823 = vmatpush1.bf16.msra.mxu0 0
      %1824 = vmatprep.subr.bf16.mxu0 0
      %1825 = vmatpush1.bf16.msra.mxu0 0
      %1826 = vmatprep.subr.bf16.mxu0 0
      %1827 = vmatpush1.bf16.msra.mxu0 0
      %1828 = vmatprep.subr.bf16.mxu0 0
      %1829 = vmatpush1.bf16.msra.mxu0 0
      %1830 = vmatprep.subr.bf16.mxu0 0
      %1831 = vmatpush1.bf16.msra.mxu0 0
      %1832 = vmatprep.subr.bf16.mxu0 0
      %1833 = vmatpush1.bf16.msra.mxu0 0
      %1834 = vmatprep.subr.bf16.mxu0 0
      %1835 = vmatpush1.bf16.msra.mxu0 0
      %1836 = vmatprep.subr.bf16.mxu0 0
      %1837 = vmatpush1.bf16.msra.mxu0 0
      %1838 = vmatprep.subr.bf16.mxu0 0
      %1839 = vmatpush1.bf16.msra.mxu0 0
      %1840 = vmatprep.subr.bf16.mxu0 0
      %1841 = vmatpush1.bf16.msra.mxu0 0
      %1842 = vmatprep.subr.bf16.mxu0 0
      %1843 = vmatpush1.bf16.msra.mxu0 0
      %1844 = vmatprep.mubr.bf16.mxu0 0
      %1845 = vmatmul.mubr.bf16.gmra.mrb[0].mxu0 %v1797
      %v1846 = vpop.f32.mrb[0].mxu0
      %v1847 = vadd.f32 0.0, %v1846
      %v1848 = vpop.f32.mrb[0].mxu0
      %v1849 = vpop.f32.mrb[0].mxu0
      %v1850 = vadd.f32 0.0, %v1849
      %v1851 = vpop.f32.mrb[0].mxu0
      %1852 = vmatprep.mubr.bf16.mxu0 0
      %1853 = vmatmul.mubr.bf16.gmra.mrb[0].mxu0 %v1800
      %v1854 = vpop.f32.mrb[0].mxu0
      %v1855 = vadd.f32 0.0, %v1854
      %v1856 = vpop.f32.mrb[0].mxu0
      %v1857 = vpop.f32.mrb[0].mxu0
      %v1858 = vadd.f32 0.0, %v1857
      %v1859 = vpop.f32.mrb[0].mxu0
      %1860 = vmatprep.mubr.bf16.mxu0 0
      %1861 = vmatmul.mubr.bf16.gmra.mrb[0].mxu0 %v1803
      %v1862 = vpop.f32.mrb[0].mxu0
      %v1863 = vadd.f32 0.0, %v1862
      %v1864 = vpop.f32.mrb[0].mxu0
      %v1865 = vpop.f32.mrb[0].mxu0
      %v1866 = vadd.f32 0.0, %v1865
      %v1867 = vpop.f32.mrb[0].mxu0
      %1868 = vmatprep.mubr.bf16.mxu0 0
      %1869 = vmatmul.mubr.bf16.gmra.mrb[0].mxu0 %v1806
      %v1870 = vpop.f32.mrb[0].mxu0
      %v1871 = vadd.f32 0.0, %v1870
      %v1872 = vpop.f32.mrb[0].mxu0
      %v1873 = vpop.f32.mrb[0].mxu0
      %v1874 = vadd.f32 0.0, %v1873
      %v1875 = vpop.f32.mrb[0].mxu0
      %1876 = vdwg.mxu0
      %v1878 = vsel %vm503, %v1785, 0
      %v1881 = vsel %vm503, %v1786, 0
      %v1884 = vsel %vm503, %v1787, 0
      %v1887 = vsel %vm503, %v1788, 0
      %v1890 = vsel %vm1808, %v1789, 0
      %1892 = vmatprep.subr.bf16.mxu0 0
      %1893 = vmatpush1.bf16.msra.mxu0 %v1890
      %1894 = vmatprep.subr.bf16.mxu0 0
      %1895 = vmatpush1.bf16.msra.mxu0 0
      %1896 = vmatprep.subr.bf16.mxu0 0
      %1897 = vmatpush1.bf16.msra.mxu0 0
      %1898 = vmatprep.subr.bf16.mxu0 0
      %1899 = vmatpush1.bf16.msra.mxu0 0
      %1900 = vmatprep.subr.bf16.mxu0 0
      %1901 = vmatpush1.bf16.msra.mxu0 0
      %1902 = vmatprep.subr.bf16.mxu0 0
      %1903 = vmatpush1.bf16.msra.mxu0 0
      %1904 = vmatprep.subr.bf16.mxu0 0
      %1905 = vmatpush1.bf16.msra.mxu0 0
      %1906 = vmatprep.subr.bf16.mxu0 0
      %1907 = vmatpush1.bf16.msra.mxu0 0
      %1908 = vmatprep.subr.bf16.mxu0 0
      %1909 = vmatpush1.bf16.msra.mxu0 0
      %1910 = vmatprep.subr.bf16.mxu0 0
      %1911 = vmatpush1.bf16.msra.mxu0 0
      %1912 = vmatprep.subr.bf16.mxu0 0
      %1913 = vmatpush1.bf16.msra.mxu0 0
      %1914 = vmatprep.subr.bf16.mxu0 0
      %1915 = vmatpush1.bf16.msra.mxu0 0
      %1916 = vmatprep.subr.bf16.mxu0 0
      %1917 = vmatpush1.bf16.msra.mxu0 0
      %1918 = vmatprep.subr.bf16.mxu0 0
      %1919 = vmatpush1.bf16.msra.mxu0 0
      %1920 = vmatprep.subr.bf16.mxu0 0
      %1921 = vmatpush1.bf16.msra.mxu0 0
      %1922 = vmatprep.subr.bf16.mxu0 0
      %1923 = vmatpush1.bf16.msra.mxu0 0
      %1924 = vmatprep.mubr.bf16.mxu0 0
      %1925 = vmatmul.mubr.bf16.gmra.mrb[0].mxu0 %v1878
      %v1926 = vpop.f32.mrb[0].mxu0
      %v1927 = vadd.f32 %v1847, %v1926
      %v1928 = vpop.f32.mrb[0].mxu0
      %v1929 = vpop.f32.mrb[0].mxu0
      %v1930 = vadd.f32 %v1850, %v1929
      %v1931 = vpop.f32.mrb[0].mxu0
      %1932 = vmatprep.mubr.bf16.mxu0 0
      %1933 = vmatmul.mubr.bf16.gmra.mrb[0].mxu0 %v1881
      %v1934 = vpop.f32.mrb[0].mxu0
      %v1935 = vadd.f32 %v1855, %v1934
      %v1936 = vpop.f32.mrb[0].mxu0
      %v1937 = vpop.f32.mrb[0].mxu0
      %v1938 = vadd.f32 %v1858, %v1937
      %v1939 = vpop.f32.mrb[0].mxu0
      %1940 = vmatprep.mubr.bf16.mxu0 0
      %1941 = vmatmul.mubr.bf16.gmra.mrb[0].mxu0 %v1884
      %v1942 = vpop.f32.mrb[0].mxu0
      %v1943 = vadd.f32 %v1863, %v1942
      %v1944 = vpop.f32.mrb[0].mxu0
      %v1945 = vpop.f32.mrb[0].mxu0
      %v1946 = vadd.f32 %v1866, %v1945
      %v1947 = vpop.f32.mrb[0].mxu0
      %1948 = vmatprep.mubr.bf16.mxu0 0
      %1949 = vmatmul.mubr.bf16.gmra.mrb[0].mxu0 %v1887
      %v1950 = vpop.f32.mrb[0].mxu0
      %v1951 = vadd.f32 %v1871, %v1950
      %v1952 = vpop.f32.mrb[0].mxu0
      %v1953 = vpop.f32.mrb[0].mxu0
      %v1954 = vadd.f32 %v1874, %v1953
      %v1955 = vpop.f32.mrb[0].mxu0
      %1956 = vdwg.mxu0
      %v1957 = vpack.c.bf16 %v1657, %v1654
      %v1958 = vpack.c.bf16 %v1665, %v1662
      %v1959 = vpack.c.bf16 %v1673, %v1670
      %v1960 = vpack.c.bf16 %v1681, %v1678
      %s1961 = scalar_lea.vmem %s4, 8
      %v1962 = vld [vmem:[%s1961] sm:$0xf]
      %v1964 = vsel %vm503, %v1957, 0
      %v1967 = vsel %vm503, %v1958, 0
      %v1970 = vsel %vm503, %v1959, 0
      %v1973 = vsel %vm503, %v1960, 0
      %v1976 = vsel %vm1808, %v1962, 0
      %1978 = vmatprep.subr.bf16.mxu0 0
      %1979 = vmatpush1.bf16.msra.mxu0 %v1976
      %1980 = vmatprep.subr.bf16.mxu0 0
      %1981 = vmatpush1.bf16.msra.mxu0 0
      %1982 = vmatprep.subr.bf16.mxu0 0
      %1983 = vmatpush1.bf16.msra.mxu0 0
      %1984 = vmatprep.subr.bf16.mxu0 0
      %1985 = vmatpush1.bf16.msra.mxu0 0
      %1986 = vmatprep.subr.bf16.mxu0 0
      %1987 = vmatpush1.bf16.msra.mxu0 0
      %1988 = vmatprep.subr.bf16.mxu0 0
      %1989 = vmatpush1.bf16.msra.mxu0 0
      %1990 = vmatprep.subr.bf16.mxu0 0
      %1991 = vmatpush1.bf16.msra.mxu0 0
      %1992 = vmatprep.subr.bf16.mxu0 0
      %1993 = vmatpush1.bf16.msra.mxu0 0
      %1994 = vmatprep.subr.bf16.mxu0 0
      %1995 = vmatpush1.bf16.msra.mxu0 0
      %1996 = vmatprep.subr.bf16.mxu0 0
      %1997 = vmatpush1.bf16.msra.mxu0 0
      %1998 = vmatprep.subr.bf16.mxu0 0
      %1999 = vmatpush1.bf16.msra.mxu0 0
      %2000 = vmatprep.subr.bf16.mxu0 0
      %2001 = vmatpush1.bf16.msra.mxu0 0
      %2002 = vmatprep.subr.bf16.mxu0 0
      %2003 = vmatpush1.bf16.msra.mxu0 0
      %2004 = vmatprep.subr.bf16.mxu0 0
      %2005 = vmatpush1.bf16.msra.mxu0 0
      %2006 = vmatprep.subr.bf16.mxu0 0
      %2007 = vmatpush1.bf16.msra.mxu0 0
      %2008 = vmatprep.subr.bf16.mxu0 0
      %2009 = vmatpush1.bf16.msra.mxu0 0
      %2010 = vmatprep.mubr.bf16.mxu0 0
      %2011 = vmatmul.mubr.bf16.gmra.mrb[0].mxu0 %v1964
      %v2012 = vpop.f32.mrb[0].mxu0
      %v2013 = vadd.f32 0.0, %v2012
      %v2014 = vpop.f32.mrb[0].mxu0
      %v2015 = vpop.f32.mrb[0].mxu0
      %v2016 = vadd.f32 0.0, %v2015
      %v2017 = vpop.f32.mrb[0].mxu0
      %2018 = vmatprep.mubr.bf16.mxu0 0
      %2019 = vmatmul.mubr.bf16.gmra.mrb[0].mxu0 %v1967
      %v2020 = vpop.f32.mrb[0].mxu0
      %v2021 = vadd.f32 0.0, %v2020
      %v2022 = vpop.f32.mrb[0].mxu0
      %v2023 = vpop.f32.mrb[0].mxu0
      %v2024 = vadd.f32 0.0, %v2023
      %v2025 = vpop.f32.mrb[0].mxu0
      %2026 = vmatprep.mubr.bf16.mxu0 0
      %2027 = vmatmul.mubr.bf16.gmra.mrb[0].mxu0 %v1970
      %v2028 = vpop.f32.mrb[0].mxu0
      %v2029 = vadd.f32 0.0, %v2028
      %v2030 = vpop.f32.mrb[0].mxu0
      %v2031 = vpop.f32.mrb[0].mxu0
      %v2032 = vadd.f32 0.0, %v2031
      %v2033 = vpop.f32.mrb[0].mxu0
      %2034 = vmatprep.mubr.bf16.mxu0 0
      %2035 = vmatmul.mubr.bf16.gmra.mrb[0].mxu0 %v1973
      %v2036 = vpop.f32.mrb[0].mxu0
      %v2037 = vadd.f32 0.0, %v2036
      %v2038 = vpop.f32.mrb[0].mxu0
      %v2039 = vpop.f32.mrb[0].mxu0
      %v2040 = vadd.f32 0.0, %v2039
      %v2041 = vpop.f32.mrb[0].mxu0
      %2042 = vdwg.mxu0
      %v2043 = vadd.f32 %v1927, %v2013
      %v2044 = vadd.f32 %v1930, %v2016
      %v2045 = vadd.f32 %v1935, %v2021
      %v2046 = vadd.f32 %v1938, %v2024
      %v2047 = vadd.f32 %v1943, %v2029
      %v2048 = vadd.f32 %v1946, %v2032
      %v2049 = vadd.f32 %v1951, %v2037
      %v2050 = vadd.f32 %v1954, %v2040
      %v2051 = vpack.c.bf16 %v1758, %v1755
      %v2052 = vpack.c.bf16 %v1766, %v1763
      %v2053 = vpack.c.bf16 %v1774, %v1771
      %v2054 = vpack.c.bf16 %v1782, %v1779
      %s2055 = scalar_lea.vmem %s4, 12
      %v2056 = vld [vmem:[%s2055] sm:$0xf]
      %v2058 = vsel %vm503, %v2051, 0
      %v2061 = vsel %vm503, %v2052, 0
      %v2064 = vsel %vm503, %v2053, 0
      %v2067 = vsel %vm503, %v2054, 0
      %v2070 = vsel %vm1808, %v2056, 0
      %2072 = vmatprep.subr.bf16.mxu0 0
      %2073 = vmatpush1.bf16.msra.mxu0 %v2070
      %2074 = vmatprep.subr.bf16.mxu0 0
      %2075 = vmatpush1.bf16.msra.mxu0 0
      %2076 = vmatprep.subr.bf16.mxu0 0
      %2077 = vmatpush1.bf16.msra.mxu0 0
      %2078 = vmatprep.subr.bf16.mxu0 0
      %2079 = vmatpush1.bf16.msra.mxu0 0
      %2080 = vmatprep.subr.bf16.mxu0 0
      %2081 = vmatpush1.bf16.msra.mxu0 0
      %2082 = vmatprep.subr.bf16.mxu0 0
      %2083 = vmatpush1.bf16.msra.mxu0 0
      %2084 = vmatprep.subr.bf16.mxu0 0
      %2085 = vmatpush1.bf16.msra.mxu0 0
      %2086 = vmatprep.subr.bf16.mxu0 0
      %2087 = vmatpush1.bf16.msra.mxu0 0
      %2088 = vmatprep.subr.bf16.mxu0 0
      %2089 = vmatpush1.bf16.msra.mxu0 0
      %2090 = vmatprep.subr.bf16.mxu0 0
      %2091 = vmatpush1.bf16.msra.mxu0 0
      %2092 = vmatprep.subr.bf16.mxu0 0
      %2093 = vmatpush1.bf16.msra.mxu0 0
      %2094 = vmatprep.subr.bf16.mxu0 0
      %2095 = vmatpush1.bf16.msra.mxu0 0
      %2096 = vmatprep.subr.bf16.mxu0 0
      %2097 = vmatpush1.bf16.msra.mxu0 0
      %2098 = vmatprep.subr.bf16.mxu0 0
      %2099 = vmatpush1.bf16.msra.mxu0 0
      %2100 = vmatprep.subr.bf16.mxu0 0
      %2101 = vmatpush1.bf16.msra.mxu0 0
      %2102 = vmatprep.subr.bf16.mxu0 0
      %2103 = vmatpush1.bf16.msra.mxu0 0
      %2104 = vmatprep.mubr.bf16.mxu0 0
      %2105 = vmatmul.mubr.bf16.gmra.mrb[0].mxu0 %v2058
      %v2106 = vpop.f32.mrb[0].mxu0
      %v2107 = vadd.f32 0.0, %v2106
      %v2108 = vpop.f32.mrb[0].mxu0
      %v2109 = vpop.f32.mrb[0].mxu0
      %v2110 = vadd.f32 0.0, %v2109
      %v2111 = vpop.f32.mrb[0].mxu0
      %2112 = vmatprep.mubr.bf16.mxu0 0
      %2113 = vmatmul.mubr.bf16.gmra.mrb[0].mxu0 %v2061
      %v2114 = vpop.f32.mrb[0].mxu0
      %v2115 = vadd.f32 0.0, %v2114
      %v2116 = vpop.f32.mrb[0].mxu0
      %v2117 = vpop.f32.mrb[0].mxu0
      %v2118 = vadd.f32 0.0, %v2117
      %v2119 = vpop.f32.mrb[0].mxu0
      %2120 = vmatprep.mubr.bf16.mxu0 0
      %2121 = vmatmul.mubr.bf16.gmra.mrb[0].mxu0 %v2064
      %v2122 = vpop.f32.mrb[0].mxu0
      %v2123 = vadd.f32 0.0, %v2122
      %v2124 = vpop.f32.mrb[0].mxu0
      %v2125 = vpop.f32.mrb[0].mxu0
      %v2126 = vadd.f32 0.0, %v2125
      %v2127 = vpop.f32.mrb[0].mxu0
      %2128 = vmatprep.mubr.bf16.mxu0 0
      %2129 = vmatmul.mubr.bf16.gmra.mrb[0].mxu0 %v2067
      %v2130 = vpop.f32.mrb[0].mxu0
      %v2131 = vadd.f32 0.0, %v2130
      %v2132 = vpop.f32.mrb[0].mxu0
      %v2133 = vpop.f32.mrb[0].mxu0
      %v2134 = vadd.f32 0.0, %v2133
      %v2135 = vpop.f32.mrb[0].mxu0
      %2136 = vdwg.mxu0
      %v2137 = vadd.f32 %v2043, %v2107
      %v2138 = vadd.f32 %v2044, %v2110
      %v2139 = vadd.f32 %v2045, %v2115
      %v2140 = vadd.f32 %v2046, %v2118
      %v2141 = vadd.f32 %v2047, %v2123
      %v2142 = vadd.f32 %v2048, %v2126
      %v2143 = vadd.f32 %v2049, %v2131
      %v2144 = vadd.f32 %v2050, %v2134
      %v2145 = vld [vmem:[%s360] sm:$0xff]
      %v2146 = vld [vmem:[%s360 + $0x8] sm:$0xff]
      %v2147 = vld [vmem:[%s360 + $0x10] sm:$0xff]
      %v2148 = vld [vmem:[%s360 + $0x18] sm:$0xff]
      %v2149 = vld [vmem:[%s360 + $0x20] sm:$0xff]
      %v2150 = vld [vmem:[%s360 + $0x28] sm:$0xff]
      %v2151 = vld [vmem:[%s360 + $0x30] sm:$0xff]
      %v2152 = vld [vmem:[%s360 + $0x38] sm:$0xff]
      %v2153 = vadd.f32 %v2145, %v2137
      %v2154 = vadd.f32 %v2146, %v2138
      %v2155 = vadd.f32 %v2147, %v2139
      %v2156 = vadd.f32 %v2148, %v2140
      %v2157 = vadd.f32 %v2149, %v2141
      %v2158 = vadd.f32 %v2150, %v2142
      %v2159 = vadd.f32 %v2151, %v2143
      %v2160 = vadd.f32 %v2152, %v2144
      %v2161 = vld [vmem:[%s5] sm:$0x1]
      %v2163 = vlaneseq
      %v2164 = vshrl.u32 %v2163, 7
      %v2165 = vsub.s32 0, %v2164
      %v2166 = vrot.slane %v2161, %v2165
      %v2168 = vadd.f32 %v2153, %v2166
      %v2169 = vadd.f32 %v2154, %v2166
      %v2170 = vadd.f32 %v2155, %v2166
      %v2171 = vadd.f32 %v2156, %v2166
      %v2172 = vadd.f32 %v2157, %v2166
      %v2173 = vadd.f32 %v2158, %v2166
      %v2174 = vadd.f32 %v2159, %v2166
      %v2175 = vadd.f32 %v2160, %v2166
      %vm2176 = vcmask 261120
      %v2177 = vsel %vm2176, %v2168, 0.0
      %2178 = vadd.xlane.f32.xlu0 %v2177
      %v2179 = vpop.xlane.xlu0 %2178
      %v2180 = vsel %vm2176, %v2169, 0.0
      %2181 = vadd.xlane.f32.xlu0 %v2180
      %v2182 = vpop.xlane.xlu0 %2181
      %v2183 = vsel %vm2176, %v2170, 0.0
      %2184 = vadd.xlane.f32.xlu0 %v2183
      %v2185 = vpop.xlane.xlu0 %2184
      %v2186 = vsel %vm2176, %v2171, 0.0
      %2187 = vadd.xlane.f32.xlu0 %v2186
      %v2188 = vpop.xlane.xlu0 %2187
      %v2189 = vsel %vm2176, %v2172, 0.0
      %2190 = vadd.xlane.f32.xlu0 %v2189
      %v2191 = vpop.xlane.xlu0 %2190
      %v2192 = vsel %vm2176, %v2173, 0.0
      %2193 = vadd.xlane.f32.xlu0 %v2192
      %v2194 = vpop.xlane.xlu0 %2193
      %v2195 = vsel %vm2176, %v2174, 0.0
      %2196 = vadd.xlane.f32.xlu0 %v2195
      %v2197 = vpop.xlane.xlu0 %2196
      %v2198 = vsel %vm2176, %v2175, 0.0
      %2199 = vadd.xlane.f32.xlu0 %v2198
      %v2200 = vpop.xlane.xlu0 %2199
      %v2201 = vrcp.pop 32.0
      %v2202 = vmul.f32 %v2179, %v2201
      %v2203 = vmul.f32 %v2182, %v2201
      %v2204 = vmul.f32 %v2185, %v2201
      %v2205 = vmul.f32 %v2188, %v2201
      %v2206 = vmul.f32 %v2191, %v2201
      %v2207 = vmul.f32 %v2194, %v2201
      %v2208 = vmul.f32 %v2197, %v2201
      %v2209 = vmul.f32 %v2200, %v2201
      %v2210 = vsub.f32 %v2168, %v2202
      %v2211 = vsub.f32 %v2169, %v2203
      %v2212 = vsub.f32 %v2170, %v2204
      %v2213 = vsub.f32 %v2171, %v2205
      %v2214 = vsub.f32 %v2172, %v2206
      %v2215 = vsub.f32 %v2173, %v2207
      %v2216 = vsub.f32 %v2174, %v2208
      %v2217 = vsub.f32 %v2175, %v2209
      %v2218 = vmul.f32 %v2210, %v2210
      %v2219 = vmul.f32 %v2211, %v2211
      %v2220 = vmul.f32 %v2212, %v2212
      %v2221 = vmul.f32 %v2213, %v2213
      %v2222 = vmul.f32 %v2214, %v2214
      %v2223 = vmul.f32 %v2215, %v2215
      %v2224 = vmul.f32 %v2216, %v2216
      %v2225 = vmul.f32 %v2217, %v2217
      %v2226 = vsel %vm2176, %v2218, 0.0
      %2227 = vadd.xlane.f32.xlu0 %v2226
      %v2228 = vpop.xlane.xlu0 %2227
      %v2229 = vsel %vm2176, %v2219, 0.0
      %2230 = vadd.xlane.f32.xlu0 %v2229
      %v2231 = vpop.xlane.xlu0 %2230
      %v2232 = vsel %vm2176, %v2220, 0.0
      %2233 = vadd.xlane.f32.xlu0 %v2232
      %v2234 = vpop.xlane.xlu0 %2233
      %v2235 = vsel %vm2176, %v2221, 0.0
      %2236 = vadd.xlane.f32.xlu0 %v2235
      %v2237 = vpop.xlane.xlu0 %2236
      %v2238 = vsel %vm2176, %v2222, 0.0
      %2239 = vadd.xlane.f32.xlu0 %v2238
      %v2240 = vpop.xlane.xlu0 %2239
      %v2241 = vsel %vm2176, %v2223, 0.0
      %2242 = vadd.xlane.f32.xlu0 %v2241
      %v2243 = vpop.xlane.xlu0 %2242
      %v2244 = vsel %vm2176, %v2224, 0.0
      %2245 = vadd.xlane.f32.xlu0 %v2244
      %v2246 = vpop.xlane.xlu0 %2245
      %v2247 = vsel %vm2176, %v2225, 0.0
      %2248 = vadd.xlane.f32.xlu0 %v2247
      %v2249 = vpop.xlane.xlu0 %2248
      %v2250 = vmul.f32 %v2228, %v2201
      %v2251 = vmul.f32 %v2231, %v2201
      %v2252 = vmul.f32 %v2234, %v2201
      %v2253 = vmul.f32 %v2237, %v2201
      %v2254 = vmul.f32 %v2240, %v2201
      %v2255 = vmul.f32 %v2243, %v2201
      %v2256 = vmul.f32 %v2246, %v2201
      %v2257 = vmul.f32 %v2249, %v2201
      %v2258 = vadd.f32 %v2250, 1e-05
      %v2259 = vadd.f32 %v2251, 1e-05
      %v2260 = vadd.f32 %v2252, 1e-05
      %v2261 = vadd.f32 %v2253, 1e-05
      %v2262 = vadd.f32 %v2254, 1e-05
      %v2263 = vadd.f32 %v2255, 1e-05
      %v2264 = vadd.f32 %v2256, 1e-05
      %v2265 = vadd.f32 %v2257, 1e-05
      %v2266 = vrsqrt.pop %v2258
      %v2267 = vrsqrt.pop %v2259
      %v2268 = vrsqrt.pop %v2260
      %v2269 = vrsqrt.pop %v2261
      %v2270 = vrsqrt.pop %v2262
      %v2271 = vrsqrt.pop %v2263
      %v2272 = vrsqrt.pop %v2264
      %v2273 = vrsqrt.pop %v2265
      %v2274 = vmul.f32 %v2210, %v2266
      %v2275 = vmul.f32 %v2211, %v2267
      %v2276 = vmul.f32 %v2212, %v2268
      %v2277 = vmul.f32 %v2213, %v2269
      %v2278 = vmul.f32 %v2214, %v2270
      %v2279 = vmul.f32 %v2215, %v2271
      %v2280 = vmul.f32 %v2216, %v2272
      %v2281 = vmul.f32 %v2217, %v2273
      %v2282 = vld [vmem:[%s6] sm:$0x1]
      %v2284 = vlaneseq
      %v2285 = vshrl.u32 %v2284, 7
      %v2286 = vsub.s32 0, %v2285
      %v2287 = vrot.slane %v2282, %v2286
      %v2289 = vmul.f32 %v2274, %v2287
      %v2290 = vmul.f32 %v2275, %v2287
      %v2291 = vmul.f32 %v2276, %v2287
      %v2292 = vmul.f32 %v2277, %v2287
      %v2293 = vmul.f32 %v2278, %v2287
      %v2294 = vmul.f32 %v2279, %v2287
      %v2295 = vmul.f32 %v2280, %v2287
      %v2296 = vmul.f32 %v2281, %v2287
      %v2297 = vld [vmem:[%s7] sm:$0x1]
      %v2299 = vlaneseq
      %v2300 = vshrl.u32 %v2299, 7
      %v2301 = vsub.s32 0, %v2300
      %v2302 = vrot.slane %v2297, %v2301
      %v2304 = vadd.f32 %v2289, %v2302
      %v2305 = vadd.f32 %v2290, %v2302
      %v2306 = vadd.f32 %v2291, %v2302
      %v2307 = vadd.f32 %v2292, %v2302
      %v2308 = vadd.f32 %v2293, %v2302
      %v2309 = vadd.f32 %v2294, %v2302
      %v2310 = vadd.f32 %v2295, %v2302
      %v2311 = vadd.f32 %v2296, %v2302
      %2312 = vst.msk [vmem:[%s365] sm:$0xff] %vm2176, %v2304
      %2313 = vst.msk [vmem:[%s365 + $0x8] sm:$0xff] %vm2176, %v2305
      %2314 = vst.msk [vmem:[%s365 + $0x10] sm:$0xff] %vm2176, %v2306
      %2315 = vst.msk [vmem:[%s365 + $0x18] sm:$0xff] %vm2176, %v2307
      %2316 = vst.msk [vmem:[%s365 + $0x20] sm:$0xff] %vm2176, %v2308
      %2317 = vst.msk [vmem:[%s365 + $0x28] sm:$0xff] %vm2176, %v2309
      %2318 = vst.msk [vmem:[%s365 + $0x30] sm:$0xff] %vm2176, %v2310
      %2319 = vst.msk [vmem:[%s365 + $0x38] sm:$0xff] %vm2176, %v2311
      %p2320 = scmp.lt.s32.totalorder %s19, 1
      %s2321 = scalar_select %p2320, %s19, 1
      %s2322 = smul.addr %s2321, 8
      %s2323 = smul.addr %s2322, 8
      %s2324 = scalar_lea.vmem %s8, %s2323
      // Predicated region
      $region53: #{spatial_transformer_forward.11} parent=51 // pred_check
        %p2325 = pneg %p225
      $region54: #{spatial_transformer_forward.11} parent=51 // pred_check_branch
        %2327 = sbr.rel (%p2325) target = $region56
      $region55: #{spatial_transformer_forward.11} parent=51 // pred_region
        _
      $region56: #{spatial_transformer_forward.11} parent=51 // pred_fallthru
        _
    $region52: #{spatial_transformer_forward.11} parent=5 // pred_fallthru
      _
    %p2328 = scmp.le.s32.totalorder 2, %s14
    // Predicated region
    $region57: #{spatial_transformer_forward.11} parent=5 // pred_check
      %p2329 = pneg %p2328
    $region58: #{spatial_transformer_forward.11} parent=5 // pred_check_branch
      %2331 = sbr.rel (%p2329) target = $region60
    $region59: #{spatial_transformer_forward.11} parent=5 // pred_region
      %s2332 = ssub.s32 %s14, 2
      // Predicated region
      $region61: #{spatial_transformer_forward.11} parent=59 // pred_check
        %p2333 = pneg %p231
      $region62: #{spatial_transformer_forward.11} parent=59 // pred_check_branch
        %2335 = sbr.rel (%p2333) target = $region64
      $region63: #{spatial_transformer_forward.11} parent=59 // pred_region
        %p2336 = scmp.lt.s32.totalorder %s20, 1
        %s2337 = scalar_select %p2336, %s20, 1
        %s2338 = smul.addr %s2337, 8
        %s2339 = smul.addr %s2338, 8
        %s2340 = scalar_lea.vmem %s8, %s2339
      $region64: #{spatial_transformer_forward.11} parent=59 // pred_fallthru
        _
    $region60: #{spatial_transformer_forward.11} parent=5 // pred_fallthru
      _
  $region6: #{spatial_transformer_forward.11} parent=0 // loop_footer
    %s18 = sadd.s32 1, %s14
  $region7: #{spatial_transformer_forward.11} parent=0 // loop_footer_branch
    %13 = sbr.rel target = $region3
  $region8: #{spatial_transformer_forward.11} parent=0 // loop_exit
    _

// kernel: spatial_transformer_forward.17
$region0: #{spatial_transformer_forward.17}
  #allocation0 [shape = 'u32[]', space=smem, size = 0x4, offset = 0x4, fixed_abs, tag = 'smem constant byte address 0x4 - core index']
  #allocation1 [shape = 'u32[144,128]{1,0:T(1,128)}', space=vmem, size = 0x12000, scoped, tag = 'internal scratch']
  %s0 = inlined_call_operand.vmem [shape: bf16[512,36], index: 0, kind: input, shape index: {}]
  %s1 = inlined_call_operand.vmem [shape: bf16[36,4], index: 1, kind: input, shape index: {}]
  %s2 = inlined_call_operand.vmem [shape: f32[1,4], index: 2, kind: input, shape index: {}]
  %s3 = inlined_call_operand.vmem [shape: f32[512,4], index: 3, kind: output, shape index: {}]
  %s4 = sld [smem:[#allocation0]]
  $region22: #{spatial_transformer_forward.17} parent=0
    _
  %s6 = ssub.s32 1, %s4
  %s7 = scalar_select 0, %s6, %s4
  // Predicated region
  $region2: #{spatial_transformer_forward.17} parent=0 // pred_check
    _
  $region3: #{spatial_transformer_forward.17} parent=0 // pred_check_branch
    %9 = sbr.rel (0) target = $region5
  $region4: #{spatial_transformer_forward.17} parent=0 // pred_region
    _
  $region5: #{spatial_transformer_forward.17} parent=0 // pred_fallthru
    _
  // Predicated region
  $region6: #{spatial_transformer_forward.17} parent=0 // pred_check
    _
  $region7: #{spatial_transformer_forward.17} parent=0 // pred_check_branch
    %11 = sbr.rel (0) target = $region9
  $region8: #{spatial_transformer_forward.17} parent=0 // pred_region
    _
  $region9: #{spatial_transformer_forward.17} parent=0 // pred_fallthru
    _
  // Predicated region
  $region10: #{spatial_transformer_forward.17} parent=0 // pred_check
    _
  $region11: #{spatial_transformer_forward.17} parent=0 // pred_check_branch
    %13 = sbr.rel (0) target = $region13
  $region12: #{spatial_transformer_forward.17} parent=0 // pred_region
    _
  $region13: #{spatial_transformer_forward.17} parent=0 // pred_fallthru
    _
  %v15 = vld [vmem:[%s0] sm:$0xf]
  %v16 = vld [vmem:[%s0 + $0x4] sm:$0xf]
  %v17 = vld [vmem:[%s0 + $0x8] sm:$0xf]
  %v18 = vld [vmem:[%s0 + $0xc] sm:$0xf]
  %v19 = vld [vmem:[%s0 + $0x10] sm:$0xf]
  %v20 = vld [vmem:[%s0 + $0x14] sm:$0xf]
  %v21 = vld [vmem:[%s0 + $0x18] sm:$0xf]
  %v22 = vld [vmem:[%s0 + $0x1c] sm:$0xf]
  %v23 = vld [vmem:[%s0 + $0x20] sm:$0xf]
  %v24 = vld [vmem:[%s0 + $0x24] sm:$0xf]
  %v25 = vld [vmem:[%s0 + $0x28] sm:$0xf]
  %v26 = vld [vmem:[%s0 + $0x2c] sm:$0xf]
  %v27 = vld [vmem:[%s0 + $0x30] sm:$0xf]
  %v28 = vld [vmem:[%s0 + $0x34] sm:$0xf]
  %v29 = vld [vmem:[%s0 + $0x38] sm:$0xf]
  %v30 = vld [vmem:[%s0 + $0x3c] sm:$0xf]
  %v31 = vld [vmem:[%s0 + $0x40] sm:$0xf]
  %v32 = vld [vmem:[%s0 + $0x44] sm:$0xf]
  %v33 = vld [vmem:[%s0 + $0x48] sm:$0xf]
  %v34 = vld [vmem:[%s0 + $0x4c] sm:$0xf]
  %v35 = vld [vmem:[%s0 + $0x50] sm:$0xf]
  %v36 = vld [vmem:[%s0 + $0x54] sm:$0xf]
  %v37 = vld [vmem:[%s0 + $0x58] sm:$0xf]
  %v38 = vld [vmem:[%s0 + $0x5c] sm:$0xf]
  %v39 = vld [vmem:[%s0 + $0x60] sm:$0xf]
  %v40 = vld [vmem:[%s0 + $0x64] sm:$0xf]
  %v41 = vld [vmem:[%s0 + $0x68] sm:$0xf]
  %v42 = vld [vmem:[%s0 + $0x6c] sm:$0xf]
  %v43 = vld [vmem:[%s0 + $0x70] sm:$0xf]
  %v44 = vld [vmem:[%s0 + $0x74] sm:$0xf]
  %v45 = vld [vmem:[%s0 + $0x78] sm:$0xf]
  %v46 = vld [vmem:[%s0 + $0x7c] sm:$0xf]
  %v47 = vld [vmem:[%s0 + $0x80] sm:$0xf]
  %v48 = vld [vmem:[%s0 + $0x84] sm:$0xf]
  %v49 = vld [vmem:[%s0 + $0x88] sm:$0xf]
  %v50 = vld [vmem:[%s0 + $0x8c] sm:$0xf]
  %v51 = vld [vmem:[%s0 + $0x90] sm:$0xf]
  %v52 = vld [vmem:[%s0 + $0x94] sm:$0xf]
  %v53 = vld [vmem:[%s0 + $0x98] sm:$0xf]
  %v54 = vld [vmem:[%s0 + $0x9c] sm:$0xf]
  %v55 = vld [vmem:[%s0 + $0xa0] sm:$0xf]
  %v56 = vld [vmem:[%s0 + $0xa4] sm:$0xf]
  %v57 = vld [vmem:[%s0 + $0xa8] sm:$0xf]
  %v58 = vld [vmem:[%s0 + $0xac] sm:$0xf]
  %v59 = vld [vmem:[%s0 + $0xb0] sm:$0xf]
  %v60 = vld [vmem:[%s0 + $0xb4] sm:$0xf]
  %v61 = vld [vmem:[%s0 + $0xb8] sm:$0xf]
  %v62 = vld [vmem:[%s0 + $0xbc] sm:$0xf]
  %v63 = vld [vmem:[%s0 + $0xc0] sm:$0xf]
  %v64 = vld [vmem:[%s0 + $0xc4] sm:$0xf]
  %v65 = vld [vmem:[%s0 + $0xc8] sm:$0xf]
  %v66 = vld [vmem:[%s0 + $0xcc] sm:$0xf]
  %v67 = vld [vmem:[%s0 + $0xd0] sm:$0xf]
  %v68 = vld [vmem:[%s0 + $0xd4] sm:$0xf]
  %v69 = vld [vmem:[%s0 + $0xd8] sm:$0xf]
  %v70 = vld [vmem:[%s0 + $0xdc] sm:$0xf]
  %v71 = vld [vmem:[%s0 + $0xe0] sm:$0xf]
  %v72 = vld [vmem:[%s0 + $0xe4] sm:$0xf]
  %v73 = vld [vmem:[%s0 + $0xe8] sm:$0xf]
  %v74 = vld [vmem:[%s0 + $0xec] sm:$0xf]
  %v75 = vld [vmem:[%s0 + $0xf0] sm:$0xf]
  %v76 = vld [vmem:[%s0 + $0xf4] sm:$0xf]
  %v77 = vld [vmem:[%s0 + $0xf8] sm:$0xf]
  %v78 = vld [vmem:[%s0 + $0xfc] sm:$0xf]
  %v79 = vld [vmem:[%s1] sm:$0xf]
  %v80 = vld [vmem:[%s1 + $0x4] sm:$0xf]
  %v81 = vld [vmem:[%s1 + $0x8] sm:$0xf]
  %v82 = vld [vmem:[%s1 + $0xc] sm:$0xf]
  %v83 = vld [vmem:[%s1 + $0x10] sm:$0x3]
  %v84 = vld [vmem:[%s2] sm:$0x1]
  %v86 = vlaneseq
  %v87 = vshrl.u32 %v86, 7
  %v88 = vsub.s32 0, %v87
  %v89 = vrot.slane %v84, %v88
  %v155 = vunpack.c.l.b16 %v15
  %v156 = vunpack.c.l.b16 %v16
  %v157 = vunpack.c.l.b16 %v17
  %v158 = vunpack.c.l.b16 %v18
  %v159 = vunpack.c.l.b16 %v19
  %v160 = vunpack.c.l.b16 %v20
  %v161 = vunpack.c.l.b16 %v21
  %v162 = vunpack.c.l.b16 %v22
  %v163 = vunpack.c.l.b16 %v23
  %v164 = vunpack.c.l.b16 %v24
  %v165 = vunpack.c.l.b16 %v25
  %v166 = vunpack.c.l.b16 %v26
  %v167 = vunpack.c.l.b16 %v27
  %v168 = vunpack.c.l.b16 %v28
  %v169 = vunpack.c.l.b16 %v29
  %v170 = vunpack.c.l.b16 %v30
  %v171 = vunpack.c.l.b16 %v31
  %v172 = vunpack.c.l.b16 %v32
  %v173 = vunpack.c.l.b16 %v33
  %v174 = vunpack.c.l.b16 %v34
  %v175 = vunpack.c.l.b16 %v35
  %v176 = vunpack.c.l.b16 %v36
  %v177 = vunpack.c.l.b16 %v37
  %v178 = vunpack.c.l.b16 %v38
  %v179 = vunpack.c.l.b16 %v39
  %v180 = vunpack.c.l.b16 %v40
  %v181 = vunpack.c.l.b16 %v41
  %v182 = vunpack.c.l.b16 %v42
  %v183 = vunpack.c.l.b16 %v43
  %v184 = vunpack.c.l.b16 %v44
  %v185 = vunpack.c.l.b16 %v45
  %v186 = vunpack.c.l.b16 %v46
  %v187 = vunpack.c.l.b16 %v47
  %v188 = vunpack.c.l.b16 %v48
  %v189 = vunpack.c.l.b16 %v49
  %v190 = vunpack.c.l.b16 %v50
  %v191 = vunpack.c.l.b16 %v51
  %v192 = vunpack.c.l.b16 %v52
  %v193 = vunpack.c.l.b16 %v53
  %v194 = vunpack.c.l.b16 %v54
  %v195 = vunpack.c.l.b16 %v55
  %v196 = vunpack.c.l.b16 %v56
  %v197 = vunpack.c.l.b16 %v57
  %v198 = vunpack.c.l.b16 %v58
  %v199 = vunpack.c.l.b16 %v59
  %v200 = vunpack.c.l.b16 %v60
  %v201 = vunpack.c.l.b16 %v61
  %v202 = vunpack.c.l.b16 %v62
  %v203 = vunpack.c.l.b16 %v63
  %v204 = vunpack.c.l.b16 %v64
  %v205 = vunpack.c.l.b16 %v65
  %v206 = vunpack.c.l.b16 %v66
  %v207 = vunpack.c.l.b16 %v67
  %v208 = vunpack.c.l.b16 %v68
  %v209 = vunpack.c.l.b16 %v69
  %v210 = vunpack.c.l.b16 %v70
  %v211 = vunpack.c.l.b16 %v71
  %v212 = vunpack.c.l.b16 %v72
  %v213 = vunpack.c.l.b16 %v73
  %v214 = vunpack.c.l.b16 %v74
  %v215 = vunpack.c.l.b16 %v75
  %v216 = vunpack.c.l.b16 %v76
  %v217 = vunpack.c.l.b16 %v77
  %v218 = vunpack.c.l.b16 %v78
  %v219 = vpack.c.b16 %v156, %v155
  %v220 = vpack.c.b16 %v158, %v157
  %v221 = vpack.c.b16 %v160, %v159
  %v222 = vpack.c.b16 %v162, %v161
  %v223 = vpack.c.b16 %v164, %v163
  %v224 = vpack.c.b16 %v166, %v165
  %v225 = vpack.c.b16 %v168, %v167
  %v226 = vpack.c.b16 %v170, %v169
  %v227 = vpack.c.b16 %v172, %v171
  %v228 = vpack.c.b16 %v174, %v173
  %v229 = vpack.c.b16 %v176, %v175
  %v230 = vpack.c.b16 %v178, %v177
  %v231 = vpack.c.b16 %v180, %v179
  %v232 = vpack.c.b16 %v182, %v181
  %v233 = vpack.c.b16 %v184, %v183
  %v234 = vpack.c.b16 %v186, %v185
  %v235 = vpack.c.b16 %v188, %v187
  %v236 = vpack.c.b16 %v190, %v189
  %v237 = vpack.c.b16 %v192, %v191
  %v238 = vpack.c.b16 %v194, %v193
  %v239 = vpack.c.b16 %v196, %v195
  %v240 = vpack.c.b16 %v198, %v197
  %v241 = vpack.c.b16 %v200, %v199
  %v242 = vpack.c.b16 %v202, %v201
  %v243 = vpack.c.b16 %v204, %v203
  %v244 = vpack.c.b16 %v206, %v205
  %v245 = vpack.c.b16 %v208, %v207
  %v246 = vpack.c.b16 %v210, %v209
  %v247 = vpack.c.b16 %v212, %v211
  %v248 = vpack.c.b16 %v214, %v213
  %v249 = vpack.c.b16 %v216, %v215
  %v250 = vpack.c.b16 %v218, %v217
  %v256 = vunpack.c.l.b16 %v79
  %v257 = vunpack.c.l.b16 %v80
  %v258 = vunpack.c.l.b16 %v81
  %v259 = vunpack.c.l.b16 %v82
  %v260 = vunpack.c.l.b16 %v83
  %v261 = vpack.c.b16 %v257, %v256
  %v262 = vpack.c.b16 %v259, %v258
  %v263 = vpack.c.b16 %v260, %v260
  %vm266 = vcmask 293888
  %v268 = vsel %vm266, %v219, 0
  %v271 = vsel %vm266, %v220, 0
  %v274 = vsel %vm266, %v221, 0
  %v277 = vsel %vm266, %v222, 0
  %v280 = vsel %vm266, %v223, 0
  %v283 = vsel %vm266, %v224, 0
  %v286 = vsel %vm266, %v225, 0
  %v289 = vsel %vm266, %v226, 0
  %v292 = vsel %vm266, %v227, 0
  %v295 = vsel %vm266, %v228, 0
  %v298 = vsel %vm266, %v229, 0
  %v301 = vsel %vm266, %v230, 0
  %v304 = vsel %vm266, %v231, 0
  %v307 = vsel %vm266, %v232, 0
  %v310 = vsel %vm266, %v233, 0
  %v313 = vsel %vm266, %v234, 0
  %v316 = vsel %vm266, %v235, 0
  %v319 = vsel %vm266, %v236, 0
  %v322 = vsel %vm266, %v237, 0
  %v325 = vsel %vm266, %v238, 0
  %v328 = vsel %vm266, %v239, 0
  %v331 = vsel %vm266, %v240, 0
  %v334 = vsel %vm266, %v241, 0
  %v337 = vsel %vm266, %v242, 0
  %v340 = vsel %vm266, %v243, 0
  %v343 = vsel %vm266, %v244, 0
  %v346 = vsel %vm266, %v245, 0
  %v349 = vsel %vm266, %v246, 0
  %v352 = vsel %vm266, %v247, 0
  %v355 = vsel %vm266, %v248, 0
  %v358 = vsel %vm266, %v249, 0
  %v361 = vsel %vm266, %v250, 0
  %vm363 = vcmask 1041408
  %v365 = vsel %vm363, %v263, 0
  %367 = vmatprep.subr.bf16.mxu0 0
  %368 = vmatpush1.bf16.msra.mxu0 %v261
  %369 = vmatprep.subr.bf16.mxu0 0
  %370 = vmatpush1.bf16.msra.mxu0 %v262
  %371 = vmatprep.subr.bf16.mxu0 0
  %372 = vmatpush1.bf16.msra.mxu0 %v365
  %373 = vmatprep.subr.bf16.mxu0 0
  %374 = vmatpush1.bf16.msra.mxu0 0
  %375 = vmatprep.subr.bf16.mxu0 0
  %376 = vmatpush1.bf16.msra.mxu0 0
  %377 = vmatprep.subr.bf16.mxu0 0
  %378 = vmatpush1.bf16.msra.mxu0 0
  %379 = vmatprep.subr.bf16.mxu0 0
  %380 = vmatpush1.bf16.msra.mxu0 0
  %381 = vmatprep.subr.bf16.mxu0 0
  %382 = vmatpush1.bf16.msra.mxu0 0
  %383 = vmatprep.subr.bf16.mxu0 0
  %384 = vmatpush1.bf16.msra.mxu0 0
  %385 = vmatprep.subr.bf16.mxu0 0
  %386 = vmatpush1.bf16.msra.mxu0 0
  %387 = vmatprep.subr.bf16.mxu0 0
  %388 = vmatpush1.bf16.msra.mxu0 0
  %389 = vmatprep.subr.bf16.mxu0 0
  %390 = vmatpush1.bf16.msra.mxu0 0
  %391 = vmatprep.subr.bf16.mxu0 0
  %392 = vmatpush1.bf16.msra.mxu0 0
  %393 = vmatprep.subr.bf16.mxu0 0
  %394 = vmatpush1.bf16.msra.mxu0 0
  %395 = vmatprep.subr.bf16.mxu0 0
  %396 = vmatpush1.bf16.msra.mxu0 0
  %397 = vmatprep.subr.bf16.mxu0 0
  %398 = vmatpush1.bf16.msra.mxu0 0
  %399 = vmatprep.mubr.bf16.mxu0 0
  %400 = vmatmul.mubr.bf16.gmra.mrb[0].mxu0 %v268
  %v401 = vpop.f32.mrb[0].mxu0
  %v402 = vadd.f32 %v89, %v401
  %v403 = vpop.f32.mrb[0].mxu0
  %v404 = vpop.f32.mrb[0].mxu0
  %v405 = vadd.f32 %v89, %v404
  %v406 = vpop.f32.mrb[0].mxu0
  %407 = vmatprep.mubr.bf16.mxu0 0
  %408 = vmatmul.mubr.bf16.gmra.mrb[0].mxu0 %v271
  %v409 = vpop.f32.mrb[0].mxu0
  %v410 = vadd.f32 %v89, %v409
  %v411 = vpop.f32.mrb[0].mxu0
  %v412 = vpop.f32.mrb[0].mxu0
  %v413 = vadd.f32 %v89, %v412
  %v414 = vpop.f32.mrb[0].mxu0
  %415 = vmatprep.mubr.bf16.mxu0 0
  %416 = vmatmul.mubr.bf16.gmra.mrb[0].mxu0 %v274
  %v417 = vpop.f32.mrb[0].mxu0
  %v418 = vadd.f32 %v89, %v417
  %v419 = vpop.f32.mrb[0].mxu0
  %v420 = vpop.f32.mrb[0].mxu0
  %v421 = vadd.f32 %v89, %v420
  %v422 = vpop.f32.mrb[0].mxu0
  %423 = vmatprep.mubr.bf16.mxu0 0
  %424 = vmatmul.mubr.bf16.gmra.mrb[0].mxu0 %v277
  %v425 = vpop.f32.mrb[0].mxu0
  %v426 = vadd.f32 %v89, %v425
  %v427 = vpop.f32.mrb[0].mxu0
  %v428 = vpop.f32.mrb[0].mxu0
  %v429 = vadd.f32 %v89, %v428
  %v430 = vpop.f32.mrb[0].mxu0
  %431 = vmatprep.mubr.bf16.mxu0 0
  %432 = vmatmul.mubr.bf16.gmra.mrb[0].mxu0 %v280
  %v433 = vpop.f32.mrb[0].mxu0
  %v434 = vadd.f32 %v89, %v433
  %v435 = vpop.f32.mrb[0].mxu0
  %v436 = vpop.f32.mrb[0].mxu0
  %v437 = vadd.f32 %v89, %v436
  %v438 = vpop.f32.mrb[0].mxu0
  %439 = vmatprep.mubr.bf16.mxu0 0
  %440 = vmatmul.mubr.bf16.gmra.mrb[0].mxu0 %v283
  %v441 = vpop.f32.mrb[0].mxu0
  %v442 = vadd.f32 %v89, %v441
  %v443 = vpop.f32.mrb[0].mxu0
  %v444 = vpop.f32.mrb[0].mxu0
  %v445 = vadd.f32 %v89, %v444
  %v446 = vpop.f32.mrb[0].mxu0
  %447 = vmatprep.mubr.bf16.mxu0 0
  %448 = vmatmul.mubr.bf16.gmra.mrb[0].mxu0 %v286
  %v449 = vpop.f32.mrb[0].mxu0
  %v450 = vadd.f32 %v89, %v449
  %v451 = vpop.f32.mrb[0].mxu0
  %v452 = vpop.f32.mrb[0].mxu0
  %v453 = vadd.f32 %v89, %v452
  %v454 = vpop.f32.mrb[0].mxu0
  %455 = vmatprep.mubr.bf16.mxu0 0
  %456 = vmatmul.mubr.bf16.gmra.mrb[0].mxu0 %v289
  %v457 = vpop.f32.mrb[0].mxu0
  %v458 = vadd.f32 %v89, %v457
  %v459 = vpop.f32.mrb[0].mxu0
  %v460 = vpop.f32.mrb[0].mxu0
  %v461 = vadd.f32 %v89, %v460
  %v462 = vpop.f32.mrb[0].mxu0
  %463 = vmatprep.mubr.bf16.mxu0 0
  %464 = vmatmul.mubr.bf16.gmra.mrb[0].mxu0 %v292
  %v465 = vpop.f32.mrb[0].mxu0
  %v466 = vadd.f32 %v89, %v465
  %v467 = vpop.f32.mrb[0].mxu0
  %v468 = vpop.f32.mrb[0].mxu0
  %v469 = vadd.f32 %v89, %v468
  %v470 = vpop.f32.mrb[0].mxu0
  %471 = vmatprep.mubr.bf16.mxu0 0
  %472 = vmatmul.mubr.bf16.gmra.mrb[0].mxu0 %v295
  %v473 = vpop.f32.mrb[0].mxu0
  %v474 = vadd.f32 %v89, %v473
  %v475 = vpop.f32.mrb[0].mxu0
  %v476 = vpop.f32.mrb[0].mxu0
  %v477 = vadd.f32 %v89, %v476
  %v478 = vpop.f32.mrb[0].mxu0
  %479 = vmatprep.mubr.bf16.mxu0 0
  %480 = vmatmul.mubr.bf16.gmra.mrb[0].mxu0 %v298
  %v481 = vpop.f32.mrb[0].mxu0
  %v482 = vadd.f32 %v89, %v481
  %v483 = vpop.f32.mrb[0].mxu0
  %v484 = vpop.f32.mrb[0].mxu0
  %v485 = vadd.f32 %v89, %v484
  %v486 = vpop.f32.mrb[0].mxu0
  %487 = vmatprep.mubr.bf16.mxu0 0
  %488 = vmatmul.mubr.bf16.gmra.mrb[0].mxu0 %v301
  %v489 = vpop.f32.mrb[0].mxu0
  %v490 = vadd.f32 %v89, %v489
  %v491 = vpop.f32.mrb[0].mxu0
  %v492 = vpop.f32.mrb[0].mxu0
  %v493 = vadd.f32 %v89, %v492
  %v494 = vpop.f32.mrb[0].mxu0
  %495 = vmatprep.mubr.bf16.mxu0 0
  %496 = vmatmul.mubr.bf16.gmra.mrb[0].mxu0 %v304
  %v497 = vpop.f32.mrb[0].mxu0
  %v498 = vadd.f32 %v89, %v497
  %v499 = vpop.f32.mrb[0].mxu0
  %v500 = vpop.f32.mrb[0].mxu0
  %v501 = vadd.f32 %v89, %v500
  %v502 = vpop.f32.mrb[0].mxu0
  %503 = vmatprep.mubr.bf16.mxu0 0
  %504 = vmatmul.mubr.bf16.gmra.mrb[0].mxu0 %v307
  %v505 = vpop.f32.mrb[0].mxu0
  %v506 = vadd.f32 %v89, %v505
  %v507 = vpop.f32.mrb[0].mxu0
  %v508 = vpop.f32.mrb[0].mxu0
  %v509 = vadd.f32 %v89, %v508
  %v510 = vpop.f32.mrb[0].mxu0
  %511 = vmatprep.mubr.bf16.mxu0 0
  %512 = vmatmul.mubr.bf16.gmra.mrb[0].mxu0 %v310
  %v513 = vpop.f32.mrb[0].mxu0
  %v514 = vadd.f32 %v89, %v513
  %v515 = vpop.f32.mrb[0].mxu0
  %v516 = vpop.f32.mrb[0].mxu0
  %v517 = vadd.f32 %v89, %v516
  %v518 = vpop.f32.mrb[0].mxu0
  %519 = vmatprep.mubr.bf16.mxu0 0
  %520 = vmatmul.mubr.bf16.gmra.mrb[0].mxu0 %v313
  %v521 = vpop.f32.mrb[0].mxu0
  %v522 = vadd.f32 %v89, %v521
  %v523 = vpop.f32.mrb[0].mxu0
  %v524 = vpop.f32.mrb[0].mxu0
  %v525 = vadd.f32 %v89, %v524
  %v526 = vpop.f32.mrb[0].mxu0
  %527 = vmatprep.mubr.bf16.mxu0 0
  %528 = vmatmul.mubr.bf16.gmra.mrb[0].mxu0 %v316
  %v529 = vpop.f32.mrb[0].mxu0
  %v530 = vadd.f32 %v89, %v529
  %v531 = vpop.f32.mrb[0].mxu0
  %v532 = vpop.f32.mrb[0].mxu0
  %v533 = vadd.f32 %v89, %v532
  %v534 = vpop.f32.mrb[0].mxu0
  %535 = vmatprep.mubr.bf16.mxu0 0
  %536 = vmatmul.mubr.bf16.gmra.mrb[0].mxu0 %v319
  %v537 = vpop.f32.mrb[0].mxu0
  %v538 = vadd.f32 %v89, %v537
  %v539 = vpop.f32.mrb[0].mxu0
  %v540 = vpop.f32.mrb[0].mxu0
  %v541 = vadd.f32 %v89, %v540
  %v542 = vpop.f32.mrb[0].mxu0
  %543 = vmatprep.mubr.bf16.mxu0 0
  %544 = vmatmul.mubr.bf16.gmra.mrb[0].mxu0 %v322
  %v545 = vpop.f32.mrb[0].mxu0
  %v546 = vadd.f32 %v89, %v545
  %v547 = vpop.f32.mrb[0].mxu0
  %v548 = vpop.f32.mrb[0].mxu0
  %v549 = vadd.f32 %v89, %v548
  %v550 = vpop.f32.mrb[0].mxu0
  %551 = vmatprep.mubr.bf16.mxu0 0
  %552 = vmatmul.mubr.bf16.gmra.mrb[0].mxu0 %v325
  %v553 = vpop.f32.mrb[0].mxu0
  %v554 = vadd.f32 %v89, %v553
  %v555 = vpop.f32.mrb[0].mxu0
  %v556 = vpop.f32.mrb[0].mxu0
  %v557 = vadd.f32 %v89, %v556
  %v558 = vpop.f32.mrb[0].mxu0
  %559 = vmatprep.mubr.bf16.mxu0 0
  %560 = vmatmul.mubr.bf16.gmra.mrb[0].mxu0 %v328
  %v561 = vpop.f32.mrb[0].mxu0
  %v562 = vadd.f32 %v89, %v561
  %v563 = vpop.f32.mrb[0].mxu0
  %v564 = vpop.f32.mrb[0].mxu0
  %v565 = vadd.f32 %v89, %v564
  %v566 = vpop.f32.mrb[0].mxu0
  %567 = vmatprep.mubr.bf16.mxu0 0
  %568 = vmatmul.mubr.bf16.gmra.mrb[0].mxu0 %v331
  %v569 = vpop.f32.mrb[0].mxu0
  %v570 = vadd.f32 %v89, %v569
  %v571 = vpop.f32.mrb[0].mxu0
  %v572 = vpop.f32.mrb[0].mxu0
  %v573 = vadd.f32 %v89, %v572
  %v574 = vpop.f32.mrb[0].mxu0
  %575 = vmatprep.mubr.bf16.mxu0 0
  %576 = vmatmul.mubr.bf16.gmra.mrb[0].mxu0 %v334
  %v577 = vpop.f32.mrb[0].mxu0
  %v578 = vadd.f32 %v89, %v577
  %v579 = vpop.f32.mrb[0].mxu0
  %v580 = vpop.f32.mrb[0].mxu0
  %v581 = vadd.f32 %v89, %v580
  %v582 = vpop.f32.mrb[0].mxu0
  %583 = vmatprep.mubr.bf16.mxu0 0
  %584 = vmatmul.mubr.bf16.gmra.mrb[0].mxu0 %v337
  %v585 = vpop.f32.mrb[0].mxu0
  %v586 = vadd.f32 %v89, %v585
  %v587 = vpop.f32.mrb[0].mxu0
  %v588 = vpop.f32.mrb[0].mxu0
  %v589 = vadd.f32 %v89, %v588
  %v590 = vpop.f32.mrb[0].mxu0
  %591 = vmatprep.mubr.bf16.mxu0 0
  %592 = vmatmul.mubr.bf16.gmra.mrb[0].mxu0 %v340
  %v593 = vpop.f32.mrb[0].mxu0
  %v594 = vadd.f32 %v89, %v593
  %v595 = vpop.f32.mrb[0].mxu0
  %v596 = vpop.f32.mrb[0].mxu0
  %v597 = vadd.f32 %v89, %v596
  %v598 = vpop.f32.mrb[0].mxu0
  %599 = vmatprep.mubr.bf16.mxu0 0
  %600 = vmatmul.mubr.bf16.gmra.mrb[0].mxu0 %v343
  %v601 = vpop.f32.mrb[0].mxu0
  %v602 = vadd.f32 %v89, %v601
  %v603 = vpop.f32.mrb[0].mxu0
  %v604 = vpop.f32.mrb[0].mxu0
  %v605 = vadd.f32 %v89, %v604
  %v606 = vpop.f32.mrb[0].mxu0
  %607 = vmatprep.mubr.bf16.mxu0 0
  %608 = vmatmul.mubr.bf16.gmra.mrb[0].mxu0 %v346
  %v609 = vpop.f32.mrb[0].mxu0
  %v610 = vadd.f32 %v89, %v609
  %v611 = vpop.f32.mrb[0].mxu0
  %v612 = vpop.f32.mrb[0].mxu0
  %v613 = vadd.f32 %v89, %v612
  %v614 = vpop.f32.mrb[0].mxu0
  %615 = vmatprep.mubr.bf16.mxu0 0
  %616 = vmatmul.mubr.bf16.gmra.mrb[0].mxu0 %v349
  %v617 = vpop.f32.mrb[0].mxu0
  %v618 = vadd.f32 %v89, %v617
  %v619 = vpop.f32.mrb[0].mxu0
  %v620 = vpop.f32.mrb[0].mxu0
  %v621 = vadd.f32 %v89, %v620
  %v622 = vpop.f32.mrb[0].mxu0
  %623 = vmatprep.mubr.bf16.mxu0 0
  %624 = vmatmul.mubr.bf16.gmra.mrb[0].mxu0 %v352
  %v625 = vpop.f32.mrb[0].mxu0
  %v626 = vadd.f32 %v89, %v625
  %v627 = vpop.f32.mrb[0].mxu0
  %v628 = vpop.f32.mrb[0].mxu0
  %v629 = vadd.f32 %v89, %v628
  %v630 = vpop.f32.mrb[0].mxu0
  %631 = vmatprep.mubr.bf16.mxu0 0
  %632 = vmatmul.mubr.bf16.gmra.mrb[0].mxu0 %v355
  %v633 = vpop.f32.mrb[0].mxu0
  %v634 = vadd.f32 %v89, %v633
  %v635 = vpop.f32.mrb[0].mxu0
  %v636 = vpop.f32.mrb[0].mxu0
  %v637 = vadd.f32 %v89, %v636
  %v638 = vpop.f32.mrb[0].mxu0
  %639 = vmatprep.mubr.bf16.mxu0 0
  %640 = vmatmul.mubr.bf16.gmra.mrb[0].mxu0 %v358
  %v641 = vpop.f32.mrb[0].mxu0
  %v642 = vadd.f32 %v89, %v641
  %v643 = vpop.f32.mrb[0].mxu0
  %v644 = vpop.f32.mrb[0].mxu0
  %v645 = vadd.f32 %v89, %v644
  %v646 = vpop.f32.mrb[0].mxu0
  %647 = vmatprep.mubr.bf16.mxu0 0
  %648 = vmatmul.mubr.bf16.gmra.mrb[0].mxu0 %v361
  %v649 = vpop.f32.mrb[0].mxu0
  %v650 = vadd.f32 %v89, %v649
  %v651 = vpop.f32.mrb[0].mxu0
  %v652 = vpop.f32.mrb[0].mxu0
  %v653 = vadd.f32 %v89, %v652
  %v654 = vpop.f32.mrb[0].mxu0
  %655 = vdwg.mxu0
  %v656 = vsub.f32 0.0, %v402
  %v657 = vsub.f32 0.0, %v405
  %v658 = vsub.f32 0.0, %v410
  %v659 = vsub.f32 0.0, %v413
  %v660 = vsub.f32 0.0, %v418
  %v661 = vsub.f32 0.0, %v421
  %v662 = vsub.f32 0.0, %v426
  %v663 = vsub.f32 0.0, %v429
  %v664 = vsub.f32 0.0, %v434
  %v665 = vsub.f32 0.0, %v437
  %v666 = vsub.f32 0.0, %v442
  %v667 = vsub.f32 0.0, %v445
  %v668 = vsub.f32 0.0, %v450
  %v669 = vsub.f32 0.0, %v453
  %v670 = vsub.f32 0.0, %v458
  %v671 = vsub.f32 0.0, %v461
  %v672 = vsub.f32 0.0, %v466
  %v673 = vsub.f32 0.0, %v469
  %v674 = vsub.f32 0.0, %v474
  %v675 = vsub.f32 0.0, %v477
  %v676 = vsub.f32 0.0, %v482
  %v677 = vsub.f32 0.0, %v485
  %v678 = vsub.f32 0.0, %v490
  %v679 = vsub.f32 0.0, %v493
  %v680 = vsub.f32 0.0, %v498
  %v681 = vsub.f32 0.0, %v501
  %v682 = vsub.f32 0.0, %v506
  %v683 = vsub.f32 0.0, %v509
  %v684 = vsub.f32 0.0, %v514
  %v685 = vsub.f32 0.0, %v517
  %v686 = vsub.f32 0.0, %v522
  %v687 = vsub.f32 0.0, %v525
  %v688 = vsub.f32 0.0, %v530
  %v689 = vsub.f32 0.0, %v533
  %v690 = vsub.f32 0.0, %v538
  %v691 = vsub.f32 0.0, %v541
  %v692 = vsub.f32 0.0, %v546
  %v693 = vsub.f32 0.0, %v549
  %v694 = vsub.f32 0.0, %v554
  %v695 = vsub.f32 0.0, %v557
  %v696 = vsub.f32 0.0, %v562
  %v697 = vsub.f32 0.0, %v565
  %v698 = vsub.f32 0.0, %v570
  %v699 = vsub.f32 0.0, %v573
  %v700 = vsub.f32 0.0, %v578
  %v701 = vsub.f32 0.0, %v581
  %v702 = vsub.f32 0.0, %v586
  %v703 = vsub.f32 0.0, %v589
  %v704 = vsub.f32 0.0, %v594
  %v705 = vsub.f32 0.0, %v597
  %v706 = vsub.f32 0.0, %v602
  %v707 = vsub.f32 0.0, %v605
  %v708 = vsub.f32 0.0, %v610
  %v709 = vsub.f32 0.0, %v613
  %v710 = vsub.f32 0.0, %v618
  %v711 = vsub.f32 0.0, %v621
  %v712 = vsub.f32 0.0, %v626
  %v713 = vsub.f32 0.0, %v629
  %v714 = vsub.f32 0.0, %v634
  %v715 = vsub.f32 0.0, %v637
  %v716 = vsub.f32 0.0, %v642
  %v717 = vsub.f32 0.0, %v645
  %v718 = vsub.f32 0.0, %v650
  %v719 = vsub.f32 0.0, %v653
  %v720 = vmul.f32 %v656, 1.442695
  %v721 = vpow.pop %v720
  %v722 = vmul.f32 %v657, 1.442695
  %v723 = vpow.pop %v722
  %v724 = vmul.f32 %v658, 1.442695
  %v725 = vpow.pop %v724
  %v726 = vmul.f32 %v659, 1.442695
  %v727 = vpow.pop %v726
  %v728 = vmul.f32 %v660, 1.442695
  %v729 = vpow.pop %v728
  %v730 = vmul.f32 %v661, 1.442695
  %v731 = vpow.pop %v730
  %v732 = vmul.f32 %v662, 1.442695
  %v733 = vpow.pop %v732
  %v734 = vmul.f32 %v663, 1.442695
  %v735 = vpow.pop %v734
  %v736 = vmul.f32 %v664, 1.442695
  %v737 = vpow.pop %v736
  %v738 = vmul.f32 %v665, 1.442695
  %v739 = vpow.pop %v738
  %v740 = vmul.f32 %v666, 1.442695
  %v741 = vpow.pop %v740
  %v742 = vmul.f32 %v667, 1.442695
  %v743 = vpow.pop %v742
  %v744 = vmul.f32 %v668, 1.442695
  %v745 = vpow.pop %v744
  %v746 = vmul.f32 %v669, 1.442695
  %v747 = vpow.pop %v746
  %v748 = vmul.f32 %v670, 1.442695
  %v749 = vpow.pop %v748
  %v750 = vmul.f32 %v671, 1.442695
  %v751 = vpow.pop %v750
  %v752 = vmul.f32 %v672, 1.442695
  %v753 = vpow.pop %v752
  %v754 = vmul.f32 %v673, 1.442695
  %v755 = vpow.pop %v754
  %v756 = vmul.f32 %v674, 1.442695
  %v757 = vpow.pop %v756
  %v758 = vmul.f32 %v675, 1.442695
  %v759 = vpow.pop %v758
  %v760 = vmul.f32 %v676, 1.442695
  %v761 = vpow.pop %v760
  %v762 = vmul.f32 %v677, 1.442695
  %v763 = vpow.pop %v762
  %v764 = vmul.f32 %v678, 1.442695
  %v765 = vpow.pop %v764
  %v766 = vmul.f32 %v679, 1.442695
  %v767 = vpow.pop %v766
  %v768 = vmul.f32 %v680, 1.442695
  %v769 = vpow.pop %v768
  %v770 = vmul.f32 %v681, 1.442695
  %v771 = vpow.pop %v770
  %v772 = vmul.f32 %v682, 1.442695
  %v773 = vpow.pop %v772
  %v774 = vmul.f32 %v683, 1.442695
  %v775 = vpow.pop %v774
  %v776 = vmul.f32 %v684, 1.442695
  %v777 = vpow.pop %v776
  %v778 = vmul.f32 %v685, 1.442695
  %v779 = vpow.pop %v778
  %v780 = vmul.f32 %v686, 1.442695
  %v781 = vpow.pop %v780
  %v782 = vmul.f32 %v687, 1.442695
  %v783 = vpow.pop %v782
  %v784 = vmul.f32 %v688, 1.442695
  %v785 = vpow.pop %v784
  %v786 = vmul.f32 %v689, 1.442695
  %v787 = vpow.pop %v786
  %v788 = vmul.f32 %v690, 1.442695
  %v789 = vpow.pop %v788
  %v790 = vmul.f32 %v691, 1.442695
  %v791 = vpow.pop %v790
  %v792 = vmul.f32 %v692, 1.442695
  %v793 = vpow.pop %v792
  %v794 = vmul.f32 %v693, 1.442695
  %v795 = vpow.pop %v794
  %v796 = vmul.f32 %v694, 1.442695
  %v797 = vpow.pop %v796
  %v798 = vmul.f32 %v695, 1.442695
  %v799 = vpow.pop %v798
  %v800 = vmul.f32 %v696, 1.442695
  %v801 = vpow.pop %v800
  %v802 = vmul.f32 %v697, 1.442695
  %v803 = vpow.pop %v802
  %v804 = vmul.f32 %v698, 1.442695
  %v805 = vpow.pop %v804
  %v806 = vmul.f32 %v699, 1.442695
  %v807 = vpow.pop %v806
  %v808 = vmul.f32 %v700, 1.442695
  %v809 = vpow.pop %v808
  %v810 = vmul.f32 %v701, 1.442695
  %v811 = vpow.pop %v810
  %v812 = vmul.f32 %v702, 1.442695
  %v813 = vpow.pop %v812
  %v814 = vmul.f32 %v703, 1.442695
  %v815 = vpow.pop %v814
  %v816 = vmul.f32 %v704, 1.442695
  %v817 = vpow.pop %v816
  %v818 = vmul.f32 %v705, 1.442695
  %v819 = vpow.pop %v818
  %v820 = vmul.f32 %v706, 1.442695
  %v821 = vpow.pop %v820
  %v822 = vmul.f32 %v707, 1.442695
  %v823 = vpow.pop %v822
  %v824 = vmul.f32 %v708, 1.442695
  %v825 = vpow.pop %v824
  %v826 = vmul.f32 %v709, 1.442695
  %v827 = vpow.pop %v826
  %v828 = vmul.f32 %v710, 1.442695
  %v829 = vpow.pop %v828
  %v830 = vmul.f32 %v711, 1.442695
  %v831 = vpow.pop %v830
  %v832 = vmul.f32 %v712, 1.442695
  %v833 = vpow.pop %v832
  %v834 = vmul.f32 %v713, 1.442695
  %v835 = vpow.pop %v834
  %v836 = vmul.f32 %v714, 1.442695
  %v837 = vpow.pop %v836
  %v838 = vmul.f32 %v715, 1.442695
  %v839 = vpow.pop %v838
  %v840 = vmul.f32 %v716, 1.442695
  %v841 = vpow.pop %v840
  %v842 = vmul.f32 %v717, 1.442695
  %v843 = vpow.pop %v842
  %v844 = vmul.f32 %v718, 1.442695
  %v845 = vpow.pop %v844
  %v846 = vmul.f32 %v719, 1.442695
  %v847 = vpow.pop %v846
  %v848 = vadd.f32 %v721, 1.0
  %v849 = vadd.f32 %v723, 1.0
  %v850 = vadd.f32 %v725, 1.0
  %v851 = vadd.f32 %v727, 1.0
  %v852 = vadd.f32 %v729, 1.0
  %v853 = vadd.f32 %v731, 1.0
  %v854 = vadd.f32 %v733, 1.0
  %v855 = vadd.f32 %v735, 1.0
  %v856 = vadd.f32 %v737, 1.0
  %v857 = vadd.f32 %v739, 1.0
  %v858 = vadd.f32 %v741, 1.0
  %v859 = vadd.f32 %v743, 1.0
  %v860 = vadd.f32 %v745, 1.0
  %v861 = vadd.f32 %v747, 1.0
  %v862 = vadd.f32 %v749, 1.0
  %v863 = vadd.f32 %v751, 1.0
  %v864 = vadd.f32 %v753, 1.0
  %v865 = vadd.f32 %v755, 1.0
  %v866 = vadd.f32 %v757, 1.0
  %v867 = vadd.f32 %v759, 1.0
  %v868 = vadd.f32 %v761, 1.0
  %v869 = vadd.f32 %v763, 1.0
  %v870 = vadd.f32 %v765, 1.0
  %v871 = vadd.f32 %v767, 1.0
  %v872 = vadd.f32 %v769, 1.0
  %v873 = vadd.f32 %v771, 1.0
  %v874 = vadd.f32 %v773, 1.0
  %v875 = vadd.f32 %v775, 1.0
  %v876 = vadd.f32 %v777, 1.0
  %v877 = vadd.f32 %v779, 1.0
  %v878 = vadd.f32 %v781, 1.0
  %v879 = vadd.f32 %v783, 1.0
  %v880 = vadd.f32 %v785, 1.0
  %v881 = vadd.f32 %v787, 1.0
  %v882 = vadd.f32 %v789, 1.0
  %v883 = vadd.f32 %v791, 1.0
  %v884 = vadd.f32 %v793, 1.0
  %v885 = vadd.f32 %v795, 1.0
  %v886 = vadd.f32 %v797, 1.0
  %v887 = vadd.f32 %v799, 1.0
  %v888 = vadd.f32 %v801, 1.0
  %v889 = vadd.f32 %v803, 1.0
  %v890 = vadd.f32 %v805, 1.0
  %v891 = vadd.f32 %v807, 1.0
  %v892 = vadd.f32 %v809, 1.0
  %v893 = vadd.f32 %v811, 1.0
  %v894 = vadd.f32 %v813, 1.0
  %v895 = vadd.f32 %v815, 1.0
  %v896 = vadd.f32 %v817, 1.0
  %v897 = vadd.f32 %v819, 1.0
  %v898 = vadd.f32 %v821, 1.0
  %v899 = vadd.f32 %v823, 1.0
  %v900 = vadd.f32 %v825, 1.0
  %v901 = vadd.f32 %v827, 1.0
  %v902 = vadd.f32 %v829, 1.0
  %v903 = vadd.f32 %v831, 1.0
  %v904 = vadd.f32 %v833, 1.0
  %v905 = vadd.f32 %v835, 1.0
  %v906 = vadd.f32 %v837, 1.0
  %v907 = vadd.f32 %v839, 1.0
  %v908 = vadd.f32 %v841, 1.0
  %v909 = vadd.f32 %v843, 1.0
  %v910 = vadd.f32 %v845, 1.0
  %v911 = vadd.f32 %v847, 1.0
  %v912 = vrcp.pop %v848
  %v913 = vmul.f32 1.0, %v912
  %v914 = vrcp.pop %v849
  %v915 = vmul.f32 1.0, %v914
  %v916 = vrcp.pop %v850
  %v917 = vmul.f32 1.0, %v916
  %v918 = vrcp.pop %v851
  %v919 = vmul.f32 1.0, %v918
  %v920 = vrcp.pop %v852
  %v921 = vmul.f32 1.0, %v920
  %v922 = vrcp.pop %v853
  %v923 = vmul.f32 1.0, %v922
  %v924 = vrcp.pop %v854
  %v925 = vmul.f32 1.0, %v924
  %v926 = vrcp.pop %v855
  %v927 = vmul.f32 1.0, %v926
  %v928 = vrcp.pop %v856
  %v929 = vmul.f32 1.0, %v928
  %v930 = vrcp.pop %v857
  %v931 = vmul.f32 1.0, %v930
  %v932 = vrcp.pop %v858
  %v933 = vmul.f32 1.0, %v932
  %v934 = vrcp.pop %v859
  %v935 = vmul.f32 1.0, %v934
  %v936 = vrcp.pop %v860
  %v937 = vmul.f32 1.0, %v936
  %v938 = vrcp.pop %v861
  %v939 = vmul.f32 1.0, %v938
  %v940 = vrcp.pop %v862
  %v941 = vmul.f32 1.0, %v940
  %v942 = vrcp.pop %v863
  %v943 = vmul.f32 1.0, %v942
  %v944 = vrcp.pop %v864
  %v945 = vmul.f32 1.0, %v944
  %v946 = vrcp.pop %v865
  %v947 = vmul.f32 1.0, %v946
  %v948 = vrcp.pop %v866
  %v949 = vmul.f32 1.0, %v948
  %v950 = vrcp.pop %v867
  %v951 = vmul.f32 1.0, %v950
  %v952 = vrcp.pop %v868
  %v953 = vmul.f32 1.0, %v952
  %v954 = vrcp.pop %v869
  %v955 = vmul.f32 1.0, %v954
  %v956 = vrcp.pop %v870
  %v957 = vmul.f32 1.0, %v956
  %v958 = vrcp.pop %v871
  %v959 = vmul.f32 1.0, %v958
  %v960 = vrcp.pop %v872
  %v961 = vmul.f32 1.0, %v960
  %v962 = vrcp.pop %v873
  %v963 = vmul.f32 1.0, %v962
  %v964 = vrcp.pop %v874
  %v965 = vmul.f32 1.0, %v964
  %v966 = vrcp.pop %v875
  %v967 = vmul.f32 1.0, %v966
  %v968 = vrcp.pop %v876
  %v969 = vmul.f32 1.0, %v968
  %v970 = vrcp.pop %v877
  %v971 = vmul.f32 1.0, %v970
  %v972 = vrcp.pop %v878
  %v973 = vmul.f32 1.0, %v972
  %v974 = vrcp.pop %v879
  %v975 = vmul.f32 1.0, %v974
  %v976 = vrcp.pop %v880
  %v977 = vmul.f32 1.0, %v976
  %v978 = vrcp.pop %v881
  %v979 = vmul.f32 1.0, %v978
  %v980 = vrcp.pop %v882
  %v981 = vmul.f32 1.0, %v980
  %v982 = vrcp.pop %v883
  %v983 = vmul.f32 1.0, %v982
  %v984 = vrcp.pop %v884
  %v985 = vmul.f32 1.0, %v984
  %v986 = vrcp.pop %v885
  %v987 = vmul.f32 1.0, %v986
  %v988 = vrcp.pop %v886
  %v989 = vmul.f32 1.0, %v988
  %v990 = vrcp.pop %v887
  %v991 = vmul.f32 1.0, %v990
  %v992 = vrcp.pop %v888
  %v993 = vmul.f32 1.0, %v992
  %v994 = vrcp.pop %v889
  %v995 = vmul.f32 1.0, %v994
  %v996 = vrcp.pop %v890
  %v997 = vmul.f32 1.0, %v996
  %v998 = vrcp.pop %v891
  %v999 = vmul.f32 1.0, %v998
  %v1000 = vrcp.pop %v892
  %v1001 = vmul.f32 1.0, %v1000
  %v1002 = vrcp.pop %v893
  %v1003 = vmul.f32 1.0, %v1002
  %v1004 = vrcp.pop %v894
  %v1005 = vmul.f32 1.0, %v1004
  %v1006 = vrcp.pop %v895
  %v1007 = vmul.f32 1.0, %v1006
  %v1008 = vrcp.pop %v896
  %v1009 = vmul.f32 1.0, %v1008
  %v1010 = vrcp.pop %v897
  %v1011 = vmul.f32 1.0, %v1010
  %v1012 = vrcp.pop %v898
  %v1013 = vmul.f32 1.0, %v1012
  %v1014 = vrcp.pop %v899
  %v1015 = vmul.f32 1.0, %v1014
  %v1016 = vrcp.pop %v900
  %v1017 = vmul.f32 1.0, %v1016
  %v1018 = vrcp.pop %v901
  %v1019 = vmul.f32 1.0, %v1018
  %v1020 = vrcp.pop %v902
  %v1021 = vmul.f32 1.0, %v1020
  %v1022 = vrcp.pop %v903
  %v1023 = vmul.f32 1.0, %v1022
  %v1024 = vrcp.pop %v904
  %v1025 = vmul.f32 1.0, %v1024
  %v1026 = vrcp.pop %v905
  %v1027 = vmul.f32 1.0, %v1026
  %v1028 = vrcp.pop %v906
  %v1029 = vmul.f32 1.0, %v1028
  %v1030 = vrcp.pop %v907
  %v1031 = vmul.f32 1.0, %v1030
  %v1032 = vrcp.pop %v908
  %v1033 = vmul.f32 1.0, %v1032
  %v1034 = vrcp.pop %v909
  %v1035 = vmul.f32 1.0, %v1034
  %v1036 = vrcp.pop %v910
  %v1037 = vmul.f32 1.0, %v1036
  %v1038 = vrcp.pop %v911
  %v1039 = vmul.f32 1.0, %v1038
  %vm1040 = vcmask 31744
  %1041 = vst.msk [vmem:[%s3] sm:$0xff] %vm1040, %v913
  %1042 = vst.msk [vmem:[%s3 + $0x8] sm:$0xff] %vm1040, %v915
  %1043 = vst.msk [vmem:[%s3 + $0x10] sm:$0xff] %vm1040, %v917
  %1044 = vst.msk [vmem:[%s3 + $0x18] sm:$0xff] %vm1040, %v919
  %1045 = vst.msk [vmem:[%s3 + $0x20] sm:$0xff] %vm1040, %v921
  %1046 = vst.msk [vmem:[%s3 + $0x28] sm:$0xff] %vm1040, %v923
  %1047 = vst.msk [vmem:[%s3 + $0x30] sm:$0xff] %vm1040, %v925
  %1048 = vst.msk [vmem:[%s3 + $0x38] sm:$0xff] %vm1040, %v927
  %1049 = vst.msk [vmem:[%s3 + $0x40] sm:$0xff] %vm1040, %v929
  %1050 = vst.msk [vmem:[%s3 + $0x48] sm:$0xff] %vm1040, %v931
  %1051 = vst.msk [vmem:[%s3 + $0x50] sm:$0xff] %vm1040, %v933
  %1052 = vst.msk [vmem:[%s3 + $0x58] sm:$0xff] %vm1040, %v935
  %1053 = vst.msk [vmem:[%s3 + $0x60] sm:$0xff] %vm1040, %v937
  %1054 = vst.msk [vmem:[%s3 + $0x68] sm:$0xff] %vm1040, %v939
  %1055 = vst.msk [vmem:[%s3 + $0x70] sm:$0xff] %vm1040, %v941
  %1056 = vst.msk [vmem:[%s3 + $0x78] sm:$0xff] %vm1040, %v943
  %1057 = vst.msk [vmem:[%s3 + $0x80] sm:$0xff] %vm1040, %v945
  %1058 = vst.msk [vmem:[%s3 + $0x88] sm:$0xff] %vm1040, %v947
  %1059 = vst.msk [vmem:[%s3 + $0x90] sm:$0xff] %vm1040, %v949
  %1060 = vst.msk [vmem:[%s3 + $0x98] sm:$0xff] %vm1040, %v951
  %1061 = vst.msk [vmem:[%s3 + $0xa0] sm:$0xff] %vm1040, %v953
  %1062 = vst.msk [vmem:[%s3 + $0xa8] sm:$0xff] %vm1040, %v955
  %1063 = vst.msk [vmem:[%s3 + $0xb0] sm:$0xff] %vm1040, %v957
  %1064 = vst.msk [vmem:[%s3 + $0xb8] sm:$0xff] %vm1040, %v959
  %1065 = vst.msk [vmem:[%s3 + $0xc0] sm:$0xff] %vm1040, %v961
  %1066 = vst.msk [vmem:[%s3 + $0xc8] sm:$0xff] %vm1040, %v963
  %1067 = vst.msk [vmem:[%s3 + $0xd0] sm:$0xff] %vm1040, %v965
  %1068 = vst.msk [vmem:[%s3 + $0xd8] sm:$0xff] %vm1040, %v967
  %1069 = vst.msk [vmem:[%s3 + $0xe0] sm:$0xff] %vm1040, %v969
  %1070 = vst.msk [vmem:[%s3 + $0xe8] sm:$0xff] %vm1040, %v971
  %1071 = vst.msk [vmem:[%s3 + $0xf0] sm:$0xff] %vm1040, %v973
  %1072 = vst.msk [vmem:[%s3 + $0xf8] sm:$0xff] %vm1040, %v975
  %1073 = vst.msk [vmem:[%s3 + $0x100] sm:$0xff] %vm1040, %v977
  %1074 = vst.msk [vmem:[%s3 + $0x108] sm:$0xff] %vm1040, %v979
  %1075 = vst.msk [vmem:[%s3 + $0x110] sm:$0xff] %vm1040, %v981
  %1076 = vst.msk [vmem:[%s3 + $0x118] sm:$0xff] %vm1040, %v983
  %1077 = vst.msk [vmem:[%s3 + $0x120] sm:$0xff] %vm1040, %v985
  %1078 = vst.msk [vmem:[%s3 + $0x128] sm:$0xff] %vm1040, %v987
  %1079 = vst.msk [vmem:[%s3 + $0x130] sm:$0xff] %vm1040, %v989
  %1080 = vst.msk [vmem:[%s3 + $0x138] sm:$0xff] %vm1040, %v991
  %1081 = vst.msk [vmem:[%s3 + $0x140] sm:$0xff] %vm1040, %v993
  %1082 = vst.msk [vmem:[%s3 + $0x148] sm:$0xff] %vm1040, %v995
  %1083 = vst.msk [vmem:[%s3 + $0x150] sm:$0xff] %vm1040, %v997
  %1084 = vst.msk [vmem:[%s3 + $0x158] sm:$0xff] %vm1040, %v999
  %1085 = vst.msk [vmem:[%s3 + $0x160] sm:$0xff] %vm1040, %v1001
  %1086 = vst.msk [vmem:[%s3 + $0x168] sm:$0xff] %vm1040, %v1003
  %1087 = vst.msk [vmem:[%s3 + $0x170] sm:$0xff] %vm1040, %v1005
  %1088 = vst.msk [vmem:[%s3 + $0x178] sm:$0xff] %vm1040, %v1007
  %1089 = vst.msk [vmem:[%s3 + $0x180] sm:$0xff] %vm1040, %v1009
  %1090 = vst.msk [vmem:[%s3 + $0x188] sm:$0xff] %vm1040, %v1011
  %1091 = vst.msk [vmem:[%s3 + $0x190] sm:$0xff] %vm1040, %v1013
  %1092 = vst.msk [vmem:[%s3 + $0x198] sm:$0xff] %vm1040, %v1015
  %1093 = vst.msk [vmem:[%s3 + $0x1a0] sm:$0xff] %vm1040, %v1017
  %1094 = vst.msk [vmem:[%s3 + $0x1a8] sm:$0xff] %vm1040, %v1019
  %1095 = vst.msk [vmem:[%s3 + $0x1b0] sm:$0xff] %vm1040, %v1021
  %1096 = vst.msk [vmem:[%s3 + $0x1b8] sm:$0xff] %vm1040, %v1023
  %1097 = vst.msk [vmem:[%s3 + $0x1c0] sm:$0xff] %vm1040, %v1025
  %1098 = vst.msk [vmem:[%s3 + $0x1c8] sm:$0xff] %vm1040, %v1027
  %1099 = vst.msk [vmem:[%s3 + $0x1d0] sm:$0xff] %vm1040, %v1029
  %1100 = vst.msk [vmem:[%s3 + $0x1d8] sm:$0xff] %vm1040, %v1031
  %1101 = vst.msk [vmem:[%s3 + $0x1e0] sm:$0xff] %vm1040, %v1033
  %1102 = vst.msk [vmem:[%s3 + $0x1e8] sm:$0xff] %vm1040, %v1035
  %1103 = vst.msk [vmem:[%s3 + $0x1f0] sm:$0xff] %vm1040, %v1037
  %1104 = vst.msk [vmem:[%s3 + $0x1f8] sm:$0xff] %vm1040, %v1039
  // Predicated region
  $region14: #{spatial_transformer_forward.17} parent=0 // pred_check
    _
  $region15: #{spatial_transformer_forward.17} parent=0 // pred_check_branch
    %1106 = sbr.rel (0) target = $region17
  $region16: #{spatial_transformer_forward.17} parent=0 // pred_region
    _
  $region17: #{spatial_transformer_forward.17} parent=0 // pred_fallthru
    _
  // Predicated region
  $region18: #{spatial_transformer_forward.17} parent=0 // pred_check
    _
  $region19: #{spatial_transformer_forward.17} parent=0 // pred_check_branch
    %1108 = sbr.rel (0) target = $region21
  $region20: #{spatial_transformer_forward.17} parent=0 // pred_region
    _
  $region21: #{spatial_transformer_forward.17} parent=0 // pred_fallthru
    _

</llo_original>
